<compile_context>
chip_gen: v7x
topology: tpu7x:2x2x1
jax: 0.10.0
libtpu: 0.0.40
codegen_flags: <defaults>
</compile_context>

<pallas_src>
import math
import functools

import jax
import jax.numpy as jnp
from jax.experimental import pallas as pl
from jax.experimental.pallas import tpu as pltpu


# Pad node/edge counts to multiples of 256: lane-dense layout, full 256-wide MXU
# contraction on v6e/v7x, multiple of the 128 minimum on v5e and of the 16-row
# bf16 sublane packing.
_LANE_PAD = 256


def _round_up(x, m):
    return ((x + m - 1) // m) * m


def _vmem_limit_bytes():
    """Per-generation VMEM limit with headroom (v7x has only 64 MiB physical)."""
    cap = 128 << 20
    try:
        cap = int(getattr(pltpu.get_tpu_info(), "vmem_capacity_bytes", cap))
    except Exception:
        pass
    return max(16 << 20, min((cap * 3) // 4, 100 << 20))


def _vmem_estimate_bytes(Np, Ep, C, H):
    """Rough static VMEM footprint of the fused kernel (resident + double-buffered)."""
    onehot = 2 * Np * Ep * 2                         # bf16 gather + scatter scratch
    resident = Np * C * 4                            # resident h / output carrier
    resident += (Np + 3 * Ep + 2 * C) * 4            # xc, ea, src, tgt, node enc W/b
    per_layer = 2 * C * H * 2 + (H + 4 * C + 1) * 4  # bf16 W1'/W2' + f32 shifts/edge enc/eps
    temps = (2 * Ep * C + Np * H + 3 * Np * C) * 4   # x_j, msg, a, z, h_new + casts
    return onehot + resident + 2 * per_layer + temps


# ----------------------------------------------------------------------------
# Fused kernel body: one grid step == one GIN layer (node encoder at layer 0)
# ----------------------------------------------------------------------------
def _gnn_node_kernel(xc_ref, ea_ref, src_ref, tgt_ref,
                     nw_ref, nb_ref, eps_ref, eew_ref, eeb_ref,
                     w1_ref, s1_ref, w2_ref, s2_ref,
                     o_ref, gth_ref, sct_ref, *, num_layer, residual):
    f32 = jnp.float32
    bf16 = jnp.bfloat16
    layer = pl.program_id(0)
    Ep, Np = gth_ref.shape

    @pl.when(layer == 0)
    def _init():
        # One-hot gather (edge <- src node) / scatter-add (node <- edge tgt) matrices,
        # synthesized on the fly from the int32 edge-index vectors (never materialized
        # in HBM) and kept bf16-resident in VMEM scratch for all layers. Padded edges
        # carry index -1, which matches no node -> all-zero row/column.
        node_iota_g = jax.lax.broadcasted_iota(jnp.int32, (Ep, Np), 1)
        gth_ref[...] = (node_iota_g == src_ref[...]).astype(bf16)
        node_iota_s = jax.lax.broadcasted_iota(jnp.int32, (Np, Ep), 0)
        sct_ref[...] = (node_iota_s == tgt_ref[...]).astype(bf16)
        # node_encoder: Linear(1, C) as broadcast outer product. o_ref doubles as the
        # resident node-embedding carrier across the layer grid axis.
        o_ref[...] = xc_ref[...] * nw_ref[...] + nb_ref[...]

    h = o_ref[...]                                             # (Np, C) f32, resident

    # ---- GINConv ----
    edge_emb = ea_ref[...] * eew_ref[0] + eeb_ref[0]           # edge_encoder   (Ep, C)
    x_j = jnp.dot(gth_ref[...], h.astype(bf16),
                  preferred_element_type=f32)                  # gather x[src]  (Ep, C)
    msg = jnp.maximum(x_j + edge_emb, 0.0)                     # relu(x_j + e)
    aggr = jnp.dot(sct_ref[...], msg.astype(bf16),
                   preferred_element_type=f32)                 # scatter-add    (Np, C)
    z = (1.0 + eps_ref[0, 0, 0]) * h + aggr                    # (1 + eps) * x + aggr

    # GIN MLP + eval-mode BatchNorms; biases and BN scale/shift are pre-folded into
    # W1'/shift1 and W2'/shift2 (wrapper-side) -> one dot + one fused shift each.
    a = jnp.maximum(jnp.dot(z.astype(bf16), w1_ref[0],
                            preferred_element_type=f32) + s1_ref[0], 0.0)
    h_new = jnp.dot(a.astype(bf16), w2_ref[0],
                    preferred_element_type=f32) + s2_ref[0]

    # dropout = identity (eval mode); ReLU on all but the last layer
    h_new = jnp.where(layer == num_layer - 1, h_new, jnp.maximum(h_new, 0.0))
    if residual:
        h_new = h_new + h
    o_ref[...] = h_new                                          # JK == 'last'


# ----------------------------------------------------------------------------
# Parameter preparation (fold biases + eval-mode BN, cast weights to bf16).
# Call once and cache across forward calls.
# ----------------------------------------------------------------------------
def prepare_kernel_params(raw):
    f32 = jnp.float32
    bf16 = jnp.bfloat16
    w1f = (raw["w1"] * raw["bn1_scale"]).astype(bf16)                       # (L, C, H)
    s1 = (raw["b1"] * raw["bn1_scale"] + raw["bn1_shift"]).astype(f32)      # (L, 1, H)
    w2f = (raw["w2"] * raw["bn2_scale"]).astype(bf16)                       # (L, H, C)
    s2 = (raw["b2"] * raw["bn2_scale"] + raw["bn2_shift"]).astype(f32)      # (L, 1, C)
    L = raw["eps"].shape[0]
    return dict(
        node_w=raw["node_w"].astype(f32), node_b=raw["node_b"].astype(f32),
        eps=raw["eps"].reshape(L, 1, 1).astype(f32),
        ee_w=raw["ee_w"].astype(f32), ee_b=raw["ee_b"].astype(f32),
        w1=w1f, s1=s1, w2=w2f, s2=s2)


# ----------------------------------------------------------------------------
# Forward wrapper
# ----------------------------------------------------------------------------
def gnn_node_forward(flat_c, edge_index, edge_attr, delays, kparams, num_layer,
                     residual=False):
    """GNN_node.forward (gin, JK='last', eval mode).

    flat_c:     (N,)   scalar node features (flattened batched_data.c)
    edge_index: (2, E) int32 [src; tgt]
    edge_attr:  (E,)   scalar edge attributes (module views them as (-1, 1))
    delays:     python list per graph (only used for the returned `cut` list)
    kparams:    output of prepare_kernel_params(...)
    """
    if num_layer < 2:
        raise ValueError('Number of GNN layers must be greater than 1.')

    f32 = jnp.float32
    C = kparams["node_w"].shape[1]
    H = kparams["w1"].shape[2]
    N = int(flat_c.shape[0])
    E = int(edge_index.shape[1])
    Np = _round_up(max(N, 1), _LANE_PAD)
    Ep = _round_up(max(E, 1), _LANE_PAD)

    vmem_limit = _vmem_limit_bytes()
    est = _vmem_estimate_bytes(Np, Ep, C, H)
    if est > vmem_limit:
        # TODO(synk): edge-tiled streaming variant (emit_pipeline over edge tiles)
        # for graphs whose one-hot tiles do not fit in VMEM.
        raise ValueError(
            f"fused GNN kernel VMEM estimate {est / 2**20:.1f} MiB exceeds limit "
            f"{vmem_limit / 2**20:.1f} MiB; tile edges or shrink the batch")

    # padded scalar node/edge features; padded edges get index -1 (matches no node)
    xc = jnp.zeros((Np, 1), f32).at[:N, 0].set(flat_c.astype(f32))
    ea = jnp.zeros((Ep, 1), f32).at[:E, 0].set(edge_attr.reshape(-1).astype(f32))
    src = jnp.full((Ep, 1), -1, jnp.int32).at[:E, 0].set(edge_index[0].astype(jnp.int32))
    tgt = jnp.full((1, Ep), -1, jnp.int32).at[0, :E].set(edge_index[1].astype(jnp.int32))

    const2 = lambda l: (0, 0)
    perlayer3 = lambda l: (l, 0, 0)

    kernel = functools.partial(_gnn_node_kernel, num_layer=num_layer,
                               residual=residual)
    out = pl.pallas_call(
        kernel,
        out_shape=jax.ShapeDtypeStruct((Np, C), f32),
        grid_spec=pltpu.PrefetchScalarGridSpec(
            num_scalar_prefetch=0,
            grid=(num_layer,),
            in_specs=[
                pl.BlockSpec((Np, 1), const2),        # xc  (resident)
                pl.BlockSpec((Ep, 1), const2),        # ea  (resident)
                pl.BlockSpec((Ep, 1), const2),        # src (resident)
                pl.BlockSpec((1, Ep), const2),        # tgt (resident)
                pl.BlockSpec((1, C), const2),         # node encoder W
                pl.BlockSpec((1, C), const2),         # node encoder b
                pl.BlockSpec((1, 1, 1), perlayer3),   # GIN eps (per layer)
                pl.BlockSpec((1, 1, C), perlayer3),   # edge encoder W
                pl.BlockSpec((1, 1, C), perlayer3),   # edge encoder b
                pl.BlockSpec((1, C, H), perlayer3),   # W1' (bf16, BN folded)
                pl.BlockSpec((1, 1, H), perlayer3),   # shift1
                pl.BlockSpec((1, H, C), perlayer3),   # W2' (bf16, BN folded)
                pl.BlockSpec((1, 1, C), perlayer3),   # shift2
            ],
            out_specs=pl.BlockSpec((Np, C), const2),  # resident h carrier / output
            scratch_shapes=[pltpu.VMEM((Ep, Np), jnp.bfloat16),   # gather one-hot
                            pltpu.VMEM((Np, Ep), jnp.bfloat16)],  # scatter one-hot
        ),
        # TODO(synk): add a "parallel" grid axis over graphs / node-row tiles to
        # occupy both TensorCores on v7x.
        compiler_params=pltpu.CompilerParams(
            dimension_semantics=("arbitrary",),       # layers carry state
            vmem_limit_bytes=vmem_limit),
    )(xc, ea, src, tgt,
      kparams["node_w"], kparams["node_b"],
      kparams["eps"], kparams["ee_w"], kparams["ee_b"],
      kparams["w1"], kparams["s1"], kparams["w2"], kparams["s2"])

    node_representation = out[:N]              # drop padded node rows
    cut = [len(d) for d in delays]             # host-side, same as the module
    return node_representation, cut


# ----------------------------------------------------------------------------
# Deterministic parameter init (shapes follow the PyTorch module __init__).
# node_encoder / edge_encoder are modeled as Linear(1, emb_dim); fresh BatchNorm
# running stats (mean=0, var=1, affine gamma=1/beta=0) give the folded scale/shift.
# ----------------------------------------------------------------------------
def _init_linear(key, fan_in, fan_out):
    kw, kb = jax.random.split(key)
    bound = 1.0 / math.sqrt(fan_in)
    w = jax.random.uniform(kw, (fan_in, fan_out), jnp.float32, -bound, bound)
    b = jax.random.uniform(kb, (1, fan_out), jnp.float32, -bound, bound)
    return w, b


def init_gnn_params(key, num_layer, emb_dim):
    C, H = emb_dim, 2 * emb_dim
    keys = jax.random.split(key, 1 + 3 * num_layer)
    node_w, node_b = _init_linear(keys[0], 1, C)

    ee_w, ee_b, w1, b1, w2, b2 = [], [], [], [], [], []
    for l in range(num_layer):
        we, be = _init_linear(keys[1 + 3 * l], 1, C); ee_w.append(we); ee_b.append(be)
        wa, ba = _init_linear(keys[2 + 3 * l], C, H); w1.append(wa);  b1.append(ba)
        wb, bb = _init_linear(keys[3 + 3 * l], H, C); w2.append(wb);  b2.append(bb)

    bn_eps = 1e-5
    inv = 1.0 / math.sqrt(1.0 + bn_eps)   # gamma * rsqrt(running_var + eps)
    L = num_layer
    return dict(
        node_w=node_w, node_b=node_b,
        eps=jnp.zeros((L,), jnp.float32),            # GIN eps parameter (init 0)
        ee_w=jnp.stack(ee_w), ee_b=jnp.stack(ee_b),
        w1=jnp.stack(w1), b1=jnp.stack(b1),
        bn1_scale=jnp.full((L, 1, H), inv, jnp.float32),
        bn1_shift=jnp.zeros((L, 1, H), jnp.float32),
        w2=jnp.stack(w2), b2=jnp.stack(b2),
        bn2_scale=jnp.full((L, 1, C), inv, jnp.float32),
        bn2_shift=jnp.zeros((L, 1, C), jnp.float32))


# ----------------------------------------------------------------------------
# Pure-JAX f32 reference (mirrors the torch module, eval mode) for validation
# ----------------------------------------------------------------------------
def gnn_node_reference(flat_c, edge_index, edge_attr, raw, num_layer, residual=False):
    x = flat_c.reshape(-1, 1).astype(jnp.float32)
    h = x @ raw["node_w"] + raw["node_b"]
    src, tgt = edge_index[0], edge_index[1]
    ea = edge_attr.reshape(-1, 1).astype(jnp.float32)
    N = x.shape[0]
    for l in range(num_layer):
        edge_emb = ea @ raw["ee_w"][l] + raw["ee_b"][l]
        msg = jax.nn.relu(h[src] + edge_emb)
        aggr = jax.ops.segment_sum(msg, tgt, num_segments=N)
        z = (1.0 + raw["eps"][l]) * h + aggr
        a = z @ raw["w1"][l] + raw["b1"][l]
        a = jax.nn.relu(a * raw["bn1_scale"][l] + raw["bn1_shift"][l])
        hn = a @ raw["w2"][l] + raw["b2"][l]
        hn = hn * raw["bn2_scale"][l] + raw["bn2_shift"][l]
        if l < num_layer - 1:
            hn = jax.nn.relu(hn)
        if residual:
            hn = hn + h
        h = hn
    return h


# ----------------------------------------------------------------------------
if __name__ == "__main__":
    # GNN_node(num_layer=3, emb_dim=128, gnn_type='gin', JK='last',
    #          residual=False, drop_ratio=0.5) in eval mode; perturb=None.
    num_layer, emb_dim = 3, 128
    nodes_per_graph = [10, 14]                      # batch of 2 graphs
    N = sum(nodes_per_graph)

    key = jax.random.PRNGKey(0)
    k_c, k_e, k_p = jax.random.split(key, 3)

    # batched_data.c flattened into scalar node features x = flat_c.view(-1, 1)
    flat_c = jax.random.normal(k_c, (N,), jnp.float32)

    # bidirectional ring edges inside each graph (block-diagonal batched graph)
    src_list, tgt_list, off = [], [], 0
    for n in nodes_per_graph:
        for i in range(n):
            j = (i + 1) % n
            src_list += [off + i, off + j]
            tgt_list += [off + j, off + i]
        off += n
    edge_index = jnp.array([src_list, tgt_list], dtype=jnp.int32)   # (2, 48)
    E = edge_index.shape[1]
    edge_attr = jax.random.normal(k_e, (E,), jnp.float32)           # viewed (-1, 1)

    # batched_data.delays: only used to produce the returned `cut` list
    delays = [list(range(n)) for n in nodes_per_graph]

    raw_params = init_gnn_params(k_p, num_layer, emb_dim)
    kparams = prepare_kernel_params(raw_params)     # cache across forward calls

    node_repr, cut = gnn_node_forward(flat_c, edge_index, edge_attr, delays,
                                      kparams, num_layer, residual=False)
    node_repr = jax.block_until_ready(node_repr)

    assert node_repr.shape == (N, emb_dim)
    assert cut == [len(d) for d in delays]
    assert bool(jnp.all(jnp.isfinite(node_repr)))

    # Validate against the pure-JAX f32 reference (bf16 matmul operands -> small drift)
    ref = gnn_node_reference(flat_c, edge_index, edge_attr, raw_params, num_layer)
    err = float(jnp.max(jnp.abs(node_repr - ref)) / (jnp.max(jnp.abs(ref)) + 1e-6))
    assert err < 5e-2, f"kernel vs reference normalized max error too large: {err}"

    # TODO(synk): training-mode dropout / batch-statistics BatchNorm, the optional
    # `perturb` adversarial input, JK in {'sum','cat'} and gnn_type='gcn' are not
    # implemented (eval-mode GIN forward only).
    print("KERNEL_OK")
</pallas_src>

<mosaic_0001>
module attributes {stable_mosaic.version = 11 : i64} {
  func.func @_gnn_node_kernel(%arg0: i32, %arg1: memref<256x1xf32, #tpu.memory_space<vmem>>, %arg2: memref<256x1xf32, #tpu.memory_space<vmem>>, %arg3: memref<256x1xi32, #tpu.memory_space<vmem>>, %arg4: memref<1x256xi32, #tpu.memory_space<vmem>>, %arg5: memref<1x128xf32, #tpu.memory_space<vmem>>, %arg6: memref<1x128xf32, #tpu.memory_space<vmem>>, %arg7: memref<1x1x1xf32, #tpu.memory_space<vmem>>, %arg8: memref<1x1x128xf32, #tpu.memory_space<vmem>>, %arg9: memref<1x1x128xf32, #tpu.memory_space<vmem>>, %arg10: memref<1x128x256xbf16, #tpu.memory_space<vmem>>, %arg11: memref<1x1x256xf32, #tpu.memory_space<vmem>>, %arg12: memref<1x256x128xbf16, #tpu.memory_space<vmem>>, %arg13: memref<1x1x128xf32, #tpu.memory_space<vmem>>, %arg14: memref<256x128xf32, #tpu.memory_space<vmem>>, %arg15: memref<256x256xbf16, #tpu.memory_space<vmem>>, %arg16: memref<256x256xbf16, #tpu.memory_space<vmem>>) attributes {dimension_semantics = [#tpu.dimension_semantics<arbitrary>], iteration_bounds = array<i64: 3>, scalar_prefetch = 0 : i64, scratch_operands = 2 : i64, tpu.core_type = #tpu.core_type<tc>, window_params = [{pipeline_mode = #tpu.pipeline_mode<synchronous>, transform_indices = @transform_0, window_bounds = array<i64: 256, 1>}, {pipeline_mode = #tpu.pipeline_mode<synchronous>, transform_indices = @transform_1, window_bounds = array<i64: 256, 1>}, {pipeline_mode = #tpu.pipeline_mode<synchronous>, transform_indices = @transform_2, window_bounds = array<i64: 256, 1>}, {pipeline_mode = #tpu.pipeline_mode<synchronous>, transform_indices = @transform_3, window_bounds = array<i64: 1, 256>}, {pipeline_mode = #tpu.pipeline_mode<synchronous>, transform_indices = @transform_4, window_bounds = array<i64: 1, 128>}, {pipeline_mode = #tpu.pipeline_mode<synchronous>, transform_indices = @transform_5, window_bounds = array<i64: 1, 128>}, {transform_indices = @transform_6, window_bounds = array<i64: 1, 1, 1>}, {transform_indices = @transform_7, window_bounds = array<i64: 1, 1, 128>}, {transform_indices = @transform_8, window_bounds = array<i64: 1, 1, 128>}, {transform_indices = @transform_9, window_bounds = array<i64: 1, 128, 256>}, {transform_indices = @transform_10, window_bounds = array<i64: 1, 1, 256>}, {transform_indices = @transform_11, window_bounds = array<i64: 1, 256, 128>}, {transform_indices = @transform_12, window_bounds = array<i64: 1, 1, 128>}, {pipeline_mode = #tpu.pipeline_mode<synchronous>, transform_indices = @transform_13, window_bounds = array<i64: 256, 128>}]} {
    %c0_i32 = arith.constant 0 : i32
    %0 = arith.cmpi eq, %arg0, %c0_i32 : i32
    %1 = arith.extui %0 : i1 to i32
    %c0_i32_0 = arith.constant 0 : i32
    %2 = arith.cmpi ne, %1, %c0_i32_0 : i32
    scf.if %2 {
      %52 = tpu.iota {dimensions = array<i32: 1>} : vector<256x256xi32>
      %c0_38 = arith.constant 0 : index
      %c0_39 = arith.constant 0 : index
      %53 = vector.load %arg3[%c0_38, %c0_39] : memref<256x1xi32, #tpu.memory_space<vmem>>, vector<256x1xi32>
      %54 = vector.broadcast %53 : vector<256x1xi32> to vector<256x256xi32>
      %55 = arith.cmpi eq, %52, %54 : vector<256x256xi32>
      %56 = arith.extui %55 : vector<256x256xi1> to vector<256x256xi32>
      %57 = arith.sitofp %56 : vector<256x256xi32> to vector<256x256xf32>
      %58 = arith.truncf %57 : vector<256x256xf32> to vector<256x256xbf16>
      %c0_40 = arith.constant 0 : index
      %c0_41 = arith.constant 0 : index
      %59 = vector.load %arg15[%c0_40, %c0_41] : memref<256x256xbf16, #tpu.memory_space<vmem>>, vector<256x256xbf16>
      tpu.vector_store %arg15[%c0_40, %c0_41], %58 {strides = array<i32>} : memref<256x256xbf16, #tpu.memory_space<vmem>>, vector<256x256xbf16>,
      %60 = tpu.iota {dimensions = array<i32: 0>} : vector<256x256xi32>
      %c0_42 = arith.constant 0 : index
      %c0_43 = arith.constant 0 : index
      %61 = vector.load %arg4[%c0_42, %c0_43] : memref<1x256xi32, #tpu.memory_space<vmem>>, vector<1x256xi32>
      %62 = vector.broadcast %61 : vector<1x256xi32> to vector<256x256xi32>
      %63 = arith.cmpi eq, %60, %62 : vector<256x256xi32>
      %64 = arith.extui %63 : vector<256x256xi1> to vector<256x256xi32>
      %65 = arith.sitofp %64 : vector<256x256xi32> to vector<256x256xf32>
      %66 = arith.truncf %65 : vector<256x256xf32> to vector<256x256xbf16>
      %c0_44 = arith.constant 0 : index
      %c0_45 = arith.constant 0 : index
      %67 = vector.load %arg16[%c0_44, %c0_45] : memref<256x256xbf16, #tpu.memory_space<vmem>>, vector<256x256xbf16>
      tpu.vector_store %arg16[%c0_44, %c0_45], %66 {strides = array<i32>} : memref<256x256xbf16, #tpu.memory_space<vmem>>, vector<256x256xbf16>,
      %c0_46 = arith.constant 0 : index
      %c0_47 = arith.constant 0 : index
      %68 = vector.load %arg1[%c0_46, %c0_47] : memref<256x1xf32, #tpu.memory_space<vmem>>, vector<256x1xf32>
      %c0_48 = arith.constant 0 : index
      %c0_49 = arith.constant 0 : index
      %69 = vector.load %arg5[%c0_48, %c0_49] : memref<1x128xf32, #tpu.memory_space<vmem>>, vector<1x128xf32>
      %70 = vector.broadcast %68 : vector<256x1xf32> to vector<256x128xf32>
      %71 = vector.broadcast %69 : vector<1x128xf32> to vector<256x128xf32>
      %72 = arith.mulf %70, %71 : vector<256x128xf32>
      %c0_50 = arith.constant 0 : index
      %c0_51 = arith.constant 0 : index
      %73 = vector.load %arg6[%c0_50, %c0_51] : memref<1x128xf32, #tpu.memory_space<vmem>>, vector<1x128xf32>
      %74 = vector.broadcast %73 : vector<1x128xf32> to vector<256x128xf32>
      %75 = arith.addf %72, %74 : vector<256x128xf32>
      %c0_52 = arith.constant 0 : index
      %c0_53 = arith.constant 0 : index
      %76 = vector.load %arg14[%c0_52, %c0_53] : memref<256x128xf32, #tpu.memory_space<vmem>>, vector<256x128xf32>
      tpu.vector_store %arg14[%c0_52, %c0_53], %75 {strides = array<i32>} : memref<256x128xf32, #tpu.memory_space<vmem>>, vector<256x128xf32>,
    } else {
    }
    %c0 = arith.constant 0 : index
    %c0_1 = arith.constant 0 : index
    %3 = vector.load %arg14[%c0, %c0_1] : memref<256x128xf32, #tpu.memory_space<vmem>>, vector<256x128xf32>
    %c0_2 = arith.constant 0 : index
    %c0_3 = arith.constant 0 : index
    %4 = vector.load %arg2[%c0_2, %c0_3] : memref<256x1xf32, #tpu.memory_space<vmem>>, vector<256x1xf32>
    %c0_4 = arith.constant 0 : index
    %c0_5 = arith.constant 0 : index
    %c0_6 = arith.constant 0 : index
    %5 = vector.load %arg8[%c0_4, %c0_5, %c0_6] : memref<1x1x128xf32, #tpu.memory_space<vmem>>, vector<1x1x128xf32>
    %6 = vector.shape_cast %5 : vector<1x1x128xf32> to vector<1x128xf32>
    %7 = vector.broadcast %4 : vector<256x1xf32> to vector<256x128xf32>
    %8 = vector.broadcast %6 : vector<1x128xf32> to vector<256x128xf32>
    %9 = arith.mulf %7, %8 : vector<256x128xf32>
    %c0_7 = arith.constant 0 : index
    %c0_8 = arith.constant 0 : index
    %c0_9 = arith.constant 0 : index
    %10 = vector.load %arg9[%c0_7, %c0_8, %c0_9] : memref<1x1x128xf32, #tpu.memory_space<vmem>>, vector<1x1x128xf32>
    %11 = vector.shape_cast %10 : vector<1x1x128xf32> to vector<1x128xf32>
    %12 = vector.broadcast %11 : vector<1x128xf32> to vector<256x128xf32>
    %13 = arith.addf %9, %12 : vector<256x128xf32>
    %c0_10 = arith.constant 0 : index
    %c0_11 = arith.constant 0 : index
    %14 = vector.load %arg15[%c0_10, %c0_11] : memref<256x256xbf16, #tpu.memory_space<vmem>>, vector<256x256xbf16>
    %15 = arith.truncf %3 : vector<256x128xf32> to vector<256x128xbf16>
    %cst = arith.constant dense<0.000000e+00> : vector<256x128xf32>
    %16 = tpu.matmul %14, %15, %cst {dimension_numbers = #tpu.dot_dimension_numbers<[1], [0], [0], [1], [0, 0, 1, 1], [], []>} : vector<256x256xbf16>, vector<256x128xbf16>, vector<256x128xf32> -> vector<256x128xf32>
    %17 = arith.addf %16, %13 : vector<256x128xf32>
    %cst_12 = arith.constant 0.000000e+00 : f32
    %18 = vector.broadcast %cst_12 : f32 to vector<256x128xf32>
    %19 = arith.maximumf %17, %18 : vector<256x128xf32>
    %c0_13 = arith.constant 0 : index
    %c0_14 = arith.constant 0 : index
    %20 = vector.load %arg16[%c0_13, %c0_14] : memref<256x256xbf16, #tpu.memory_space<vmem>>, vector<256x256xbf16>
    %21 = arith.truncf %19 : vector<256x128xf32> to vector<256x128xbf16>
    %cst_15 = arith.constant dense<0.000000e+00> : vector<256x128xf32>
    %22 = tpu.matmul %20, %21, %cst_15 {dimension_numbers = #tpu.dot_dimension_numbers<[1], [0], [0], [1], [0, 0, 1, 1], [], []>} : vector<256x256xbf16>, vector<256x128xbf16>, vector<256x128xf32> -> vector<256x128xf32>
    %c0_16 = arith.constant 0 : index
    %c0_17 = arith.constant 0 : index
    %c0_18 = arith.constant 0 : index
    %23 = vector.load %arg7[%c0_16, %c0_17, %c0_18] : memref<1x1x1xf32, #tpu.memory_space<vmem>>, vector<1x1x1xf32>
    %24 = vector.extract %23[0, 0, 0] : f32 from vector<1x1x1xf32>
    %cst_19 = arith.constant 1.000000e+00 : f32
    %25 = arith.addf %cst_19, %24 : f32
    %26 = vector.broadcast %25 : f32 to vector<256x128xf32>
    %27 = arith.mulf %26, %3 : vector<256x128xf32>
    %28 = arith.addf %27, %22 : vector<256x128xf32>
    %29 = arith.truncf %28 : vector<256x128xf32> to vector<256x128xbf16>
    %c0_20 = arith.constant 0 : index
    %c0_21 = arith.constant 0 : index
    %c0_22 = arith.constant 0 : index
    %30 = vector.load %arg10[%c0_20, %c0_21, %c0_22] : memref<1x128x256xbf16, #tpu.memory_space<vmem>>, vector<1x128x256xbf16>
    %31 = vector.shape_cast %30 : vector<1x128x256xbf16> to vector<128x256xbf16>
    %cst_23 = arith.constant dense<0.000000e+00> : vector<256x256xf32>
    %32 = tpu.matmul %29, %31, %cst_23 {dimension_numbers = #tpu.dot_dimension_numbers<[1], [0], [0], [1], [0, 0, 1, 1], [], []>} : vector<256x128xbf16>, vector<128x256xbf16>, vector<256x256xf32> -> vector<256x256xf32>
    %c0_24 = arith.constant 0 : index
    %c0_25 = arith.constant 0 : index
    %c0_26 = arith.constant 0 : index
    %33 = vector.load %arg11[%c0_24, %c0_25, %c0_26] : memref<1x1x256xf32, #tpu.memory_space<vmem>>, vector<1x1x256xf32>
    %34 = vector.shape_cast %33 : vector<1x1x256xf32> to vector<1x256xf32>
    %35 = vector.broadcast %34 : vector<1x256xf32> to vector<256x256xf32>
    %36 = arith.addf %32, %35 : vector<256x256xf32>
    %cst_27 = arith.constant 0.000000e+00 : f32
    %37 = vector.broadcast %cst_27 : f32 to vector<256x256xf32>
    %38 = arith.maximumf %36, %37 : vector<256x256xf32>
    %39 = arith.truncf %38 : vector<256x256xf32> to vector<256x256xbf16>
    %c0_28 = arith.constant 0 : index
    %c0_29 = arith.constant 0 : index
    %c0_30 = arith.constant 0 : index
    %40 = vector.load %arg12[%c0_28, %c0_29, %c0_30] : memref<1x256x128xbf16, #tpu.memory_space<vmem>>, vector<1x256x128xbf16>
    %41 = vector.shape_cast %40 : vector<1x256x128xbf16> to vector<256x128xbf16>
    %cst_31 = arith.constant dense<0.000000e+00> : vector<256x128xf32>
    %42 = tpu.matmul %39, %41, %cst_31 {dimension_numbers = #tpu.dot_dimension_numbers<[1], [0], [0], [1], [0, 0, 1, 1], [], []>} : vector<256x256xbf16>, vector<256x128xbf16>, vector<256x128xf32> -> vector<256x128xf32>
    %c0_32 = arith.constant 0 : index
    %c0_33 = arith.constant 0 : index
    %c0_34 = arith.constant 0 : index
    %43 = vector.load %arg13[%c0_32, %c0_33, %c0_34] : memref<1x1x128xf32, #tpu.memory_space<vmem>>, vector<1x1x128xf32>
    %44 = vector.shape_cast %43 : vector<1x1x128xf32> to vector<1x128xf32>
    %45 = vector.broadcast %44 : vector<1x128xf32> to vector<256x128xf32>
    %46 = arith.addf %42, %45 : vector<256x128xf32>
    %c2_i32 = arith.constant 2 : i32
    %47 = arith.cmpi eq, %arg0, %c2_i32 : i32
    %cst_35 = arith.constant 0.000000e+00 : f32
    %48 = vector.broadcast %cst_35 : f32 to vector<256x128xf32>
    %49 = arith.maximumf %46, %48 : vector<256x128xf32>
    %50 = arith.select %47, %46, %49 : vector<256x128xf32>
    %c0_36 = arith.constant 0 : index
    %c0_37 = arith.constant 0 : index
    %51 = vector.load %arg14[%c0_36, %c0_37] : memref<256x128xf32, #tpu.memory_space<vmem>>, vector<256x128xf32>
    tpu.vector_store %arg14[%c0_36, %c0_37], %50 {strides = array<i32>} : memref<256x128xf32, #tpu.memory_space<vmem>>, vector<256x128xf32>,
    return
  }
  func.func @transform_0(%arg0: i32) -> (i32, i32) {
    %c0_i32 = arith.constant 0 : i32
    %c0_i32_0 = arith.constant 0 : i32
    %c0_i32_1 = arith.constant 0 : i32
    return %c0_i32, %c0_i32_0 : i32, i32
  }
  func.func @transform_1(%arg0: i32) -> (i32, i32) {
    %c0_i32 = arith.constant 0 : i32
    %c0_i32_0 = arith.constant 0 : i32
    %c0_i32_1 = arith.constant 0 : i32
    return %c0_i32, %c0_i32_0 : i32, i32
  }
  func.func @transform_2(%arg0: i32) -> (i32, i32) {
    %c0_i32 = arith.constant 0 : i32
    %c0_i32_0 = arith.constant 0 : i32
    %c0_i32_1 = arith.constant 0 : i32
    return %c0_i32, %c0_i32_0 : i32, i32
  }
  func.func @transform_3(%arg0: i32) -> (i32, i32) {
    %c0_i32 = arith.constant 0 : i32
    %c0_i32_0 = arith.constant 0 : i32
    %c0_i32_1 = arith.constant 0 : i32
    return %c0_i32, %c0_i32_0 : i32, i32
  }
  func.func @transform_4(%arg0: i32) -> (i32, i32) {
    %c0_i32 = arith.constant 0 : i32
    %c0_i32_0 = arith.constant 0 : i32
    %c0_i32_1 = arith.constant 0 : i32
    return %c0_i32, %c0_i32_0 : i32, i32
  }
  func.func @transform_5(%arg0: i32) -> (i32, i32) {
    %c0_i32 = arith.constant 0 : i32
    %c0_i32_0 = arith.constant 0 : i32
    %c0_i32_1 = arith.constant 0 : i32
    return %c0_i32, %c0_i32_0 : i32, i32
  }
  func.func @transform_6(%arg0: i32) -> (i32, i32, i32) {
    %c0_i32 = arith.constant 0 : i32
    %c0_i32_0 = arith.constant 0 : i32
    %c0_i32_1 = arith.constant 0 : i32
    return %arg0, %c0_i32, %c0_i32_0 : i32, i32, i32
  }
  func.func @transform_7(%arg0: i32) -> (i32, i32, i32) {
    %c0_i32 = arith.constant 0 : i32
    %c0_i32_0 = arith.constant 0 : i32
    %c0_i32_1 = arith.constant 0 : i32
    return %arg0, %c0_i32, %c0_i32_0 : i32, i32, i32
  }
  func.func @transform_8(%arg0: i32) -> (i32, i32, i32) {
    %c0_i32 = arith.constant 0 : i32
    %c0_i32_0 = arith.constant 0 : i32
    %c0_i32_1 = arith.constant 0 : i32
    return %arg0, %c0_i32, %c0_i32_0 : i32, i32, i32
  }
  func.func @transform_9(%arg0: i32) -> (i32, i32, i32) {
    %c0_i32 = arith.constant 0 : i32
    %c0_i32_0 = arith.constant 0 : i32
    %c0_i32_1 = arith.constant 0 : i32
    return %arg0, %c0_i32, %c0_i32_0 : i32, i32, i32
  }
  func.func @transform_10(%arg0: i32) -> (i32, i32, i32) {
    %c0_i32 = arith.constant 0 : i32
    %c0_i32_0 = arith.constant 0 : i32
    %c0_i32_1 = arith.constant 0 : i32
    return %arg0, %c0_i32, %c0_i32_0 : i32, i32, i32
  }
  func.func @transform_11(%arg0: i32) -> (i32, i32, i32) {
    %c0_i32 = arith.constant 0 : i32
    %c0_i32_0 = arith.constant 0 : i32
    %c0_i32_1 = arith.constant 0 : i32
    return %arg0, %c0_i32, %c0_i32_0 : i32, i32, i32
  }
  func.func @transform_12(%arg0: i32) -> (i32, i32, i32) {
    %c0_i32 = arith.constant 0 : i32
    %c0_i32_0 = arith.constant 0 : i32
    %c0_i32_1 = arith.constant 0 : i32
    return %arg0, %c0_i32, %c0_i32_0 : i32, i32, i32
  }
  func.func @transform_13(%arg0: i32) -> (i32, i32) {
    %c0_i32 = arith.constant 0 : i32
    %c0_i32_0 = arith.constant 0 : i32
    %c0_i32_1 = arith.constant 0 : i32
    return %c0_i32, %c0_i32_0 : i32, i32
  }
}

</mosaic_0001>

<llo_original>
// kernel: tpu_custom_call.1
$region0: #{tpu_custom_call.1}
  #allocation0 [shape = 'u32[]', space=smem, size = 0x4, offset = 0x4, fixed_abs, tag = 'smem constant byte address 0x4 - core index']
  #allocation1 [shape = 'u32[144,128]{1,0:T(1,128)}', space=vmem, size = 0x12000, scoped, tag = 'internal scratch']
  #allocation2 [shape = 'bf16[256,256]{1,0:T(16,128)(2,1)}', space=vmem, size = 0x20000, scoped, tag = 'scratch operand']
  #allocation3 [shape = 'bf16[256,256]{1,0:T(16,128)(2,1)}', space=vmem, size = 0x20000, scoped, tag = 'scratch operand']
  %s0 = inlined_call_operand.hbm [shape: f32[256,1], index: 0, kind: input, shape index: {}]
  %s1 = inlined_call_operand.hbm [shape: f32[256,1], index: 1, kind: input, shape index: {}]
  %s2 = inlined_call_operand.hbm [shape: s32[256,1], index: 2, kind: input, shape index: {}]
  %s3 = inlined_call_operand.hbm [shape: s32[1,256], index: 3, kind: input, shape index: {}]
  %s4 = inlined_call_operand.hbm [shape: f32[1,128], index: 4, kind: input, shape index: {}]
  %s5 = inlined_call_operand.hbm [shape: f32[1,128], index: 5, kind: input, shape index: {}]
  %s6 = inlined_call_operand.hbm [shape: f32[3,1,1], index: 6, kind: input, shape index: {}]
  %s7 = inlined_call_operand.hbm [shape: f32[3,1,128], index: 7, kind: input, shape index: {}]
  %s8 = inlined_call_operand.hbm [shape: f32[3,1,128], index: 8, kind: input, shape index: {}]
  %s9 = inlined_call_operand.hbm [shape: bf16[3,128,256], index: 9, kind: input, shape index: {}]
  %s10 = inlined_call_operand.hbm [shape: f32[3,1,256], index: 10, kind: input, shape index: {}]
  %s11 = inlined_call_operand.hbm [shape: bf16[3,256,128], index: 11, kind: input, shape index: {}]
  %s12 = inlined_call_operand.hbm [shape: f32[3,1,128], index: 12, kind: input, shape index: {}]
  %s13 = inlined_call_operand.hbm [shape: f32[256,128], index: 13, kind: output, shape index: {}]
  %s14 = sld [smem:[#allocation0]]
  $region141: #{tpu_custom_call.1} parent=0
    _
  %s16 = ssub.s32 1, %s14
  %s17 = scalar_select 0, %s16, %s14
  $region1: #{tpu_custom_call.1} parent=0
    #allocation4 [shape = 'u8[131072]{0}', space=vmem, size = 0x20000, scoped, tag = 'input window, operand 0, single buffered']
    #allocation5 [shape = 's32[2]{0}', space=sflag, size = 0x8, scoped, tag = 'scoped memory for tpu_custom_call.1']
    #allocation6 [shape = 's32[2]{0}', space=sflag, size = 0x8, scoped, tag = 'scoped memory for tpu_custom_call.1']
    #allocation7 [shape = 'u8[131072]{0}', space=vmem, size = 0x20000, scoped, tag = 'input window, operand 1, single buffered']
    #allocation8 [shape = 's32[1]{0}', space=sflag, size = 0x4, scoped, tag = 'scoped memory for tpu_custom_call.1']
    #allocation9 [shape = 'u8[131072]{0}', space=vmem, size = 0x20000, scoped, tag = 'input window, operand 2, single buffered']
    #allocation10 [shape = 'u8[1024]{0}', space=vmem, size = 0x400, scoped, tag = 'input window, operand 3, single buffered']
    #allocation11 [shape = 's32[1]{0}', space=sflag, size = 0x4, scoped, tag = 'scoped memory for tpu_custom_call.1']
    #allocation12 [shape = 'u8[512]{0}', space=vmem, size = 0x400, scoped, tag = 'input window, operand 4, single buffered']
    #allocation13 [shape = 'u8[512]{0}', space=vmem, size = 0x400, scoped, tag = 'input window, operand 5, single buffered']
    #allocation14 [shape = 's32[1]{0}', space=sflag, size = 0x4, scoped, tag = 'scoped memory for tpu_custom_call.1']
    #allocation15 [shape = 'u8[1024]{0}', space=vmem, size = 0x400, scoped, tag = 'input window, operand 6']
    #allocation16 [shape = 'u8[1024]{0}', space=vmem, size = 0x400, scoped, tag = 'input window, operand 7']
    #allocation17 [shape = 'u8[1024]{0}', space=vmem, size = 0x400, scoped, tag = 'input window, operand 8']
    #allocation18 [shape = 'u8[131072]{0}', space=vmem, size = 0x20000, scoped, tag = 'input window, operand 9']
    #allocation19 [shape = 'u8[2048]{0}', space=vmem, size = 0x800, scoped, tag = 'input window, operand 10']
    #allocation20 [shape = 'u8[131072]{0}', space=vmem, size = 0x20000, scoped, tag = 'input window, operand 11']
    #allocation21 [shape = 'u8[1024]{0}', space=vmem, size = 0x400, scoped, tag = 'input window, operand 12']
    #allocation22 [shape = 'u8[131072]{0}', space=vmem, size = 0x20000, scoped, tag = 'output window, operand 0, single buffered']
    %18 = vsyncpa [#allocation5], 0
    %19 = vsyncpa [#allocation8], 0
    %20 = vsyncpa [#allocation11], 0
    %21 = vsyncpa [#allocation14], 0
    %22 = vsyncpa [#allocation6], 0
    loop: start=0, step=1, limit=5
    $region2: #{tpu_custom_call.1} parent=1 // loop_pre_header
      _
    $region3: #{tpu_custom_call.1} parent=1 // loop_header
      %s24 = sphi 0, %s28
      %p25 = scmp.ge.s32.totalorder %s24, 5
      %s32 = sphi 0, %s32
      %s34 = sphi 0, %s32
      %s35 = sphi 0, %s34
      %s49 = sphi 0, %s35
      %s53 = sphi 0, %s53
      %s55 = sphi 0, %s53
      %s56 = sphi 0, %s55
      %s70 = sphi 0, %s56
      %s74 = sphi 0, %s74
      %s76 = sphi 0, %s74
      %s77 = sphi 0, %s76
      %s91 = sphi 0, %s77
      %s95 = sphi 0, %s95
      %s97 = sphi 0, %s95
      %s98 = sphi 0, %s97
      %s112 = sphi 0, %s98
      %s116 = sphi 0, %s116
      %s118 = sphi 0, %s116
      %s119 = sphi 0, %s118
      %s133 = sphi 0, %s119
      %s137 = sphi 0, %s137
      %s139 = sphi 0, %s137
      %s140 = sphi 0, %s139
      %s154 = sphi 0, %s140
      %s160 = sphi 0, %s162
      %s163 = sphi 0, %s160
      %s164 = sphi 0, %s163
      %s180 = sphi 0, %s164
      %s186 = sphi 0, %s188
      %s189 = sphi 0, %s186
      %s190 = sphi 0, %s189
      %s206 = sphi 0, %s190
      %s212 = sphi 0, %s214
      %s215 = sphi 0, %s212
      %s216 = sphi 0, %s215
      %s232 = sphi 0, %s216
      %s238 = sphi 0, %s240
      %s241 = sphi 0, %s238
      %s242 = sphi 0, %s241
      %s258 = sphi 0, %s242
      %s264 = sphi 0, %s266
      %s267 = sphi 0, %s264
      %s268 = sphi 0, %s267
      %s284 = sphi 0, %s268
      %s290 = sphi 0, %s292
      %s293 = sphi 0, %s290
      %s294 = sphi 0, %s293
      %s310 = sphi 0, %s294
      %s316 = sphi 0, %s318
      %s319 = sphi 0, %s316
      %s320 = sphi 0, %s319
      %s336 = sphi 0, %s320
      %s340 = sphi 0, %s340
      %s342 = sphi 0, %s340
      %s343 = sphi 0, %s342
      %s357 = sphi 0, %s343
    $region4: #{tpu_custom_call.1} parent=1 // loop_header_branch
      %27 = sbr.rel (%p25) target = $region8
    $region5: #{tpu_custom_call.1} parent=1 // loop_body
      %s29 = ssub.s32 %s24, 1
      %s30 = ssub.s32 %s24, 2
      %s31 = sadd.s32 %s24, 1
      %s33 = sadd.s32 %s32, 1
      %p36 = scmp.eq.s32.totalorder %s24, 2
      %p37 = scmp.ne.s32.totalorder %s32, %s34
      %p38 = scmp.eq.s32.totalorder %s24, 0
      %p39 = por %p37, %p38
      %p40 = scmp.ne.s32.totalorder %s32, %s34
      %p41 = scmp.eq.s32.totalorder %s29, 2
      %p42 = por %p40, %p41
      %p43 = scmp.ne.s32.totalorder %s34, %s35
      %p44 = scmp.eq.s32.totalorder %s29, 0
      %p45 = por %p43, %p44
      %p46 = scmp.ne.s32.totalorder %s34, %s35
      %p47 = scmp.eq.s32.totalorder %s30, 2
      %p48 = por %p46, %p47
      %p50 = scmp.ne.s32.totalorder %s35, %s49
      %p51 = scmp.eq.s32.totalorder %s30, 0
      %p52 = por %p50, %p51
      %s54 = sadd.s32 %s53, 1
      %p57 = scmp.eq.s32.totalorder %s24, 2
      %p58 = scmp.ne.s32.totalorder %s53, %s55
      %p59 = scmp.eq.s32.totalorder %s24, 0
      %p60 = por %p58, %p59
      %p61 = scmp.ne.s32.totalorder %s53, %s55
      %p62 = scmp.eq.s32.totalorder %s29, 2
      %p63 = por %p61, %p62
      %p64 = scmp.ne.s32.totalorder %s55, %s56
      %p65 = scmp.eq.s32.totalorder %s29, 0
      %p66 = por %p64, %p65
      %p67 = scmp.ne.s32.totalorder %s55, %s56
      %p68 = scmp.eq.s32.totalorder %s30, 2
      %p69 = por %p67, %p68
      %p71 = scmp.ne.s32.totalorder %s56, %s70
      %p72 = scmp.eq.s32.totalorder %s30, 0
      %p73 = por %p71, %p72
      %s75 = sadd.s32 %s74, 1
      %p78 = scmp.eq.s32.totalorder %s24, 2
      %p79 = scmp.ne.s32.totalorder %s74, %s76
      %p80 = scmp.eq.s32.totalorder %s24, 0
      %p81 = por %p79, %p80
      %p82 = scmp.ne.s32.totalorder %s74, %s76
      %p83 = scmp.eq.s32.totalorder %s29, 2
      %p84 = por %p82, %p83
      %p85 = scmp.ne.s32.totalorder %s76, %s77
      %p86 = scmp.eq.s32.totalorder %s29, 0
      %p87 = por %p85, %p86
      %p88 = scmp.ne.s32.totalorder %s76, %s77
      %p89 = scmp.eq.s32.totalorder %s30, 2
      %p90 = por %p88, %p89
      %p92 = scmp.ne.s32.totalorder %s77, %s91
      %p93 = scmp.eq.s32.totalorder %s30, 0
      %p94 = por %p92, %p93
      %s96 = sadd.s32 %s95, 1
      %p99 = scmp.eq.s32.totalorder %s24, 2
      %p100 = scmp.ne.s32.totalorder %s95, %s97
      %p101 = scmp.eq.s32.totalorder %s24, 0
      %p102 = por %p100, %p101
      %p103 = scmp.ne.s32.totalorder %s95, %s97
      %p104 = scmp.eq.s32.totalorder %s29, 2
      %p105 = por %p103, %p104
      %p106 = scmp.ne.s32.totalorder %s97, %s98
      %p107 = scmp.eq.s32.totalorder %s29, 0
      %p108 = por %p106, %p107
      %p109 = scmp.ne.s32.totalorder %s97, %s98
      %p110 = scmp.eq.s32.totalorder %s30, 2
      %p111 = por %p109, %p110
      %p113 = scmp.ne.s32.totalorder %s98, %s112
      %p114 = scmp.eq.s32.totalorder %s30, 0
      %p115 = por %p113, %p114
      %s117 = sadd.s32 %s116, 1
      %p120 = scmp.eq.s32.totalorder %s24, 2
      %p121 = scmp.ne.s32.totalorder %s116, %s118
      %p122 = scmp.eq.s32.totalorder %s24, 0
      %p123 = por %p121, %p122
      %p124 = scmp.ne.s32.totalorder %s116, %s118
      %p125 = scmp.eq.s32.totalorder %s29, 2
      %p126 = por %p124, %p125
      %p127 = scmp.ne.s32.totalorder %s118, %s119
      %p128 = scmp.eq.s32.totalorder %s29, 0
      %p129 = por %p127, %p128
      %p130 = scmp.ne.s32.totalorder %s118, %s119
      %p131 = scmp.eq.s32.totalorder %s30, 2
      %p132 = por %p130, %p131
      %p134 = scmp.ne.s32.totalorder %s119, %s133
      %p135 = scmp.eq.s32.totalorder %s30, 0
      %p136 = por %p134, %p135
      %s138 = sadd.s32 %s137, 1
      %p141 = scmp.eq.s32.totalorder %s24, 2
      %p142 = scmp.ne.s32.totalorder %s137, %s139
      %p143 = scmp.eq.s32.totalorder %s24, 0
      %p144 = por %p142, %p143
      %p145 = scmp.ne.s32.totalorder %s137, %s139
      %p146 = scmp.eq.s32.totalorder %s29, 2
      %p147 = por %p145, %p146
      %p148 = scmp.ne.s32.totalorder %s139, %s140
      %p149 = scmp.eq.s32.totalorder %s29, 0
      %p150 = por %p148, %p149
      %p151 = scmp.ne.s32.totalorder %s139, %s140
      %p152 = scmp.eq.s32.totalorder %s30, 2
      %p153 = por %p151, %p152
      %p155 = scmp.ne.s32.totalorder %s140, %s154
      %p156 = scmp.eq.s32.totalorder %s30, 0
      %p157 = por %p155, %p156
      %s158 = ssub.s32 %s24, %s31
      %p159 = scmp.eq.s32.totalorder %s158, 0
      %s161 = sadd.s32 %s160, 1
      %s162 = scalar_select %p159, %s160, %s161
      %p165 = pneg %p159
      %p166 = scmp.eq.s32.totalorder %s24, 2
      %p167 = por %p165, %p166
      %p168 = scmp.ne.s32.totalorder %s160, %s163
      %p169 = scmp.eq.s32.totalorder %s24, 0
      %p170 = por %p168, %p169
      %p171 = scmp.ne.s32.totalorder %s160, %s163
      %p172 = scmp.eq.s32.totalorder %s29, 2
      %p173 = por %p171, %p172
      %p174 = scmp.ne.s32.totalorder %s163, %s164
      %p175 = scmp.eq.s32.totalorder %s29, 0
      %p176 = por %p174, %p175
      %p177 = scmp.ne.s32.totalorder %s163, %s164
      %p178 = scmp.eq.s32.totalorder %s30, 2
      %p179 = por %p177, %p178
      %p181 = scmp.ne.s32.totalorder %s164, %s180
      %p182 = scmp.eq.s32.totalorder %s30, 0
      %p183 = por %p181, %p182
      %s184 = ssub.s32 %s24, %s31
      %p185 = scmp.eq.s32.totalorder %s184, 0
      %s187 = sadd.s32 %s186, 1
      %s188 = scalar_select %p185, %s186, %s187
      %p191 = pneg %p185
      %p192 = scmp.eq.s32.totalorder %s24, 2
      %p193 = por %p191, %p192
      %p194 = scmp.ne.s32.totalorder %s186, %s189
      %p195 = scmp.eq.s32.totalorder %s24, 0
      %p196 = por %p194, %p195
      %p197 = scmp.ne.s32.totalorder %s186, %s189
      %p198 = scmp.eq.s32.totalorder %s29, 2
      %p199 = por %p197, %p198
      %p200 = scmp.ne.s32.totalorder %s189, %s190
      %p201 = scmp.eq.s32.totalorder %s29, 0
      %p202 = por %p200, %p201
      %p203 = scmp.ne.s32.totalorder %s189, %s190
      %p204 = scmp.eq.s32.totalorder %s30, 2
      %p205 = por %p203, %p204
      %p207 = scmp.ne.s32.totalorder %s190, %s206
      %p208 = scmp.eq.s32.totalorder %s30, 0
      %p209 = por %p207, %p208
      %s210 = ssub.s32 %s24, %s31
      %p211 = scmp.eq.s32.totalorder %s210, 0
      %s213 = sadd.s32 %s212, 1
      %s214 = scalar_select %p211, %s212, %s213
      %p217 = pneg %p211
      %p218 = scmp.eq.s32.totalorder %s24, 2
      %p219 = por %p217, %p218
      %p220 = scmp.ne.s32.totalorder %s212, %s215
      %p221 = scmp.eq.s32.totalorder %s24, 0
      %p222 = por %p220, %p221
      %p223 = scmp.ne.s32.totalorder %s212, %s215
      %p224 = scmp.eq.s32.totalorder %s29, 2
      %p225 = por %p223, %p224
      %p226 = scmp.ne.s32.totalorder %s215, %s216
      %p227 = scmp.eq.s32.totalorder %s29, 0
      %p228 = por %p226, %p227
      %p229 = scmp.ne.s32.totalorder %s215, %s216
      %p230 = scmp.eq.s32.totalorder %s30, 2
      %p231 = por %p229, %p230
      %p233 = scmp.ne.s32.totalorder %s216, %s232
      %p234 = scmp.eq.s32.totalorder %s30, 0
      %p235 = por %p233, %p234
      %s236 = ssub.s32 %s24, %s31
      %p237 = scmp.eq.s32.totalorder %s236, 0
      %s239 = sadd.s32 %s238, 1
      %s240 = scalar_select %p237, %s238, %s239
      %p243 = pneg %p237
      %p244 = scmp.eq.s32.totalorder %s24, 2
      %p245 = por %p243, %p244
      %p246 = scmp.ne.s32.totalorder %s238, %s241
      %p247 = scmp.eq.s32.totalorder %s24, 0
      %p248 = por %p246, %p247
      %p249 = scmp.ne.s32.totalorder %s238, %s241
      %p250 = scmp.eq.s32.totalorder %s29, 2
      %p251 = por %p249, %p250
      %p252 = scmp.ne.s32.totalorder %s241, %s242
      %p253 = scmp.eq.s32.totalorder %s29, 0
      %p254 = por %p252, %p253
      %p255 = scmp.ne.s32.totalorder %s241, %s242
      %p256 = scmp.eq.s32.totalorder %s30, 2
      %p257 = por %p255, %p256
      %p259 = scmp.ne.s32.totalorder %s242, %s258
      %p260 = scmp.eq.s32.totalorder %s30, 0
      %p261 = por %p259, %p260
      %s262 = ssub.s32 %s24, %s31
      %p263 = scmp.eq.s32.totalorder %s262, 0
      %s265 = sadd.s32 %s264, 1
      %s266 = scalar_select %p263, %s264, %s265
      %p269 = pneg %p263
      %p270 = scmp.eq.s32.totalorder %s24, 2
      %p271 = por %p269, %p270
      %p272 = scmp.ne.s32.totalorder %s264, %s267
      %p273 = scmp.eq.s32.totalorder %s24, 0
      %p274 = por %p272, %p273
      %p275 = scmp.ne.s32.totalorder %s264, %s267
      %p276 = scmp.eq.s32.totalorder %s29, 2
      %p277 = por %p275, %p276
      %p278 = scmp.ne.s32.totalorder %s267, %s268
      %p279 = scmp.eq.s32.totalorder %s29, 0
      %p280 = por %p278, %p279
      %p281 = scmp.ne.s32.totalorder %s267, %s268
      %p282 = scmp.eq.s32.totalorder %s30, 2
      %p283 = por %p281, %p282
      %p285 = scmp.ne.s32.totalorder %s268, %s284
      %p286 = scmp.eq.s32.totalorder %s30, 0
      %p287 = por %p285, %p286
      %s288 = ssub.s32 %s24, %s31
      %p289 = scmp.eq.s32.totalorder %s288, 0
      %s291 = sadd.s32 %s290, 1
      %s292 = scalar_select %p289, %s290, %s291
      %p295 = pneg %p289
      %p296 = scmp.eq.s32.totalorder %s24, 2
      %p297 = por %p295, %p296
      %p298 = scmp.ne.s32.totalorder %s290, %s293
      %p299 = scmp.eq.s32.totalorder %s24, 0
      %p300 = por %p298, %p299
      %p301 = scmp.ne.s32.totalorder %s290, %s293
      %p302 = scmp.eq.s32.totalorder %s29, 2
      %p303 = por %p301, %p302
      %p304 = scmp.ne.s32.totalorder %s293, %s294
      %p305 = scmp.eq.s32.totalorder %s29, 0
      %p306 = por %p304, %p305
      %p307 = scmp.ne.s32.totalorder %s293, %s294
      %p308 = scmp.eq.s32.totalorder %s30, 2
      %p309 = por %p307, %p308
      %p311 = scmp.ne.s32.totalorder %s294, %s310
      %p312 = scmp.eq.s32.totalorder %s30, 0
      %p313 = por %p311, %p312
      %s314 = ssub.s32 %s24, %s31
      %p315 = scmp.eq.s32.totalorder %s314, 0
      %s317 = sadd.s32 %s316, 1
      %s318 = scalar_select %p315, %s316, %s317
      %p321 = pneg %p315
      %p322 = scmp.eq.s32.totalorder %s24, 2
      %p323 = por %p321, %p322
      %p324 = scmp.ne.s32.totalorder %s316, %s319
      %p325 = scmp.eq.s32.totalorder %s24, 0
      %p326 = por %p324, %p325
      %p327 = scmp.ne.s32.totalorder %s316, %s319
      %p328 = scmp.eq.s32.totalorder %s29, 2
      %p329 = por %p327, %p328
      %p330 = scmp.ne.s32.totalorder %s319, %s320
      %p331 = scmp.eq.s32.totalorder %s29, 0
      %p332 = por %p330, %p331
      %p333 = scmp.ne.s32.totalorder %s319, %s320
      %p334 = scmp.eq.s32.totalorder %s30, 2
      %p335 = por %p333, %p334
      %p337 = scmp.ne.s32.totalorder %s320, %s336
      %p338 = scmp.eq.s32.totalorder %s30, 0
      %p339 = por %p337, %p338
      %s341 = sadd.s32 %s340, 1
      %p344 = scmp.eq.s32.totalorder %s24, 2
      %p345 = scmp.ne.s32.totalorder %s340, %s342
      %p346 = scmp.eq.s32.totalorder %s24, 0
      %p347 = por %p345, %p346
      %p348 = scmp.ne.s32.totalorder %s340, %s342
      %p349 = scmp.eq.s32.totalorder %s29, 2
      %p350 = por %p348, %p349
      %p351 = scmp.ne.s32.totalorder %s342, %s343
      %p352 = scmp.eq.s32.totalorder %s29, 0
      %p353 = por %p351, %p352
      %p354 = scmp.ne.s32.totalorder %s342, %s343
      %p355 = scmp.eq.s32.totalorder %s30, 2
      %p356 = por %p354, %p355
      %p358 = scmp.ne.s32.totalorder %s343, %s357
      %p359 = scmp.eq.s32.totalorder %s30, 0
      %p360 = por %p358, %p359
      %p361 = scmp.le.s32.totalorder 1, %s24
      %p362 = scmp.lt.s32.totalorder %s24, 4
      %p363 = pnand %p361, %p362
      %p364 = pneg %p363
      // Predicated region
      $region9: #{tpu_custom_call.1} parent=5 // pred_check
        _
      $region10: #{tpu_custom_call.1} parent=5 // pred_check_branch
        %366 = sbr.rel (%p363) target = $region12
      $region11: #{tpu_custom_call.1} parent=5 // pred_region
        %s367 = ssub.s32 %s24, 1
        // Predicated region
        $region13: #{tpu_custom_call.1} parent=11 // pred_check
          %p368 = pneg %p45
        $region14: #{tpu_custom_call.1} parent=11 // pred_check_branch
          %370 = sbr.rel (%p368) target = $region16
        $region15: #{tpu_custom_call.1} parent=11 // pred_region
          %s372 = ssub.s32 4096, 4096
          %373 = vsyncadd [#allocation5], %s372
          %s374 = sshll.u32 [#allocation4], 4
          %s375 = int_to_ptr.vmem [resolvable:$true] %s374
          %380 = dma.hbm_to_vmem [thread:$0]  %s0, 4096, %s375, [#allocation5], 128, 128, 8
        $region16: #{tpu_custom_call.1} parent=11 // pred_fallthru
          _
        // Predicated region
        $region17: #{tpu_custom_call.1} parent=11 // pred_check
          %p381 = pneg %p66
        $region18: #{tpu_custom_call.1} parent=11 // pred_check_branch
          %383 = sbr.rel (%p381) target = $region20
        $region19: #{tpu_custom_call.1} parent=11 // pred_region
          %s385 = ssub.s32 4096, 4096
          %386 = vsyncadd [#allocation8], %s385
          %s387 = sshll.u32 [#allocation7], 4
          %s388 = int_to_ptr.vmem [resolvable:$true] %s387
          %393 = dma.hbm_to_vmem [thread:$0]  %s1, 4096, %s388, [#allocation8], 128, 128, 8
        $region20: #{tpu_custom_call.1} parent=11 // pred_fallthru
          _
        // Predicated region
        $region21: #{tpu_custom_call.1} parent=11 // pred_check
          %p394 = pneg %p87
        $region22: #{tpu_custom_call.1} parent=11 // pred_check_branch
          %396 = sbr.rel (%p394) target = $region24
        $region23: #{tpu_custom_call.1} parent=11 // pred_region
          %s398 = ssub.s32 4096, 4096
          %399 = vsyncadd [#allocation8], %s398
          %s400 = sshll.u32 [#allocation9], 4
          %s401 = int_to_ptr.vmem [resolvable:$true] %s400
          %406 = dma.hbm_to_vmem [thread:$0]  %s2, 4096, %s401, [#allocation8], 128, 128, 8
        $region24: #{tpu_custom_call.1} parent=11 // pred_fallthru
          _
        // Predicated region
        $region25: #{tpu_custom_call.1} parent=11 // pred_check
          %p407 = pneg %p108
        $region26: #{tpu_custom_call.1} parent=11 // pred_check_branch
          %409 = sbr.rel (%p407) target = $region28
        $region27: #{tpu_custom_call.1} parent=11 // pred_region
          %s411 = ssub.s32 32, 32
          %412 = vsyncadd [#allocation11], %s411
          %s414 = sshll.u32 [#allocation10], 4
          %s415 = int_to_ptr.vmem [resolvable:$true] %s414
          %417 = dma.hbm_to_vmem [thread:$0]  %s3, 32, %s415, [#allocation11]
        $region28: #{tpu_custom_call.1} parent=11 // pred_fallthru
          _
        // Predicated region
        $region29: #{tpu_custom_call.1} parent=11 // pred_check
          %p418 = pneg %p129
        $region30: #{tpu_custom_call.1} parent=11 // pred_check_branch
          %420 = sbr.rel (%p418) target = $region32
        $region31: #{tpu_custom_call.1} parent=11 // pred_region
          %s422 = ssub.s32 16, 16
          %423 = vsyncadd [#allocation11], %s422
          %s425 = sshll.u32 [#allocation12], 4
          %s426 = int_to_ptr.vmem [resolvable:$true] %s425
          %428 = dma.hbm_to_vmem [thread:$0]  %s4, 16, %s426, [#allocation11]
        $region32: #{tpu_custom_call.1} parent=11 // pred_fallthru
          _
        // Predicated region
        $region33: #{tpu_custom_call.1} parent=11 // pred_check
          %p429 = pneg %p150
        $region34: #{tpu_custom_call.1} parent=11 // pred_check_branch
          %431 = sbr.rel (%p429) target = $region36
        $region35: #{tpu_custom_call.1} parent=11 // pred_region
          %s433 = ssub.s32 16, 16
          %434 = vsyncadd [#allocation14], %s433
          %s436 = sshll.u32 [#allocation13], 4
          %s437 = int_to_ptr.vmem [resolvable:$true] %s436
          %439 = dma.hbm_to_vmem [thread:$0]  %s5, 16, %s437, [#allocation14]
        $region36: #{tpu_custom_call.1} parent=11 // pred_fallthru
          _
      $region12: #{tpu_custom_call.1} parent=5 // pred_fallthru
        _
      %p440 = scmp.lt.s32.totalorder %s24, 3
      // Predicated region
      $region37: #{tpu_custom_call.1} parent=5 // pred_check
        %p441 = pneg %p440
      $region38: #{tpu_custom_call.1} parent=5 // pred_check_branch
        %443 = sbr.rel (%p441) target = $region40
      $region39: #{tpu_custom_call.1} parent=5 // pred_region
        // Predicated region
        $region41: #{tpu_custom_call.1} parent=39 // pred_check
          %p444 = pneg %p170
        $region42: #{tpu_custom_call.1} parent=39 // pred_check_branch
          %446 = sbr.rel (%p444) target = $region44
        $region43: #{tpu_custom_call.1} parent=39 // pred_region
          %s447 = sand.u32 %s24, 1
          %s448 = scalar_lea.sflag [#allocation5], %s447
          %s449 = sand.u32 %s160, 1
          %s450 = scalar_lea.vmem [#allocation15], %s449
          %s452 = ssub.s32 16, 16
          %453 = vsyncadd %s448, %s452
          %s454 = smul.addr %s24, 16
          %s455 = scalar_lea.hbm %s6, %s454
          %s457 = sshll.u32 %s450, 4
          %s458 = int_to_ptr.vmem [resolvable:$true] %s457
          %460 = dma.hbm_to_vmem [thread:$0]  %s455, 16, %s458, %s448
        $region44: #{tpu_custom_call.1} parent=39 // pred_fallthru
          _
        // Predicated region
        $region45: #{tpu_custom_call.1} parent=39 // pred_check
          %p461 = pneg %p196
        $region46: #{tpu_custom_call.1} parent=39 // pred_check_branch
          %463 = sbr.rel (%p461) target = $region48
        $region47: #{tpu_custom_call.1} parent=39 // pred_region
          %s464 = sand.u32 %s24, 1
          %s465 = scalar_lea.sflag [#allocation5], %s464
          %s466 = sand.u32 %s186, 1
          %s467 = scalar_lea.vmem [#allocation16], %s466
          %s469 = ssub.s32 16, 16
          %470 = vsyncadd %s465, %s469
          %s471 = smul.addr %s24, 16
          %s472 = scalar_lea.hbm %s7, %s471
          %s474 = sshll.u32 %s467, 4
          %s475 = int_to_ptr.vmem [resolvable:$true] %s474
          %477 = dma.hbm_to_vmem [thread:$0]  %s472, 16, %s475, %s465
        $region48: #{tpu_custom_call.1} parent=39 // pred_fallthru
          _
        // Predicated region
        $region49: #{tpu_custom_call.1} parent=39 // pred_check
          %p478 = pneg %p222
        $region50: #{tpu_custom_call.1} parent=39 // pred_check_branch
          %480 = sbr.rel (%p478) target = $region52
        $region51: #{tpu_custom_call.1} parent=39 // pred_region
          %s481 = sand.u32 %s24, 1
          %s482 = scalar_lea.sflag [#allocation5], %s481
          %s483 = sand.u32 %s212, 1
          %s484 = scalar_lea.vmem [#allocation17], %s483
          %s486 = ssub.s32 16, 16
          %487 = vsyncadd %s482, %s486
          %s488 = smul.addr %s24, 16
          %s489 = scalar_lea.hbm %s8, %s488
          %s491 = sshll.u32 %s484, 4
          %s492 = int_to_ptr.vmem [resolvable:$true] %s491
          %494 = dma.hbm_to_vmem [thread:$0]  %s489, 16, %s492, %s482
        $region52: #{tpu_custom_call.1} parent=39 // pred_fallthru
          _
        // Predicated region
        $region53: #{tpu_custom_call.1} parent=39 // pred_check
          %p495 = pneg %p248
        $region54: #{tpu_custom_call.1} parent=39 // pred_check_branch
          %497 = sbr.rel (%p495) target = $region56
        $region55: #{tpu_custom_call.1} parent=39 // pred_region
          %s498 = sand.u32 %s24, 1
          %s499 = scalar_lea.sflag [#allocation5], %s498
          %s500 = sand.u32 %s238, 1
          %s501 = smul.addr %s500, 128
          %s502 = scalar_lea.vmem [#allocation18], %s501
          %s504 = ssub.s32 2048, 2048
          %505 = vsyncadd %s499, %s504
          %s506 = smul.addr %s24, 32
          %s507 = smul.addr %s506, 64
          %s508 = scalar_lea.hbm %s9, %s507
          %s509 = sshll.u32 %s502, 4
          %s510 = int_to_ptr.vmem [resolvable:$true] %s509
          %515 = dma.hbm_to_vmem [thread:$0]  %s508, 2048, %s510, %s499, 128, 128, 8
        $region56: #{tpu_custom_call.1} parent=39 // pred_fallthru
          _
        // Predicated region
        $region57: #{tpu_custom_call.1} parent=39 // pred_check
          %p516 = pneg %p274
        $region58: #{tpu_custom_call.1} parent=39 // pred_check_branch
          %518 = sbr.rel (%p516) target = $region60
        $region59: #{tpu_custom_call.1} parent=39 // pred_region
          %s519 = sand.u32 %s24, 1
          %s520 = scalar_lea.sflag [#allocation5], %s519
          %s521 = sand.u32 %s264, 1
          %s522 = smul.addr %s521, 2
          %s523 = scalar_lea.vmem [#allocation19], %s522
          %s525 = ssub.s32 32, 32
          %526 = vsyncadd %s520, %s525
          %s527 = smul.addr %s24, 2
          %s528 = smul.addr %s527, 16
          %s529 = scalar_lea.hbm %s10, %s528
          %s531 = sshll.u32 %s523, 4
          %s532 = int_to_ptr.vmem [resolvable:$true] %s531
          %534 = dma.hbm_to_vmem [thread:$0]  %s529, 32, %s532, %s520
        $region60: #{tpu_custom_call.1} parent=39 // pred_fallthru
          _
        // Predicated region
        $region61: #{tpu_custom_call.1} parent=39 // pred_check
          %p535 = pneg %p300
        $region62: #{tpu_custom_call.1} parent=39 // pred_check_branch
          %537 = sbr.rel (%p535) target = $region64
        $region63: #{tpu_custom_call.1} parent=39 // pred_region
          %s538 = sand.u32 %s24, 1
          %s539 = scalar_lea.sflag [#allocation5], %s538
          %s540 = sand.u32 %s290, 1
          %s541 = smul.addr %s540, 128
          %s542 = scalar_lea.vmem [#allocation20], %s541
          %s544 = ssub.s32 2048, 2048
          %545 = vsyncadd %s539, %s544
          %s546 = smul.addr %s24, 32
          %s547 = smul.addr %s546, 64
          %s548 = scalar_lea.hbm %s11, %s547
          %s549 = sshll.u32 %s542, 4
          %s550 = int_to_ptr.vmem [resolvable:$true] %s549
          %555 = dma.hbm_to_vmem [thread:$0]  %s548, 2048, %s550, %s539, 64, 64, 4
        $region64: #{tpu_custom_call.1} parent=39 // pred_fallthru
          _
        // Predicated region
        $region65: #{tpu_custom_call.1} parent=39 // pred_check
          %p556 = pneg %p326
        $region66: #{tpu_custom_call.1} parent=39 // pred_check_branch
          %558 = sbr.rel (%p556) target = $region68
        $region67: #{tpu_custom_call.1} parent=39 // pred_region
          %s559 = sand.u32 %s24, 1
          %s560 = scalar_lea.sflag [#allocation5], %s559
          %s561 = sand.u32 %s316, 1
          %s562 = scalar_lea.vmem [#allocation21], %s561
          %s564 = ssub.s32 16, 16
          %565 = vsyncadd %s560, %s564
          %s566 = smul.addr %s24, 16
          %s567 = scalar_lea.hbm %s12, %s566
          %s569 = sshll.u32 %s562, 4
          %s570 = int_to_ptr.vmem [resolvable:$true] %s569
          %572 = dma.hbm_to_vmem [thread:$0]  %s567, 16, %s570, %s560
        $region68: #{tpu_custom_call.1} parent=39 // pred_fallthru
          _
      $region40: #{tpu_custom_call.1} parent=5 // pred_fallthru
        _
      %p573 = scmp.le.s32.totalorder 1, %s24
      %p574 = scmp.lt.s32.totalorder %s24, 4
      %p575 = pnand %p573, %p574
      %p576 = pneg %p575
      // Predicated region
      $region69: #{tpu_custom_call.1} parent=5 // pred_check
        _
      $region70: #{tpu_custom_call.1} parent=5 // pred_check_branch
        %578 = sbr.rel (%p575) target = $region72
      $region71: #{tpu_custom_call.1} parent=5 // pred_region
        %s579 = ssub.s32 %s24, 1
        // Predicated region
        $region73: #{tpu_custom_call.1} parent=71 // pred_check
          %p580 = pneg %p45
        $region74: #{tpu_custom_call.1} parent=71 // pred_check_branch
          %582 = sbr.rel (%p580) target = $region76
        $region75: #{tpu_custom_call.1} parent=71 // pred_region
          %583 = dma.done [#allocation5], 4096
        $region76: #{tpu_custom_call.1} parent=71 // pred_fallthru
          _
        // Predicated region
        $region77: #{tpu_custom_call.1} parent=71 // pred_check
          %p584 = pneg %p66
        $region78: #{tpu_custom_call.1} parent=71 // pred_check_branch
          %586 = sbr.rel (%p584) target = $region80
        $region79: #{tpu_custom_call.1} parent=71 // pred_region
          %587 = dma.done [#allocation8], 4096
        $region80: #{tpu_custom_call.1} parent=71 // pred_fallthru
          _
        // Predicated region
        $region81: #{tpu_custom_call.1} parent=71 // pred_check
          %p588 = pneg %p87
        $region82: #{tpu_custom_call.1} parent=71 // pred_check_branch
          %590 = sbr.rel (%p588) target = $region84
        $region83: #{tpu_custom_call.1} parent=71 // pred_region
          %591 = dma.done [#allocation8], 4096
        $region84: #{tpu_custom_call.1} parent=71 // pred_fallthru
          _
        // Predicated region
        $region85: #{tpu_custom_call.1} parent=71 // pred_check
          %p592 = pneg %p108
        $region86: #{tpu_custom_call.1} parent=71 // pred_check_branch
          %594 = sbr.rel (%p592) target = $region88
        $region87: #{tpu_custom_call.1} parent=71 // pred_region
          %595 = dma.done [#allocation11], 32
        $region88: #{tpu_custom_call.1} parent=71 // pred_fallthru
          _
        // Predicated region
        $region89: #{tpu_custom_call.1} parent=71 // pred_check
          %p596 = pneg %p129
        $region90: #{tpu_custom_call.1} parent=71 // pred_check_branch
          %598 = sbr.rel (%p596) target = $region92
        $region91: #{tpu_custom_call.1} parent=71 // pred_region
          %599 = dma.done [#allocation11], 16
        $region92: #{tpu_custom_call.1} parent=71 // pred_fallthru
          _
        // Predicated region
        $region93: #{tpu_custom_call.1} parent=71 // pred_check
          %p600 = pneg %p150
        $region94: #{tpu_custom_call.1} parent=71 // pred_check_branch
          %602 = sbr.rel (%p600) target = $region96
        $region95: #{tpu_custom_call.1} parent=71 // pred_region
          %603 = dma.done [#allocation14], 16
        $region96: #{tpu_custom_call.1} parent=71 // pred_fallthru
          _
        %s604 = sand.u32 %s29, 1
        %s605 = scalar_lea.sflag [#allocation5], %s604
        %s606 = sand.u32 %s163, 1
        %s607 = scalar_lea.vmem [#allocation15], %s606
        // Predicated region
        $region97: #{tpu_custom_call.1} parent=71 // pred_check
          %p608 = pneg %p176
        $region98: #{tpu_custom_call.1} parent=71 // pred_check_branch
          %610 = sbr.rel (%p608) target = $region100
        $region99: #{tpu_custom_call.1} parent=71 // pred_region
          %611 = dma.done %s605, 16
        $region100: #{tpu_custom_call.1} parent=71 // pred_fallthru
          _
        %s612 = sand.u32 %s29, 1
        %s613 = scalar_lea.sflag [#allocation5], %s612
        %s614 = sand.u32 %s189, 1
        %s615 = scalar_lea.vmem [#allocation16], %s614
        // Predicated region
        $region101: #{tpu_custom_call.1} parent=71 // pred_check
          %p616 = pneg %p202
        $region102: #{tpu_custom_call.1} parent=71 // pred_check_branch
          %618 = sbr.rel (%p616) target = $region104
        $region103: #{tpu_custom_call.1} parent=71 // pred_region
          %619 = dma.done %s613, 16
        $region104: #{tpu_custom_call.1} parent=71 // pred_fallthru
          _
        %s620 = sand.u32 %s29, 1
        %s621 = scalar_lea.sflag [#allocation5], %s620
        %s622 = sand.u32 %s215, 1
        %s623 = scalar_lea.vmem [#allocation17], %s622
        // Predicated region
        $region105: #{tpu_custom_call.1} parent=71 // pred_check
          %p624 = pneg %p228
        $region106: #{tpu_custom_call.1} parent=71 // pred_check_branch
          %626 = sbr.rel (%p624) target = $region108
        $region107: #{tpu_custom_call.1} parent=71 // pred_region
          %627 = dma.done %s621, 16
        $region108: #{tpu_custom_call.1} parent=71 // pred_fallthru
          _
        %s628 = sand.u32 %s29, 1
        %s629 = scalar_lea.sflag [#allocation5], %s628
        %s630 = sand.u32 %s241, 1
        %s631 = smul.addr %s630, 128
        %s632 = scalar_lea.vmem [#allocation18], %s631
        // Predicated region
        $region109: #{tpu_custom_call.1} parent=71 // pred_check
          %p633 = pneg %p254
        $region110: #{tpu_custom_call.1} parent=71 // pred_check_branch
          %635 = sbr.rel (%p633) target = $region112
        $region111: #{tpu_custom_call.1} parent=71 // pred_region
          %636 = dma.done %s629, 2048
        $region112: #{tpu_custom_call.1} parent=71 // pred_fallthru
          _
        %s637 = sand.u32 %s29, 1
        %s638 = scalar_lea.sflag [#allocation5], %s637
        %s639 = sand.u32 %s267, 1
        %s640 = smul.addr %s639, 2
        %s641 = scalar_lea.vmem [#allocation19], %s640
        // Predicated region
        $region113: #{tpu_custom_call.1} parent=71 // pred_check
          %p642 = pneg %p280
        $region114: #{tpu_custom_call.1} parent=71 // pred_check_branch
          %644 = sbr.rel (%p642) target = $region116
        $region115: #{tpu_custom_call.1} parent=71 // pred_region
          %645 = dma.done %s638, 32
        $region116: #{tpu_custom_call.1} parent=71 // pred_fallthru
          _
        %s646 = sand.u32 %s29, 1
        %s647 = scalar_lea.sflag [#allocation5], %s646
        %s648 = sand.u32 %s293, 1
        %s649 = smul.addr %s648, 128
        %s650 = scalar_lea.vmem [#allocation20], %s649
        // Predicated region
        $region117: #{tpu_custom_call.1} parent=71 // pred_check
          %p651 = pneg %p306
        $region118: #{tpu_custom_call.1} parent=71 // pred_check_branch
          %653 = sbr.rel (%p651) target = $region120
        $region119: #{tpu_custom_call.1} parent=71 // pred_region
          %654 = dma.done %s647, 2048
        $region120: #{tpu_custom_call.1} parent=71 // pred_fallthru
          _
        %s655 = sand.u32 %s29, 1
        %s656 = scalar_lea.sflag [#allocation5], %s655
        %s657 = sand.u32 %s319, 1
        %s658 = scalar_lea.vmem [#allocation21], %s657
        // Predicated region
        $region121: #{tpu_custom_call.1} parent=71 // pred_check
          %p659 = pneg %p332
        $region122: #{tpu_custom_call.1} parent=71 // pred_check_branch
          %661 = sbr.rel (%p659) target = $region124
        $region123: #{tpu_custom_call.1} parent=71 // pred_region
          %662 = dma.done %s656, 16
        $region124: #{tpu_custom_call.1} parent=71 // pred_fallthru
          _
        %p663 = pneg %p45
        %p664 = pneg %p42
        %p665 = pneg %p66
        %p666 = pneg %p63
        %p667 = pneg %p87
        %p668 = pneg %p84
        %p669 = pneg %p108
        %p670 = pneg %p105
        %p671 = pneg %p129
        %p672 = pneg %p126
        %p673 = pneg %p150
        %p674 = pneg %p147
        %s675 = sand.u32 %s29, 1
        %s676 = scalar_lea.sflag [#allocation5], %s675
        %s677 = sand.u32 %s163, 1
        %s678 = scalar_lea.vmem [#allocation15], %s677
        %p679 = pneg %p176
        %p680 = pneg %p173
        %s681 = sand.u32 %s29, 1
        %s682 = scalar_lea.sflag [#allocation5], %s681
        %s683 = sand.u32 %s189, 1
        %s684 = scalar_lea.vmem [#allocation16], %s683
        %p685 = pneg %p202
        %p686 = pneg %p199
        %s687 = sand.u32 %s29, 1
        %s688 = scalar_lea.sflag [#allocation5], %s687
        %s689 = sand.u32 %s215, 1
        %s690 = scalar_lea.vmem [#allocation17], %s689
        %p691 = pneg %p228
        %p692 = pneg %p225
        %s693 = sand.u32 %s29, 1
        %s694 = scalar_lea.sflag [#allocation5], %s693
        %s695 = sand.u32 %s241, 1
        %s696 = smul.addr %s695, 128
        %s697 = scalar_lea.vmem [#allocation18], %s696
        %p698 = pneg %p254
        %p699 = pneg %p251
        %s700 = sand.u32 %s29, 1
        %s701 = scalar_lea.sflag [#allocation5], %s700
        %s702 = sand.u32 %s267, 1
        %s703 = smul.addr %s702, 2
        %s704 = scalar_lea.vmem [#allocation19], %s703
        %p705 = pneg %p280
        %p706 = pneg %p277
        %s707 = sand.u32 %s29, 1
        %s708 = scalar_lea.sflag [#allocation5], %s707
        %s709 = sand.u32 %s293, 1
        %s710 = smul.addr %s709, 128
        %s711 = scalar_lea.vmem [#allocation20], %s710
        %p712 = pneg %p306
        %p713 = pneg %p303
        %s714 = sand.u32 %s29, 1
        %s715 = scalar_lea.sflag [#allocation5], %s714
        %s716 = sand.u32 %s319, 1
        %s717 = scalar_lea.vmem [#allocation21], %s716
        %p718 = pneg %p332
        %p719 = pneg %p329
        %p720 = pneg %p353
        %p721 = pneg %p350
        %p723 = scmp.eq.s32.totalorder %s29, 0
        // Predicated region
        $region125: #{tpu_custom_call.1} parent=71 // pred_check
          %p724 = pneg %p723
        $region126: #{tpu_custom_call.1} parent=71 // pred_check_branch
          %726 = sbr.rel (%p724) target = $region128
        $region127: #{tpu_custom_call.1} parent=71 // pred_region
          %v727 = vlaneseq
          %v728 = vand.u32 %v727, 127
          %v729 = vadd.s32 %v728, 128
          %v730 = vld [vmem:[#allocation9] sm:$0xff]
          %v731 = vld [vmem:[#allocation9 + $0x8] sm:$0xff]
          %v732 = vld [vmem:[#allocation9 + $0x10] sm:$0xff]
          %v733 = vld [vmem:[#allocation9 + $0x18] sm:$0xff]
          %v734 = vld [vmem:[#allocation9 + $0x20] sm:$0xff]
          %v735 = vld [vmem:[#allocation9 + $0x28] sm:$0xff]
          %v736 = vld [vmem:[#allocation9 + $0x30] sm:$0xff]
          %v737 = vld [vmem:[#allocation9 + $0x38] sm:$0xff]
          %v738 = vld [vmem:[#allocation9 + $0x40] sm:$0xff]
          %v739 = vld [vmem:[#allocation9 + $0x48] sm:$0xff]
          %v740 = vld [vmem:[#allocation9 + $0x50] sm:$0xff]
          %v741 = vld [vmem:[#allocation9 + $0x58] sm:$0xff]
          %v742 = vld [vmem:[#allocation9 + $0x60] sm:$0xff]
          %v743 = vld [vmem:[#allocation9 + $0x68] sm:$0xff]
          %v744 = vld [vmem:[#allocation9 + $0x70] sm:$0xff]
          %v745 = vld [vmem:[#allocation9 + $0x78] sm:$0xff]
          %v746 = vld [vmem:[#allocation9 + $0x80] sm:$0xff]
          %v747 = vld [vmem:[#allocation9 + $0x88] sm:$0xff]
          %v748 = vld [vmem:[#allocation9 + $0x90] sm:$0xff]
          %v749 = vld [vmem:[#allocation9 + $0x98] sm:$0xff]
          %v750 = vld [vmem:[#allocation9 + $0xa0] sm:$0xff]
          %v751 = vld [vmem:[#allocation9 + $0xa8] sm:$0xff]
          %v752 = vld [vmem:[#allocation9 + $0xb0] sm:$0xff]
          %v753 = vld [vmem:[#allocation9 + $0xb8] sm:$0xff]
          %v754 = vld [vmem:[#allocation9 + $0xc0] sm:$0xff]
          %v755 = vld [vmem:[#allocation9 + $0xc8] sm:$0xff]
          %v756 = vld [vmem:[#allocation9 + $0xd0] sm:$0xff]
          %v757 = vld [vmem:[#allocation9 + $0xd8] sm:$0xff]
          %v758 = vld [vmem:[#allocation9 + $0xe0] sm:$0xff]
          %v759 = vld [vmem:[#allocation9 + $0xe8] sm:$0xff]
          %v760 = vld [vmem:[#allocation9 + $0xf0] sm:$0xff]
          %v761 = vld [vmem:[#allocation9 + $0xf8] sm:$0xff]
          %762 = vset.pattern.permute.xlu0 0
          %763 = vperm.xlu0 %762, %v730
          %v764 = vpop.permute.xlu0 %763
          %765 = vset.pattern.permute.xlu0 0
          %766 = vperm.xlu0 %765, %v731
          %v767 = vpop.permute.xlu0 %766
          %768 = vset.pattern.permute.xlu0 0
          %769 = vperm.xlu0 %768, %v732
          %v770 = vpop.permute.xlu0 %769
          %771 = vset.pattern.permute.xlu0 0
          %772 = vperm.xlu0 %771, %v733
          %v773 = vpop.permute.xlu0 %772
          %774 = vset.pattern.permute.xlu0 0
          %775 = vperm.xlu0 %774, %v734
          %v776 = vpop.permute.xlu0 %775
          %777 = vset.pattern.permute.xlu0 0
          %778 = vperm.xlu0 %777, %v735
          %v779 = vpop.permute.xlu0 %778
          %780 = vset.pattern.permute.xlu0 0
          %781 = vperm.xlu0 %780, %v736
          %v782 = vpop.permute.xlu0 %781
          %783 = vset.pattern.permute.xlu0 0
          %784 = vperm.xlu0 %783, %v737
          %v785 = vpop.permute.xlu0 %784
          %786 = vset.pattern.permute.xlu0 0
          %787 = vperm.xlu0 %786, %v738
          %v788 = vpop.permute.xlu0 %787
          %789 = vset.pattern.permute.xlu0 0
          %790 = vperm.xlu0 %789, %v739
          %v791 = vpop.permute.xlu0 %790
          %792 = vset.pattern.permute.xlu0 0
          %793 = vperm.xlu0 %792, %v740
          %v794 = vpop.permute.xlu0 %793
          %795 = vset.pattern.permute.xlu0 0
          %796 = vperm.xlu0 %795, %v741
          %v797 = vpop.permute.xlu0 %796
          %798 = vset.pattern.permute.xlu0 0
          %799 = vperm.xlu0 %798, %v742
          %v800 = vpop.permute.xlu0 %799
          %801 = vset.pattern.permute.xlu0 0
          %802 = vperm.xlu0 %801, %v743
          %v803 = vpop.permute.xlu0 %802
          %804 = vset.pattern.permute.xlu0 0
          %805 = vperm.xlu0 %804, %v744
          %v806 = vpop.permute.xlu0 %805
          %807 = vset.pattern.permute.xlu0 0
          %808 = vperm.xlu0 %807, %v745
          %v809 = vpop.permute.xlu0 %808
          %810 = vset.pattern.permute.xlu0 0
          %811 = vperm.xlu0 %810, %v746
          %v812 = vpop.permute.xlu0 %811
          %813 = vset.pattern.permute.xlu0 0
          %814 = vperm.xlu0 %813, %v747
          %v815 = vpop.permute.xlu0 %814
          %816 = vset.pattern.permute.xlu0 0
          %817 = vperm.xlu0 %816, %v748
          %v818 = vpop.permute.xlu0 %817
          %819 = vset.pattern.permute.xlu0 0
          %820 = vperm.xlu0 %819, %v749
          %v821 = vpop.permute.xlu0 %820
          %822 = vset.pattern.permute.xlu0 0
          %823 = vperm.xlu0 %822, %v750
          %v824 = vpop.permute.xlu0 %823
          %825 = vset.pattern.permute.xlu0 0
          %826 = vperm.xlu0 %825, %v751
          %v827 = vpop.permute.xlu0 %826
          %828 = vset.pattern.permute.xlu0 0
          %829 = vperm.xlu0 %828, %v752
          %v830 = vpop.permute.xlu0 %829
          %831 = vset.pattern.permute.xlu0 0
          %832 = vperm.xlu0 %831, %v753
          %v833 = vpop.permute.xlu0 %832
          %834 = vset.pattern.permute.xlu0 0
          %835 = vperm.xlu0 %834, %v754
          %v836 = vpop.permute.xlu0 %835
          %837 = vset.pattern.permute.xlu0 0
          %838 = vperm.xlu0 %837, %v755
          %v839 = vpop.permute.xlu0 %838
          %840 = vset.pattern.permute.xlu0 0
          %841 = vperm.xlu0 %840, %v756
          %v842 = vpop.permute.xlu0 %841
          %843 = vset.pattern.permute.xlu0 0
          %844 = vperm.xlu0 %843, %v757
          %v845 = vpop.permute.xlu0 %844
          %846 = vset.pattern.permute.xlu0 0
          %847 = vperm.xlu0 %846, %v758
          %v848 = vpop.permute.xlu0 %847
          %849 = vset.pattern.permute.xlu0 0
          %850 = vperm.xlu0 %849, %v759
          %v851 = vpop.permute.xlu0 %850
          %852 = vset.pattern.permute.xlu0 0
          %853 = vperm.xlu0 %852, %v760
          %v854 = vpop.permute.xlu0 %853
          %855 = vset.pattern.permute.xlu0 0
          %856 = vperm.xlu0 %855, %v761
          %v857 = vpop.permute.xlu0 %856
          %vm858 = vcmp.eq.s32.totalorder %v728, %v764
          %vm859 = vcmp.eq.s32.totalorder %v729, %v764
          %vm860 = vcmp.eq.s32.totalorder %v728, %v767
          %vm861 = vcmp.eq.s32.totalorder %v729, %v767
          %vm862 = vcmp.eq.s32.totalorder %v728, %v770
          %vm863 = vcmp.eq.s32.totalorder %v729, %v770
          %vm864 = vcmp.eq.s32.totalorder %v728, %v773
          %vm865 = vcmp.eq.s32.totalorder %v729, %v773
          %vm866 = vcmp.eq.s32.totalorder %v728, %v776
          %vm867 = vcmp.eq.s32.totalorder %v729, %v776
          %vm868 = vcmp.eq.s32.totalorder %v728, %v779
          %vm869 = vcmp.eq.s32.totalorder %v729, %v779
          %vm870 = vcmp.eq.s32.totalorder %v728, %v782
          %vm871 = vcmp.eq.s32.totalorder %v729, %v782
          %vm872 = vcmp.eq.s32.totalorder %v728, %v785
          %vm873 = vcmp.eq.s32.totalorder %v729, %v785
          %vm874 = vcmp.eq.s32.totalorder %v728, %v788
          %vm875 = vcmp.eq.s32.totalorder %v729, %v788
          %vm876 = vcmp.eq.s32.totalorder %v728, %v791
          %vm877 = vcmp.eq.s32.totalorder %v729, %v791
          %vm878 = vcmp.eq.s32.totalorder %v728, %v794
          %vm879 = vcmp.eq.s32.totalorder %v729, %v794
          %vm880 = vcmp.eq.s32.totalorder %v728, %v797
          %vm881 = vcmp.eq.s32.totalorder %v729, %v797
          %vm882 = vcmp.eq.s32.totalorder %v728, %v800
          %vm883 = vcmp.eq.s32.totalorder %v729, %v800
          %vm884 = vcmp.eq.s32.totalorder %v728, %v803
          %vm885 = vcmp.eq.s32.totalorder %v729, %v803
          %vm886 = vcmp.eq.s32.totalorder %v728, %v806
          %vm887 = vcmp.eq.s32.totalorder %v729, %v806
          %vm888 = vcmp.eq.s32.totalorder %v728, %v809
          %vm889 = vcmp.eq.s32.totalorder %v729, %v809
          %vm890 = vcmp.eq.s32.totalorder %v728, %v812
          %vm891 = vcmp.eq.s32.totalorder %v729, %v812
          %vm892 = vcmp.eq.s32.totalorder %v728, %v815
          %vm893 = vcmp.eq.s32.totalorder %v729, %v815
          %vm894 = vcmp.eq.s32.totalorder %v728, %v818
          %vm895 = vcmp.eq.s32.totalorder %v729, %v818
          %vm896 = vcmp.eq.s32.totalorder %v728, %v821
          %vm897 = vcmp.eq.s32.totalorder %v729, %v821
          %vm898 = vcmp.eq.s32.totalorder %v728, %v824
          %vm899 = vcmp.eq.s32.totalorder %v729, %v824
          %vm900 = vcmp.eq.s32.totalorder %v728, %v827
          %vm901 = vcmp.eq.s32.totalorder %v729, %v827
          %vm902 = vcmp.eq.s32.totalorder %v728, %v830
          %vm903 = vcmp.eq.s32.totalorder %v729, %v830
          %vm904 = vcmp.eq.s32.totalorder %v728, %v833
          %vm905 = vcmp.eq.s32.totalorder %v729, %v833
          %vm906 = vcmp.eq.s32.totalorder %v728, %v836
          %vm907 = vcmp.eq.s32.totalorder %v729, %v836
          %vm908 = vcmp.eq.s32.totalorder %v728, %v839
          %vm909 = vcmp.eq.s32.totalorder %v729, %v839
          %vm910 = vcmp.eq.s32.totalorder %v728, %v842
          %vm911 = vcmp.eq.s32.totalorder %v729, %v842
          %vm912 = vcmp.eq.s32.totalorder %v728, %v845
          %vm913 = vcmp.eq.s32.totalorder %v729, %v845
          %vm914 = vcmp.eq.s32.totalorder %v728, %v848
          %vm915 = vcmp.eq.s32.totalorder %v729, %v848
          %vm916 = vcmp.eq.s32.totalorder %v728, %v851
          %vm917 = vcmp.eq.s32.totalorder %v729, %v851
          %vm918 = vcmp.eq.s32.totalorder %v728, %v854
          %vm919 = vcmp.eq.s32.totalorder %v729, %v854
          %vm920 = vcmp.eq.s32.totalorder %v728, %v857
          %vm921 = vcmp.eq.s32.totalorder %v729, %v857
          %v922 = vsel %vm858, 1, 0
          %v923 = vsel %vm859, 1, 0
          %v924 = vsel %vm860, 1, 0
          %v925 = vsel %vm861, 1, 0
          %v926 = vsel %vm862, 1, 0
          %v927 = vsel %vm863, 1, 0
          %v928 = vsel %vm864, 1, 0
          %v929 = vsel %vm865, 1, 0
          %v930 = vsel %vm866, 1, 0
          %v931 = vsel %vm867, 1, 0
          %v932 = vsel %vm868, 1, 0
          %v933 = vsel %vm869, 1, 0
          %v934 = vsel %vm870, 1, 0
          %v935 = vsel %vm871, 1, 0
          %v936 = vsel %vm872, 1, 0
          %v937 = vsel %vm873, 1, 0
          %v938 = vsel %vm874, 1, 0
          %v939 = vsel %vm875, 1, 0
          %v940 = vsel %vm876, 1, 0
          %v941 = vsel %vm877, 1, 0
          %v942 = vsel %vm878, 1, 0
          %v943 = vsel %vm879, 1, 0
          %v944 = vsel %vm880, 1, 0
          %v945 = vsel %vm881, 1, 0
          %v946 = vsel %vm882, 1, 0
          %v947 = vsel %vm883, 1, 0
          %v948 = vsel %vm884, 1, 0
          %v949 = vsel %vm885, 1, 0
          %v950 = vsel %vm886, 1, 0
          %v951 = vsel %vm887, 1, 0
          %v952 = vsel %vm888, 1, 0
          %v953 = vsel %vm889, 1, 0
          %v954 = vsel %vm890, 1, 0
          %v955 = vsel %vm891, 1, 0
          %v956 = vsel %vm892, 1, 0
          %v957 = vsel %vm893, 1, 0
          %v958 = vsel %vm894, 1, 0
          %v959 = vsel %vm895, 1, 0
          %v960 = vsel %vm896, 1, 0
          %v961 = vsel %vm897, 1, 0
          %v962 = vsel %vm898, 1, 0
          %v963 = vsel %vm899, 1, 0
          %v964 = vsel %vm900, 1, 0
          %v965 = vsel %vm901, 1, 0
          %v966 = vsel %vm902, 1, 0
          %v967 = vsel %vm903, 1, 0
          %v968 = vsel %vm904, 1, 0
          %v969 = vsel %vm905, 1, 0
          %v970 = vsel %vm906, 1, 0
          %v971 = vsel %vm907, 1, 0
          %v972 = vsel %vm908, 1, 0
          %v973 = vsel %vm909, 1, 0
          %v974 = vsel %vm910, 1, 0
          %v975 = vsel %vm911, 1, 0
          %v976 = vsel %vm912, 1, 0
          %v977 = vsel %vm913, 1, 0
          %v978 = vsel %vm914, 1, 0
          %v979 = vsel %vm915, 1, 0
          %v980 = vsel %vm916, 1, 0
          %v981 = vsel %vm917, 1, 0
          %v982 = vsel %vm918, 1, 0
          %v983 = vsel %vm919, 1, 0
          %v984 = vsel %vm920, 1, 0
          %v985 = vsel %vm921, 1, 0
          %v986 = vcvt.s32.f32 %v922
          %v987 = vcvt.s32.f32 %v923
          %v988 = vcvt.s32.f32 %v924
          %v989 = vcvt.s32.f32 %v925
          %v990 = vcvt.s32.f32 %v926
          %v991 = vcvt.s32.f32 %v927
          %v992 = vcvt.s32.f32 %v928
          %v993 = vcvt.s32.f32 %v929
          %v994 = vcvt.s32.f32 %v930
          %v995 = vcvt.s32.f32 %v931
          %v996 = vcvt.s32.f32 %v932
          %v997 = vcvt.s32.f32 %v933
          %v998 = vcvt.s32.f32 %v934
          %v999 = vcvt.s32.f32 %v935
          %v1000 = vcvt.s32.f32 %v936
          %v1001 = vcvt.s32.f32 %v937
          %v1002 = vcvt.s32.f32 %v938
          %v1003 = vcvt.s32.f32 %v939
          %v1004 = vcvt.s32.f32 %v940
          %v1005 = vcvt.s32.f32 %v941
          %v1006 = vcvt.s32.f32 %v942
          %v1007 = vcvt.s32.f32 %v943
          %v1008 = vcvt.s32.f32 %v944
          %v1009 = vcvt.s32.f32 %v945
          %v1010 = vcvt.s32.f32 %v946
          %v1011 = vcvt.s32.f32 %v947
          %v1012 = vcvt.s32.f32 %v948
          %v1013 = vcvt.s32.f32 %v949
          %v1014 = vcvt.s32.f32 %v950
          %v1015 = vcvt.s32.f32 %v951
          %v1016 = vcvt.s32.f32 %v952
          %v1017 = vcvt.s32.f32 %v953
          %v1018 = vcvt.s32.f32 %v954
          %v1019 = vcvt.s32.f32 %v955
          %v1020 = vcvt.s32.f32 %v956
          %v1021 = vcvt.s32.f32 %v957
          %v1022 = vcvt.s32.f32 %v958
          %v1023 = vcvt.s32.f32 %v959
          %v1024 = vcvt.s32.f32 %v960
          %v1025 = vcvt.s32.f32 %v961
          %v1026 = vcvt.s32.f32 %v962
          %v1027 = vcvt.s32.f32 %v963
          %v1028 = vcvt.s32.f32 %v964
          %v1029 = vcvt.s32.f32 %v965
          %v1030 = vcvt.s32.f32 %v966
          %v1031 = vcvt.s32.f32 %v967
          %v1032 = vcvt.s32.f32 %v968
          %v1033 = vcvt.s32.f32 %v969
          %v1034 = vcvt.s32.f32 %v970
          %v1035 = vcvt.s32.f32 %v971
          %v1036 = vcvt.s32.f32 %v972
          %v1037 = vcvt.s32.f32 %v973
          %v1038 = vcvt.s32.f32 %v974
          %v1039 = vcvt.s32.f32 %v975
          %v1040 = vcvt.s32.f32 %v976
          %v1041 = vcvt.s32.f32 %v977
          %v1042 = vcvt.s32.f32 %v978
          %v1043 = vcvt.s32.f32 %v979
          %v1044 = vcvt.s32.f32 %v980
          %v1045 = vcvt.s32.f32 %v981
          %v1046 = vcvt.s32.f32 %v982
          %v1047 = vcvt.s32.f32 %v983
          %v1048 = vcvt.s32.f32 %v984
          %v1049 = vcvt.s32.f32 %v985
          %v1050 = vpack.c.bf16 %v988, %v986
          %v1051 = vpack.c.bf16 %v989, %v987
          %v1052 = vpack.c.bf16 %v992, %v990
          %v1053 = vpack.c.bf16 %v993, %v991
          %v1054 = vpack.c.bf16 %v996, %v994
          %v1055 = vpack.c.bf16 %v997, %v995
          %v1056 = vpack.c.bf16 %v1000, %v998
          %v1057 = vpack.c.bf16 %v1001, %v999
          %v1058 = vpack.c.bf16 %v1004, %v1002
          %v1059 = vpack.c.bf16 %v1005, %v1003
          %v1060 = vpack.c.bf16 %v1008, %v1006
          %v1061 = vpack.c.bf16 %v1009, %v1007
          %v1062 = vpack.c.bf16 %v1012, %v1010
          %v1063 = vpack.c.bf16 %v1013, %v1011
          %v1064 = vpack.c.bf16 %v1016, %v1014
          %v1065 = vpack.c.bf16 %v1017, %v1015
          %v1066 = vpack.c.bf16 %v1020, %v1018
          %v1067 = vpack.c.bf16 %v1021, %v1019
          %v1068 = vpack.c.bf16 %v1024, %v1022
          %v1069 = vpack.c.bf16 %v1025, %v1023
          %v1070 = vpack.c.bf16 %v1028, %v1026
          %v1071 = vpack.c.bf16 %v1029, %v1027
          %v1072 = vpack.c.bf16 %v1032, %v1030
          %v1073 = vpack.c.bf16 %v1033, %v1031
          %v1074 = vpack.c.bf16 %v1036, %v1034
          %v1075 = vpack.c.bf16 %v1037, %v1035
          %v1076 = vpack.c.bf16 %v1040, %v1038
          %v1077 = vpack.c.bf16 %v1041, %v1039
          %v1078 = vpack.c.bf16 %v1044, %v1042
          %v1079 = vpack.c.bf16 %v1045, %v1043
          %v1080 = vpack.c.bf16 %v1048, %v1046
          %v1081 = vpack.c.bf16 %v1049, %v1047
          %1082 = vst [vmem:[#allocation2] sm:$0xff] %v1050
          %1083 = vst [vmem:[#allocation2 + $0x8] sm:$0xff] %v1051
          %1084 = vst [vmem:[#allocation2 + $0x10] sm:$0xff] %v1052
          %1085 = vst [vmem:[#allocation2 + $0x18] sm:$0xff] %v1053
          %1086 = vst [vmem:[#allocation2 + $0x20] sm:$0xff] %v1054
          %1087 = vst [vmem:[#allocation2 + $0x28] sm:$0xff] %v1055
          %1088 = vst [vmem:[#allocation2 + $0x30] sm:$0xff] %v1056
          %1089 = vst [vmem:[#allocation2 + $0x38] sm:$0xff] %v1057
          %1090 = vst [vmem:[#allocation2 + $0x40] sm:$0xff] %v1058
          %1091 = vst [vmem:[#allocation2 + $0x48] sm:$0xff] %v1059
          %1092 = vst [vmem:[#allocation2 + $0x50] sm:$0xff] %v1060
          %1093 = vst [vmem:[#allocation2 + $0x58] sm:$0xff] %v1061
          %1094 = vst [vmem:[#allocation2 + $0x60] sm:$0xff] %v1062
          %1095 = vst [vmem:[#allocation2 + $0x68] sm:$0xff] %v1063
          %1096 = vst [vmem:[#allocation2 + $0x70] sm:$0xff] %v1064
          %1097 = vst [vmem:[#allocation2 + $0x78] sm:$0xff] %v1065
          %1098 = vst [vmem:[#allocation2 + $0x80] sm:$0xff] %v1066
          %1099 = vst [vmem:[#allocation2 + $0x88] sm:$0xff] %v1067
          %1100 = vst [vmem:[#allocation2 + $0x90] sm:$0xff] %v1068
          %1101 = vst [vmem:[#allocation2 + $0x98] sm:$0xff] %v1069
          %1102 = vst [vmem:[#allocation2 + $0xa0] sm:$0xff] %v1070
          %1103 = vst [vmem:[#allocation2 + $0xa8] sm:$0xff] %v1071
          %1104 = vst [vmem:[#allocation2 + $0xb0] sm:$0xff] %v1072
          %1105 = vst [vmem:[#allocation2 + $0xb8] sm:$0xff] %v1073
          %1106 = vst [vmem:[#allocation2 + $0xc0] sm:$0xff] %v1074
          %1107 = vst [vmem:[#allocation2 + $0xc8] sm:$0xff] %v1075
          %1108 = vst [vmem:[#allocation2 + $0xd0] sm:$0xff] %v1076
          %1109 = vst [vmem:[#allocation2 + $0xd8] sm:$0xff] %v1077
          %1110 = vst [vmem:[#allocation2 + $0xe0] sm:$0xff] %v1078
          %1111 = vst [vmem:[#allocation2 + $0xe8] sm:$0xff] %v1079
          %1112 = vst [vmem:[#allocation2 + $0xf0] sm:$0xff] %v1080
          %1113 = vst [vmem:[#allocation2 + $0xf8] sm:$0xff] %v1081
          %v1114 = vlaneseq
          %v1115 = vshrl.u32 %v1114, 7
          %v1116 = vadd.s32 %v1115, 8
          %v1117 = vadd.s32 %v1115, 16
          %v1118 = vadd.s32 %v1115, 24
          %v1119 = vadd.s32 %v1115, 32
          %v1120 = vadd.s32 %v1115, 40
          %v1121 = vadd.s32 %v1115, 48
          %v1122 = vadd.s32 %v1115, 56
          %v1123 = vadd.s32 %v1115, 64
          %v1124 = vadd.s32 %v1115, 72
          %v1125 = vadd.s32 %v1115, 80
          %v1126 = vadd.s32 %v1115, 88
          %v1127 = vadd.s32 %v1115, 96
          %v1128 = vadd.s32 %v1115, 104
          %v1129 = vadd.s32 %v1115, 112
          %v1130 = vadd.s32 %v1115, 120
          %v1131 = vadd.s32 %v1115, 128
          %v1132 = vadd.s32 %v1115, 136
          %v1133 = vadd.s32 %v1115, 144
          %v1134 = vadd.s32 %v1115, 152
          %v1135 = vadd.s32 %v1115, 160
          %v1136 = vadd.s32 %v1115, 168
          %v1137 = vadd.s32 %v1115, 176
          %v1138 = vadd.s32 %v1115, 184
          %v1139 = vadd.s32 %v1115, 192
          %v1140 = vadd.s32 %v1115, 200
          %v1141 = vadd.s32 %v1115, 208
          %v1142 = vadd.s32 %v1115, 216
          %v1143 = vadd.s32 %v1115, 224
          %v1144 = vadd.s32 %v1115, 232
          %v1145 = vadd.s32 %v1115, 240
          %v1146 = vadd.s32 %v1115, 248
          %v1147 = vld [vmem:[#allocation10] sm:$0x3]
          %v1148 = vlaneseq
          %v1149 = vshrl.u32 %v1148, 7
          %v1150 = vsub.s32 0, %v1149
          %v1151 = vrot.slane %v1147, %v1150
          %v1152 = vlaneseq
          %v1153 = vshrl.u32 %v1152, 7
          %v1154 = vsub.s32 1, %v1153
          %v1155 = vrot.slane %v1147, %v1154
          %vm1156 = vcmp.eq.s32.totalorder %v1115, %v1151
          %vm1157 = vcmp.eq.s32.totalorder %v1115, %v1155
          %vm1158 = vcmp.eq.s32.totalorder %v1116, %v1151
          %vm1159 = vcmp.eq.s32.totalorder %v1116, %v1155
          %vm1160 = vcmp.eq.s32.totalorder %v1117, %v1151
          %vm1161 = vcmp.eq.s32.totalorder %v1117, %v1155
          %vm1162 = vcmp.eq.s32.totalorder %v1118, %v1151
          %vm1163 = vcmp.eq.s32.totalorder %v1118, %v1155
          %vm1164 = vcmp.eq.s32.totalorder %v1119, %v1151
          %vm1165 = vcmp.eq.s32.totalorder %v1119, %v1155
          %vm1166 = vcmp.eq.s32.totalorder %v1120, %v1151
          %vm1167 = vcmp.eq.s32.totalorder %v1120, %v1155
          %vm1168 = vcmp.eq.s32.totalorder %v1121, %v1151
          %vm1169 = vcmp.eq.s32.totalorder %v1121, %v1155
          %vm1170 = vcmp.eq.s32.totalorder %v1122, %v1151
          %vm1171 = vcmp.eq.s32.totalorder %v1122, %v1155
          %vm1172 = vcmp.eq.s32.totalorder %v1123, %v1151
          %vm1173 = vcmp.eq.s32.totalorder %v1123, %v1155
          %vm1174 = vcmp.eq.s32.totalorder %v1124, %v1151
          %vm1175 = vcmp.eq.s32.totalorder %v1124, %v1155
          %vm1176 = vcmp.eq.s32.totalorder %v1125, %v1151
          %vm1177 = vcmp.eq.s32.totalorder %v1125, %v1155
          %vm1178 = vcmp.eq.s32.totalorder %v1126, %v1151
          %vm1179 = vcmp.eq.s32.totalorder %v1126, %v1155
          %vm1180 = vcmp.eq.s32.totalorder %v1127, %v1151
          %vm1181 = vcmp.eq.s32.totalorder %v1127, %v1155
          %vm1182 = vcmp.eq.s32.totalorder %v1128, %v1151
          %vm1183 = vcmp.eq.s32.totalorder %v1128, %v1155
          %vm1184 = vcmp.eq.s32.totalorder %v1129, %v1151
          %vm1185 = vcmp.eq.s32.totalorder %v1129, %v1155
          %vm1186 = vcmp.eq.s32.totalorder %v1130, %v1151
          %vm1187 = vcmp.eq.s32.totalorder %v1130, %v1155
          %vm1188 = vcmp.eq.s32.totalorder %v1131, %v1151
          %vm1189 = vcmp.eq.s32.totalorder %v1131, %v1155
          %vm1190 = vcmp.eq.s32.totalorder %v1132, %v1151
          %vm1191 = vcmp.eq.s32.totalorder %v1132, %v1155
          %vm1192 = vcmp.eq.s32.totalorder %v1133, %v1151
          %vm1193 = vcmp.eq.s32.totalorder %v1133, %v1155
          %vm1194 = vcmp.eq.s32.totalorder %v1134, %v1151
          %vm1195 = vcmp.eq.s32.totalorder %v1134, %v1155
          %vm1196 = vcmp.eq.s32.totalorder %v1135, %v1151
          %vm1197 = vcmp.eq.s32.totalorder %v1135, %v1155
          %vm1198 = vcmp.eq.s32.totalorder %v1136, %v1151
          %vm1199 = vcmp.eq.s32.totalorder %v1136, %v1155
          %vm1200 = vcmp.eq.s32.totalorder %v1137, %v1151
          %vm1201 = vcmp.eq.s32.totalorder %v1137, %v1155
          %vm1202 = vcmp.eq.s32.totalorder %v1138, %v1151
          %vm1203 = vcmp.eq.s32.totalorder %v1138, %v1155
          %vm1204 = vcmp.eq.s32.totalorder %v1139, %v1151
          %vm1205 = vcmp.eq.s32.totalorder %v1139, %v1155
          %vm1206 = vcmp.eq.s32.totalorder %v1140, %v1151
          %vm1207 = vcmp.eq.s32.totalorder %v1140, %v1155
          %vm1208 = vcmp.eq.s32.totalorder %v1141, %v1151
          %vm1209 = vcmp.eq.s32.totalorder %v1141, %v1155
          %vm1210 = vcmp.eq.s32.totalorder %v1142, %v1151
          %vm1211 = vcmp.eq.s32.totalorder %v1142, %v1155
          %vm1212 = vcmp.eq.s32.totalorder %v1143, %v1151
          %vm1213 = vcmp.eq.s32.totalorder %v1143, %v1155
          %vm1214 = vcmp.eq.s32.totalorder %v1144, %v1151
          %vm1215 = vcmp.eq.s32.totalorder %v1144, %v1155
          %vm1216 = vcmp.eq.s32.totalorder %v1145, %v1151
          %vm1217 = vcmp.eq.s32.totalorder %v1145, %v1155
          %vm1218 = vcmp.eq.s32.totalorder %v1146, %v1151
          %vm1219 = vcmp.eq.s32.totalorder %v1146, %v1155
          %v1220 = vsel %vm1156, 1, 0
          %v1221 = vsel %vm1157, 1, 0
          %v1222 = vsel %vm1158, 1, 0
          %v1223 = vsel %vm1159, 1, 0
          %v1224 = vsel %vm1160, 1, 0
          %v1225 = vsel %vm1161, 1, 0
          %v1226 = vsel %vm1162, 1, 0
          %v1227 = vsel %vm1163, 1, 0
          %v1228 = vsel %vm1164, 1, 0
          %v1229 = vsel %vm1165, 1, 0
          %v1230 = vsel %vm1166, 1, 0
          %v1231 = vsel %vm1167, 1, 0
          %v1232 = vsel %vm1168, 1, 0
          %v1233 = vsel %vm1169, 1, 0
          %v1234 = vsel %vm1170, 1, 0
          %v1235 = vsel %vm1171, 1, 0
          %v1236 = vsel %vm1172, 1, 0
          %v1237 = vsel %vm1173, 1, 0
          %v1238 = vsel %vm1174, 1, 0
          %v1239 = vsel %vm1175, 1, 0
          %v1240 = vsel %vm1176, 1, 0
          %v1241 = vsel %vm1177, 1, 0
          %v1242 = vsel %vm1178, 1, 0
          %v1243 = vsel %vm1179, 1, 0
          %v1244 = vsel %vm1180, 1, 0
          %v1245 = vsel %vm1181, 1, 0
          %v1246 = vsel %vm1182, 1, 0
          %v1247 = vsel %vm1183, 1, 0
          %v1248 = vsel %vm1184, 1, 0
          %v1249 = vsel %vm1185, 1, 0
          %v1250 = vsel %vm1186, 1, 0
          %v1251 = vsel %vm1187, 1, 0
          %v1252 = vsel %vm1188, 1, 0
          %v1253 = vsel %vm1189, 1, 0
          %v1254 = vsel %vm1190, 1, 0
          %v1255 = vsel %vm1191, 1, 0
          %v1256 = vsel %vm1192, 1, 0
          %v1257 = vsel %vm1193, 1, 0
          %v1258 = vsel %vm1194, 1, 0
          %v1259 = vsel %vm1195, 1, 0
          %v1260 = vsel %vm1196, 1, 0
          %v1261 = vsel %vm1197, 1, 0
          %v1262 = vsel %vm1198, 1, 0
          %v1263 = vsel %vm1199, 1, 0
          %v1264 = vsel %vm1200, 1, 0
          %v1265 = vsel %vm1201, 1, 0
          %v1266 = vsel %vm1202, 1, 0
          %v1267 = vsel %vm1203, 1, 0
          %v1268 = vsel %vm1204, 1, 0
          %v1269 = vsel %vm1205, 1, 0
          %v1270 = vsel %vm1206, 1, 0
          %v1271 = vsel %vm1207, 1, 0
          %v1272 = vsel %vm1208, 1, 0
          %v1273 = vsel %vm1209, 1, 0
          %v1274 = vsel %vm1210, 1, 0
          %v1275 = vsel %vm1211, 1, 0
          %v1276 = vsel %vm1212, 1, 0
          %v1277 = vsel %vm1213, 1, 0
          %v1278 = vsel %vm1214, 1, 0
          %v1279 = vsel %vm1215, 1, 0
          %v1280 = vsel %vm1216, 1, 0
          %v1281 = vsel %vm1217, 1, 0
          %v1282 = vsel %vm1218, 1, 0
          %v1283 = vsel %vm1219, 1, 0
          %v1284 = vcvt.s32.f32 %v1220
          %v1285 = vcvt.s32.f32 %v1221
          %v1286 = vcvt.s32.f32 %v1222
          %v1287 = vcvt.s32.f32 %v1223
          %v1288 = vcvt.s32.f32 %v1224
          %v1289 = vcvt.s32.f32 %v1225
          %v1290 = vcvt.s32.f32 %v1226
          %v1291 = vcvt.s32.f32 %v1227
          %v1292 = vcvt.s32.f32 %v1228
          %v1293 = vcvt.s32.f32 %v1229
          %v1294 = vcvt.s32.f32 %v1230
          %v1295 = vcvt.s32.f32 %v1231
          %v1296 = vcvt.s32.f32 %v1232
          %v1297 = vcvt.s32.f32 %v1233
          %v1298 = vcvt.s32.f32 %v1234
          %v1299 = vcvt.s32.f32 %v1235
          %v1300 = vcvt.s32.f32 %v1236
          %v1301 = vcvt.s32.f32 %v1237
          %v1302 = vcvt.s32.f32 %v1238
          %v1303 = vcvt.s32.f32 %v1239
          %v1304 = vcvt.s32.f32 %v1240
          %v1305 = vcvt.s32.f32 %v1241
          %v1306 = vcvt.s32.f32 %v1242
          %v1307 = vcvt.s32.f32 %v1243
          %v1308 = vcvt.s32.f32 %v1244
          %v1309 = vcvt.s32.f32 %v1245
          %v1310 = vcvt.s32.f32 %v1246
          %v1311 = vcvt.s32.f32 %v1247
          %v1312 = vcvt.s32.f32 %v1248
          %v1313 = vcvt.s32.f32 %v1249
          %v1314 = vcvt.s32.f32 %v1250
          %v1315 = vcvt.s32.f32 %v1251
          %v1316 = vcvt.s32.f32 %v1252
          %v1317 = vcvt.s32.f32 %v1253
          %v1318 = vcvt.s32.f32 %v1254
          %v1319 = vcvt.s32.f32 %v1255
          %v1320 = vcvt.s32.f32 %v1256
          %v1321 = vcvt.s32.f32 %v1257
          %v1322 = vcvt.s32.f32 %v1258
          %v1323 = vcvt.s32.f32 %v1259
          %v1324 = vcvt.s32.f32 %v1260
          %v1325 = vcvt.s32.f32 %v1261
          %v1326 = vcvt.s32.f32 %v1262
          %v1327 = vcvt.s32.f32 %v1263
          %v1328 = vcvt.s32.f32 %v1264
          %v1329 = vcvt.s32.f32 %v1265
          %v1330 = vcvt.s32.f32 %v1266
          %v1331 = vcvt.s32.f32 %v1267
          %v1332 = vcvt.s32.f32 %v1268
          %v1333 = vcvt.s32.f32 %v1269
          %v1334 = vcvt.s32.f32 %v1270
          %v1335 = vcvt.s32.f32 %v1271
          %v1336 = vcvt.s32.f32 %v1272
          %v1337 = vcvt.s32.f32 %v1273
          %v1338 = vcvt.s32.f32 %v1274
          %v1339 = vcvt.s32.f32 %v1275
          %v1340 = vcvt.s32.f32 %v1276
          %v1341 = vcvt.s32.f32 %v1277
          %v1342 = vcvt.s32.f32 %v1278
          %v1343 = vcvt.s32.f32 %v1279
          %v1344 = vcvt.s32.f32 %v1280
          %v1345 = vcvt.s32.f32 %v1281
          %v1346 = vcvt.s32.f32 %v1282
          %v1347 = vcvt.s32.f32 %v1283
          %v1348 = vpack.c.bf16 %v1286, %v1284
          %v1349 = vpack.c.bf16 %v1287, %v1285
          %v1350 = vpack.c.bf16 %v1290, %v1288
          %v1351 = vpack.c.bf16 %v1291, %v1289
          %v1352 = vpack.c.bf16 %v1294, %v1292
          %v1353 = vpack.c.bf16 %v1295, %v1293
          %v1354 = vpack.c.bf16 %v1298, %v1296
          %v1355 = vpack.c.bf16 %v1299, %v1297
          %v1356 = vpack.c.bf16 %v1302, %v1300
          %v1357 = vpack.c.bf16 %v1303, %v1301
          %v1358 = vpack.c.bf16 %v1306, %v1304
          %v1359 = vpack.c.bf16 %v1307, %v1305
          %v1360 = vpack.c.bf16 %v1310, %v1308
          %v1361 = vpack.c.bf16 %v1311, %v1309
          %v1362 = vpack.c.bf16 %v1314, %v1312
          %v1363 = vpack.c.bf16 %v1315, %v1313
          %v1364 = vpack.c.bf16 %v1318, %v1316
          %v1365 = vpack.c.bf16 %v1319, %v1317
          %v1366 = vpack.c.bf16 %v1322, %v1320
          %v1367 = vpack.c.bf16 %v1323, %v1321
          %v1368 = vpack.c.bf16 %v1326, %v1324
          %v1369 = vpack.c.bf16 %v1327, %v1325
          %v1370 = vpack.c.bf16 %v1330, %v1328
          %v1371 = vpack.c.bf16 %v1331, %v1329
          %v1372 = vpack.c.bf16 %v1334, %v1332
          %v1373 = vpack.c.bf16 %v1335, %v1333
          %v1374 = vpack.c.bf16 %v1338, %v1336
          %v1375 = vpack.c.bf16 %v1339, %v1337
          %v1376 = vpack.c.bf16 %v1342, %v1340
          %v1377 = vpack.c.bf16 %v1343, %v1341
          %v1378 = vpack.c.bf16 %v1346, %v1344
          %v1379 = vpack.c.bf16 %v1347, %v1345
          %1380 = vst [vmem:[#allocation3] sm:$0xff] %v1348
          %1381 = vst [vmem:[#allocation3 + $0x8] sm:$0xff] %v1349
          %1382 = vst [vmem:[#allocation3 + $0x10] sm:$0xff] %v1350
          %1383 = vst [vmem:[#allocation3 + $0x18] sm:$0xff] %v1351
          %1384 = vst [vmem:[#allocation3 + $0x20] sm:$0xff] %v1352
          %1385 = vst [vmem:[#allocation3 + $0x28] sm:$0xff] %v1353
          %1386 = vst [vmem:[#allocation3 + $0x30] sm:$0xff] %v1354
          %1387 = vst [vmem:[#allocation3 + $0x38] sm:$0xff] %v1355
          %1388 = vst [vmem:[#allocation3 + $0x40] sm:$0xff] %v1356
          %1389 = vst [vmem:[#allocation3 + $0x48] sm:$0xff] %v1357
          %1390 = vst [vmem:[#allocation3 + $0x50] sm:$0xff] %v1358
          %1391 = vst [vmem:[#allocation3 + $0x58] sm:$0xff] %v1359
          %1392 = vst [vmem:[#allocation3 + $0x60] sm:$0xff] %v1360
          %1393 = vst [vmem:[#allocation3 + $0x68] sm:$0xff] %v1361
          %1394 = vst [vmem:[#allocation3 + $0x70] sm:$0xff] %v1362
          %1395 = vst [vmem:[#allocation3 + $0x78] sm:$0xff] %v1363
          %1396 = vst [vmem:[#allocation3 + $0x80] sm:$0xff] %v1364
          %1397 = vst [vmem:[#allocation3 + $0x88] sm:$0xff] %v1365
          %1398 = vst [vmem:[#allocation3 + $0x90] sm:$0xff] %v1366
          %1399 = vst [vmem:[#allocation3 + $0x98] sm:$0xff] %v1367
          %1400 = vst [vmem:[#allocation3 + $0xa0] sm:$0xff] %v1368
          %1401 = vst [vmem:[#allocation3 + $0xa8] sm:$0xff] %v1369
          %1402 = vst [vmem:[#allocation3 + $0xb0] sm:$0xff] %v1370
          %1403 = vst [vmem:[#allocation3 + $0xb8] sm:$0xff] %v1371
          %1404 = vst [vmem:[#allocation3 + $0xc0] sm:$0xff] %v1372
          %1405 = vst [vmem:[#allocation3 + $0xc8] sm:$0xff] %v1373
          %1406 = vst [vmem:[#allocation3 + $0xd0] sm:$0xff] %v1374
          %1407 = vst [vmem:[#allocation3 + $0xd8] sm:$0xff] %v1375
          %1408 = vst [vmem:[#allocation3 + $0xe0] sm:$0xff] %v1376
          %1409 = vst [vmem:[#allocation3 + $0xe8] sm:$0xff] %v1377
          %1410 = vst [vmem:[#allocation3 + $0xf0] sm:$0xff] %v1378
          %1411 = vst [vmem:[#allocation3 + $0xf8] sm:$0xff] %v1379
          %v1412 = vld [vmem:[#allocation4] sm:$0xff]
          %v1413 = vld [vmem:[#allocation4 + $0x8] sm:$0xff]
          %v1414 = vld [vmem:[#allocation4 + $0x10] sm:$0xff]
          %v1415 = vld [vmem:[#allocation4 + $0x18] sm:$0xff]
          %v1416 = vld [vmem:[#allocation4 + $0x20] sm:$0xff]
          %v1417 = vld [vmem:[#allocation4 + $0x28] sm:$0xff]
          %v1418 = vld [vmem:[#allocation4 + $0x30] sm:$0xff]
          %v1419 = vld [vmem:[#allocation4 + $0x38] sm:$0xff]
          %v1420 = vld [vmem:[#allocation4 + $0x40] sm:$0xff]
          %v1421 = vld [vmem:[#allocation4 + $0x48] sm:$0xff]
          %v1422 = vld [vmem:[#allocation4 + $0x50] sm:$0xff]
          %v1423 = vld [vmem:[#allocation4 + $0x58] sm:$0xff]
          %v1424 = vld [vmem:[#allocation4 + $0x60] sm:$0xff]
          %v1425 = vld [vmem:[#allocation4 + $0x68] sm:$0xff]
          %v1426 = vld [vmem:[#allocation4 + $0x70] sm:$0xff]
          %v1427 = vld [vmem:[#allocation4 + $0x78] sm:$0xff]
          %v1428 = vld [vmem:[#allocation4 + $0x80] sm:$0xff]
          %v1429 = vld [vmem:[#allocation4 + $0x88] sm:$0xff]
          %v1430 = vld [vmem:[#allocation4 + $0x90] sm:$0xff]
          %v1431 = vld [vmem:[#allocation4 + $0x98] sm:$0xff]
          %v1432 = vld [vmem:[#allocation4 + $0xa0] sm:$0xff]
          %v1433 = vld [vmem:[#allocation4 + $0xa8] sm:$0xff]
          %v1434 = vld [vmem:[#allocation4 + $0xb0] sm:$0xff]
          %v1435 = vld [vmem:[#allocation4 + $0xb8] sm:$0xff]
          %v1436 = vld [vmem:[#allocation4 + $0xc0] sm:$0xff]
          %v1437 = vld [vmem:[#allocation4 + $0xc8] sm:$0xff]
          %v1438 = vld [vmem:[#allocation4 + $0xd0] sm:$0xff]
          %v1439 = vld [vmem:[#allocation4 + $0xd8] sm:$0xff]
          %v1440 = vld [vmem:[#allocation4 + $0xe0] sm:$0xff]
          %v1441 = vld [vmem:[#allocation4 + $0xe8] sm:$0xff]
          %v1442 = vld [vmem:[#allocation4 + $0xf0] sm:$0xff]
          %v1443 = vld [vmem:[#allocation4 + $0xf8] sm:$0xff]
          %v1444 = vld [vmem:[#allocation12] sm:$0x1]
          %1446 = vset.pattern.permute.xlu0 0
          %1447 = vperm.xlu0 %1446, %v1412
          %v1448 = vpop.permute.xlu0 %1447
          %1451 = vset.pattern.permute.xlu0 0
          %1452 = vperm.xlu0 %1451, %v1413
          %v1453 = vpop.permute.xlu0 %1452
          %1456 = vset.pattern.permute.xlu0 0
          %1457 = vperm.xlu0 %1456, %v1414
          %v1458 = vpop.permute.xlu0 %1457
          %1461 = vset.pattern.permute.xlu0 0
          %1462 = vperm.xlu0 %1461, %v1415
          %v1463 = vpop.permute.xlu0 %1462
          %1466 = vset.pattern.permute.xlu0 0
          %1467 = vperm.xlu0 %1466, %v1416
          %v1468 = vpop.permute.xlu0 %1467
          %1471 = vset.pattern.permute.xlu0 0
          %1472 = vperm.xlu0 %1471, %v1417
          %v1473 = vpop.permute.xlu0 %1472
          %1476 = vset.pattern.permute.xlu0 0
          %1477 = vperm.xlu0 %1476, %v1418
          %v1478 = vpop.permute.xlu0 %1477
          %1481 = vset.pattern.permute.xlu0 0
          %1482 = vperm.xlu0 %1481, %v1419
          %v1483 = vpop.permute.xlu0 %1482
          %1486 = vset.pattern.permute.xlu0 0
          %1487 = vperm.xlu0 %1486, %v1420
          %v1488 = vpop.permute.xlu0 %1487
          %1491 = vset.pattern.permute.xlu0 0
          %1492 = vperm.xlu0 %1491, %v1421
          %v1493 = vpop.permute.xlu0 %1492
          %1496 = vset.pattern.permute.xlu0 0
          %1497 = vperm.xlu0 %1496, %v1422
          %v1498 = vpop.permute.xlu0 %1497
          %1501 = vset.pattern.permute.xlu0 0
          %1502 = vperm.xlu0 %1501, %v1423
          %v1503 = vpop.permute.xlu0 %1502
          %1506 = vset.pattern.permute.xlu0 0
          %1507 = vperm.xlu0 %1506, %v1424
          %v1508 = vpop.permute.xlu0 %1507
          %1511 = vset.pattern.permute.xlu0 0
          %1512 = vperm.xlu0 %1511, %v1425
          %v1513 = vpop.permute.xlu0 %1512
          %1516 = vset.pattern.permute.xlu0 0
          %1517 = vperm.xlu0 %1516, %v1426
          %v1518 = vpop.permute.xlu0 %1517
          %1521 = vset.pattern.permute.xlu0 0
          %1522 = vperm.xlu0 %1521, %v1427
          %v1523 = vpop.permute.xlu0 %1522
          %1526 = vset.pattern.permute.xlu0 0
          %1527 = vperm.xlu0 %1526, %v1428
          %v1528 = vpop.permute.xlu0 %1527
          %1531 = vset.pattern.permute.xlu0 0
          %1532 = vperm.xlu0 %1531, %v1429
          %v1533 = vpop.permute.xlu0 %1532
          %1536 = vset.pattern.permute.xlu0 0
          %1537 = vperm.xlu0 %1536, %v1430
          %v1538 = vpop.permute.xlu0 %1537
          %1541 = vset.pattern.permute.xlu0 0
          %1542 = vperm.xlu0 %1541, %v1431
          %v1543 = vpop.permute.xlu0 %1542
          %1546 = vset.pattern.permute.xlu0 0
          %1547 = vperm.xlu0 %1546, %v1432
          %v1548 = vpop.permute.xlu0 %1547
          %1551 = vset.pattern.permute.xlu0 0
          %1552 = vperm.xlu0 %1551, %v1433
          %v1553 = vpop.permute.xlu0 %1552
          %1556 = vset.pattern.permute.xlu0 0
          %1557 = vperm.xlu0 %1556, %v1434
          %v1558 = vpop.permute.xlu0 %1557
          %1561 = vset.pattern.permute.xlu0 0
          %1562 = vperm.xlu0 %1561, %v1435
          %v1563 = vpop.permute.xlu0 %1562
          %1566 = vset.pattern.permute.xlu0 0
          %1567 = vperm.xlu0 %1566, %v1436
          %v1568 = vpop.permute.xlu0 %1567
          %1571 = vset.pattern.permute.xlu0 0
          %1572 = vperm.xlu0 %1571, %v1437
          %v1573 = vpop.permute.xlu0 %1572
          %1576 = vset.pattern.permute.xlu0 0
          %1577 = vperm.xlu0 %1576, %v1438
          %v1578 = vpop.permute.xlu0 %1577
          %1581 = vset.pattern.permute.xlu0 0
          %1582 = vperm.xlu0 %1581, %v1439
          %v1583 = vpop.permute.xlu0 %1582
          %1586 = vset.pattern.permute.xlu0 0
          %1587 = vperm.xlu0 %1586, %v1440
          %v1588 = vpop.permute.xlu0 %1587
          %1591 = vset.pattern.permute.xlu0 0
          %1592 = vperm.xlu0 %1591, %v1441
          %v1593 = vpop.permute.xlu0 %1592
          %1596 = vset.pattern.permute.xlu0 0
          %1597 = vperm.xlu0 %1596, %v1442
          %v1598 = vpop.permute.xlu0 %1597
          %1601 = vset.pattern.permute.xlu0 0
          %1602 = vperm.xlu0 %1601, %v1443
          %v1603 = vpop.permute.xlu0 %1602
          %v1606 = vlaneseq
          %v1607 = vshrl.u32 %v1606, 7
          %v1608 = vsub.s32 0, %v1607
          %v1609 = vrot.slane %v1444, %v1608
          %v1611 = vmul.f32 %v1448, %v1609
          %v1612 = vmul.f32 %v1453, %v1609
          %v1613 = vmul.f32 %v1458, %v1609
          %v1614 = vmul.f32 %v1463, %v1609
          %v1615 = vmul.f32 %v1468, %v1609
          %v1616 = vmul.f32 %v1473, %v1609
          %v1617 = vmul.f32 %v1478, %v1609
          %v1618 = vmul.f32 %v1483, %v1609
          %v1619 = vmul.f32 %v1488, %v1609
          %v1620 = vmul.f32 %v1493, %v1609
          %v1621 = vmul.f32 %v1498, %v1609
          %v1622 = vmul.f32 %v1503, %v1609
          %v1623 = vmul.f32 %v1508, %v1609
          %v1624 = vmul.f32 %v1513, %v1609
          %v1625 = vmul.f32 %v1518, %v1609
          %v1626 = vmul.f32 %v1523, %v1609
          %v1627 = vmul.f32 %v1528, %v1609
          %v1628 = vmul.f32 %v1533, %v1609
          %v1629 = vmul.f32 %v1538, %v1609
          %v1630 = vmul.f32 %v1543, %v1609
          %v1631 = vmul.f32 %v1548, %v1609
          %v1632 = vmul.f32 %v1553, %v1609
          %v1633 = vmul.f32 %v1558, %v1609
          %v1634 = vmul.f32 %v1563, %v1609
          %v1635 = vmul.f32 %v1568, %v1609
          %v1636 = vmul.f32 %v1573, %v1609
          %v1637 = vmul.f32 %v1578, %v1609
          %v1638 = vmul.f32 %v1583, %v1609
          %v1639 = vmul.f32 %v1588, %v1609
          %v1640 = vmul.f32 %v1593, %v1609
          %v1641 = vmul.f32 %v1598, %v1609
          %v1642 = vmul.f32 %v1603, %v1609
          %v1643 = vld [vmem:[#allocation13] sm:$0x1]
          %v1645 = vlaneseq
          %v1646 = vshrl.u32 %v1645, 7
          %v1647 = vsub.s32 0, %v1646
          %v1648 = vrot.slane %v1643, %v1647
          %v1650 = vadd.f32 %v1611, %v1648
          %v1651 = vadd.f32 %v1612, %v1648
          %v1652 = vadd.f32 %v1613, %v1648
          %v1653 = vadd.f32 %v1614, %v1648
          %v1654 = vadd.f32 %v1615, %v1648
          %v1655 = vadd.f32 %v1616, %v1648
          %v1656 = vadd.f32 %v1617, %v1648
          %v1657 = vadd.f32 %v1618, %v1648
          %v1658 = vadd.f32 %v1619, %v1648
          %v1659 = vadd.f32 %v1620, %v1648
          %v1660 = vadd.f32 %v1621, %v1648
          %v1661 = vadd.f32 %v1622, %v1648
          %v1662 = vadd.f32 %v1623, %v1648
          %v1663 = vadd.f32 %v1624, %v1648
          %v1664 = vadd.f32 %v1625, %v1648
          %v1665 = vadd.f32 %v1626, %v1648
          %v1666 = vadd.f32 %v1627, %v1648
          %v1667 = vadd.f32 %v1628, %v1648
          %v1668 = vadd.f32 %v1629, %v1648
          %v1669 = vadd.f32 %v1630, %v1648
          %v1670 = vadd.f32 %v1631, %v1648
          %v1671 = vadd.f32 %v1632, %v1648
          %v1672 = vadd.f32 %v1633, %v1648
          %v1673 = vadd.f32 %v1634, %v1648
          %v1674 = vadd.f32 %v1635, %v1648
          %v1675 = vadd.f32 %v1636, %v1648
          %v1676 = vadd.f32 %v1637, %v1648
          %v1677 = vadd.f32 %v1638, %v1648
          %v1678 = vadd.f32 %v1639, %v1648
          %v1679 = vadd.f32 %v1640, %v1648
          %v1680 = vadd.f32 %v1641, %v1648
          %v1681 = vadd.f32 %v1642, %v1648
          %1682 = vst [vmem:[#allocation22] sm:$0xff] %v1650
          %1683 = vst [vmem:[#allocation22 + $0x8] sm:$0xff] %v1651
          %1684 = vst [vmem:[#allocation22 + $0x10] sm:$0xff] %v1652
          %1685 = vst [vmem:[#allocation22 + $0x18] sm:$0xff] %v1653
          %1686 = vst [vmem:[#allocation22 + $0x20] sm:$0xff] %v1654
          %1687 = vst [vmem:[#allocation22 + $0x28] sm:$0xff] %v1655
          %1688 = vst [vmem:[#allocation22 + $0x30] sm:$0xff] %v1656
          %1689 = vst [vmem:[#allocation22 + $0x38] sm:$0xff] %v1657
          %1690 = vst [vmem:[#allocation22 + $0x40] sm:$0xff] %v1658
          %1691 = vst [vmem:[#allocation22 + $0x48] sm:$0xff] %v1659
          %1692 = vst [vmem:[#allocation22 + $0x50] sm:$0xff] %v1660
          %1693 = vst [vmem:[#allocation22 + $0x58] sm:$0xff] %v1661
          %1694 = vst [vmem:[#allocation22 + $0x60] sm:$0xff] %v1662
          %1695 = vst [vmem:[#allocation22 + $0x68] sm:$0xff] %v1663
          %1696 = vst [vmem:[#allocation22 + $0x70] sm:$0xff] %v1664
          %1697 = vst [vmem:[#allocation22 + $0x78] sm:$0xff] %v1665
          %1698 = vst [vmem:[#allocation22 + $0x80] sm:$0xff] %v1666
          %1699 = vst [vmem:[#allocation22 + $0x88] sm:$0xff] %v1667
          %1700 = vst [vmem:[#allocation22 + $0x90] sm:$0xff] %v1668
          %1701 = vst [vmem:[#allocation22 + $0x98] sm:$0xff] %v1669
          %1702 = vst [vmem:[#allocation22 + $0xa0] sm:$0xff] %v1670
          %1703 = vst [vmem:[#allocation22 + $0xa8] sm:$0xff] %v1671
          %1704 = vst [vmem:[#allocation22 + $0xb0] sm:$0xff] %v1672
          %1705 = vst [vmem:[#allocation22 + $0xb8] sm:$0xff] %v1673
          %1706 = vst [vmem:[#allocation22 + $0xc0] sm:$0xff] %v1674
          %1707 = vst [vmem:[#allocation22 + $0xc8] sm:$0xff] %v1675
          %1708 = vst [vmem:[#allocation22 + $0xd0] sm:$0xff] %v1676
          %1709 = vst [vmem:[#allocation22 + $0xd8] sm:$0xff] %v1677
          %1710 = vst [vmem:[#allocation22 + $0xe0] sm:$0xff] %v1678
          %1711 = vst [vmem:[#allocation22 + $0xe8] sm:$0xff] %v1679
          %1712 = vst [vmem:[#allocation22 + $0xf0] sm:$0xff] %v1680
          %1713 = vst [vmem:[#allocation22 + $0xf8] sm:$0xff] %v1681
        $region128: #{tpu_custom_call.1} parent=71 // pred_fallthru
          _
        %v1714 = vld [vmem:[#allocation22] sm:$0xff]
        %v1715 = vld [vmem:[#allocation22 + $0x8] sm:$0xff]
        %v1716 = vld [vmem:[#allocation22 + $0x10] sm:$0xff]
        %v1717 = vld [vmem:[#allocation22 + $0x18] sm:$0xff]
        %v1718 = vld [vmem:[#allocation22 + $0x20] sm:$0xff]
        %v1719 = vld [vmem:[#allocation22 + $0x28] sm:$0xff]
        %v1720 = vld [vmem:[#allocation22 + $0x30] sm:$0xff]
        %v1721 = vld [vmem:[#allocation22 + $0x38] sm:$0xff]
        %v1722 = vld [vmem:[#allocation22 + $0x40] sm:$0xff]
        %v1723 = vld [vmem:[#allocation22 + $0x48] sm:$0xff]
        %v1724 = vld [vmem:[#allocation22 + $0x50] sm:$0xff]
        %v1725 = vld [vmem:[#allocation22 + $0x58] sm:$0xff]
        %v1726 = vld [vmem:[#allocation22 + $0x60] sm:$0xff]
        %v1727 = vld [vmem:[#allocation22 + $0x68] sm:$0xff]
        %v1728 = vld [vmem:[#allocation22 + $0x70] sm:$0xff]
        %v1729 = vld [vmem:[#allocation22 + $0x78] sm:$0xff]
        %v1730 = vld [vmem:[#allocation22 + $0x80] sm:$0xff]
        %v1731 = vld [vmem:[#allocation22 + $0x88] sm:$0xff]
        %v1732 = vld [vmem:[#allocation22 + $0x90] sm:$0xff]
        %v1733 = vld [vmem:[#allocation22 + $0x98] sm:$0xff]
        %v1734 = vld [vmem:[#allocation22 + $0xa0] sm:$0xff]
        %v1735 = vld [vmem:[#allocation22 + $0xa8] sm:$0xff]
        %v1736 = vld [vmem:[#allocation22 + $0xb0] sm:$0xff]
        %v1737 = vld [vmem:[#allocation22 + $0xb8] sm:$0xff]
        %v1738 = vld [vmem:[#allocation22 + $0xc0] sm:$0xff]
        %v1739 = vld [vmem:[#allocation22 + $0xc8] sm:$0xff]
        %v1740 = vld [vmem:[#allocation22 + $0xd0] sm:$0xff]
        %v1741 = vld [vmem:[#allocation22 + $0xd8] sm:$0xff]
        %v1742 = vld [vmem:[#allocation22 + $0xe0] sm:$0xff]
        %v1743 = vld [vmem:[#allocation22 + $0xe8] sm:$0xff]
        %v1744 = vld [vmem:[#allocation22 + $0xf0] sm:$0xff]
        %v1745 = vld [vmem:[#allocation22 + $0xf8] sm:$0xff]
        %v1746 = vld [vmem:[#allocation7] sm:$0xff]
        %v1747 = vld [vmem:[#allocation7 + $0x8] sm:$0xff]
        %v1748 = vld [vmem:[#allocation7 + $0x10] sm:$0xff]
        %v1749 = vld [vmem:[#allocation7 + $0x18] sm:$0xff]
        %v1750 = vld [vmem:[#allocation7 + $0x20] sm:$0xff]
        %v1751 = vld [vmem:[#allocation7 + $0x28] sm:$0xff]
        %v1752 = vld [vmem:[#allocation7 + $0x30] sm:$0xff]
        %v1753 = vld [vmem:[#allocation7 + $0x38] sm:$0xff]
        %v1754 = vld [vmem:[#allocation7 + $0x40] sm:$0xff]
        %v1755 = vld [vmem:[#allocation7 + $0x48] sm:$0xff]
        %v1756 = vld [vmem:[#allocation7 + $0x50] sm:$0xff]
        %v1757 = vld [vmem:[#allocation7 + $0x58] sm:$0xff]
        %v1758 = vld [vmem:[#allocation7 + $0x60] sm:$0xff]
        %v1759 = vld [vmem:[#allocation7 + $0x68] sm:$0xff]
        %v1760 = vld [vmem:[#allocation7 + $0x70] sm:$0xff]
        %v1761 = vld [vmem:[#allocation7 + $0x78] sm:$0xff]
        %v1762 = vld [vmem:[#allocation7 + $0x80] sm:$0xff]
        %v1763 = vld [vmem:[#allocation7 + $0x88] sm:$0xff]
        %v1764 = vld [vmem:[#allocation7 + $0x90] sm:$0xff]
        %v1765 = vld [vmem:[#allocation7 + $0x98] sm:$0xff]
        %v1766 = vld [vmem:[#allocation7 + $0xa0] sm:$0xff]
        %v1767 = vld [vmem:[#allocation7 + $0xa8] sm:$0xff]
        %v1768 = vld [vmem:[#allocation7 + $0xb0] sm:$0xff]
        %v1769 = vld [vmem:[#allocation7 + $0xb8] sm:$0xff]
        %v1770 = vld [vmem:[#allocation7 + $0xc0] sm:$0xff]
        %v1771 = vld [vmem:[#allocation7 + $0xc8] sm:$0xff]
        %v1772 = vld [vmem:[#allocation7 + $0xd0] sm:$0xff]
        %v1773 = vld [vmem:[#allocation7 + $0xd8] sm:$0xff]
        %v1774 = vld [vmem:[#allocation7 + $0xe0] sm:$0xff]
        %v1775 = vld [vmem:[#allocation7 + $0xe8] sm:$0xff]
        %v1776 = vld [vmem:[#allocation7 + $0xf0] sm:$0xff]
        %v1777 = vld [vmem:[#allocation7 + $0xf8] sm:$0xff]
        %v1778 = vld [vmem:[%s615] sm:$0x1]
        %1780 = vset.pattern.permute.xlu0 0
        %1781 = vperm.xlu0 %1780, %v1746
        %v1782 = vpop.permute.xlu0 %1781
        %1785 = vset.pattern.permute.xlu0 0
        %1786 = vperm.xlu0 %1785, %v1747
        %v1787 = vpop.permute.xlu0 %1786
        %1790 = vset.pattern.permute.xlu0 0
        %1791 = vperm.xlu0 %1790, %v1748
        %v1792 = vpop.permute.xlu0 %1791
        %1795 = vset.pattern.permute.xlu0 0
        %1796 = vperm.xlu0 %1795, %v1749
        %v1797 = vpop.permute.xlu0 %1796
        %1800 = vset.pattern.permute.xlu0 0
        %1801 = vperm.xlu0 %1800, %v1750
        %v1802 = vpop.permute.xlu0 %1801
        %1805 = vset.pattern.permute.xlu0 0
        %1806 = vperm.xlu0 %1805, %v1751
        %v1807 = vpop.permute.xlu0 %1806
        %1810 = vset.pattern.permute.xlu0 0
        %1811 = vperm.xlu0 %1810, %v1752
        %v1812 = vpop.permute.xlu0 %1811
        %1815 = vset.pattern.permute.xlu0 0
        %1816 = vperm.xlu0 %1815, %v1753
        %v1817 = vpop.permute.xlu0 %1816
        %1820 = vset.pattern.permute.xlu0 0
        %1821 = vperm.xlu0 %1820, %v1754
        %v1822 = vpop.permute.xlu0 %1821
        %1825 = vset.pattern.permute.xlu0 0
        %1826 = vperm.xlu0 %1825, %v1755
        %v1827 = vpop.permute.xlu0 %1826
        %1830 = vset.pattern.permute.xlu0 0
        %1831 = vperm.xlu0 %1830, %v1756
        %v1832 = vpop.permute.xlu0 %1831
        %1835 = vset.pattern.permute.xlu0 0
        %1836 = vperm.xlu0 %1835, %v1757
        %v1837 = vpop.permute.xlu0 %1836
        %1840 = vset.pattern.permute.xlu0 0
        %1841 = vperm.xlu0 %1840, %v1758
        %v1842 = vpop.permute.xlu0 %1841
        %1845 = vset.pattern.permute.xlu0 0
        %1846 = vperm.xlu0 %1845, %v1759
        %v1847 = vpop.permute.xlu0 %1846
        %1850 = vset.pattern.permute.xlu0 0
        %1851 = vperm.xlu0 %1850, %v1760
        %v1852 = vpop.permute.xlu0 %1851
        %1855 = vset.pattern.permute.xlu0 0
        %1856 = vperm.xlu0 %1855, %v1761
        %v1857 = vpop.permute.xlu0 %1856
        %1860 = vset.pattern.permute.xlu0 0
        %1861 = vperm.xlu0 %1860, %v1762
        %v1862 = vpop.permute.xlu0 %1861
        %1865 = vset.pattern.permute.xlu0 0
        %1866 = vperm.xlu0 %1865, %v1763
        %v1867 = vpop.permute.xlu0 %1866
        %1870 = vset.pattern.permute.xlu0 0
        %1871 = vperm.xlu0 %1870, %v1764
        %v1872 = vpop.permute.xlu0 %1871
        %1875 = vset.pattern.permute.xlu0 0
        %1876 = vperm.xlu0 %1875, %v1765
        %v1877 = vpop.permute.xlu0 %1876
        %1880 = vset.pattern.permute.xlu0 0
        %1881 = vperm.xlu0 %1880, %v1766
        %v1882 = vpop.permute.xlu0 %1881
        %1885 = vset.pattern.permute.xlu0 0
        %1886 = vperm.xlu0 %1885, %v1767
        %v1887 = vpop.permute.xlu0 %1886
        %1890 = vset.pattern.permute.xlu0 0
        %1891 = vperm.xlu0 %1890, %v1768
        %v1892 = vpop.permute.xlu0 %1891
        %1895 = vset.pattern.permute.xlu0 0
        %1896 = vperm.xlu0 %1895, %v1769
        %v1897 = vpop.permute.xlu0 %1896
        %1900 = vset.pattern.permute.xlu0 0
        %1901 = vperm.xlu0 %1900, %v1770
        %v1902 = vpop.permute.xlu0 %1901
        %1905 = vset.pattern.permute.xlu0 0
        %1906 = vperm.xlu0 %1905, %v1771
        %v1907 = vpop.permute.xlu0 %1906
        %1910 = vset.pattern.permute.xlu0 0
        %1911 = vperm.xlu0 %1910, %v1772
        %v1912 = vpop.permute.xlu0 %1911
        %1915 = vset.pattern.permute.xlu0 0
        %1916 = vperm.xlu0 %1915, %v1773
        %v1917 = vpop.permute.xlu0 %1916
        %1920 = vset.pattern.permute.xlu0 0
        %1921 = vperm.xlu0 %1920, %v1774
        %v1922 = vpop.permute.xlu0 %1921
        %1925 = vset.pattern.permute.xlu0 0
        %1926 = vperm.xlu0 %1925, %v1775
        %v1927 = vpop.permute.xlu0 %1926
        %1930 = vset.pattern.permute.xlu0 0
        %1931 = vperm.xlu0 %1930, %v1776
        %v1932 = vpop.permute.xlu0 %1931
        %1935 = vset.pattern.permute.xlu0 0
        %1936 = vperm.xlu0 %1935, %v1777
        %v1937 = vpop.permute.xlu0 %1936
        %v1940 = vlaneseq
        %v1941 = vshrl.u32 %v1940, 7
        %v1942 = vsub.s32 0, %v1941
        %v1943 = vrot.slane %v1778, %v1942
        %v1945 = vmul.f32 %v1782, %v1943
        %v1946 = vmul.f32 %v1787, %v1943
        %v1947 = vmul.f32 %v1792, %v1943
        %v1948 = vmul.f32 %v1797, %v1943
        %v1949 = vmul.f32 %v1802, %v1943
        %v1950 = vmul.f32 %v1807, %v1943
        %v1951 = vmul.f32 %v1812, %v1943
        %v1952 = vmul.f32 %v1817, %v1943
        %v1953 = vmul.f32 %v1822, %v1943
        %v1954 = vmul.f32 %v1827, %v1943
        %v1955 = vmul.f32 %v1832, %v1943
        %v1956 = vmul.f32 %v1837, %v1943
        %v1957 = vmul.f32 %v1842, %v1943
        %v1958 = vmul.f32 %v1847, %v1943
        %v1959 = vmul.f32 %v1852, %v1943
        %v1960 = vmul.f32 %v1857, %v1943
        %v1961 = vmul.f32 %v1862, %v1943
        %v1962 = vmul.f32 %v1867, %v1943
        %v1963 = vmul.f32 %v1872, %v1943
        %v1964 = vmul.f32 %v1877, %v1943
        %v1965 = vmul.f32 %v1882, %v1943
        %v1966 = vmul.f32 %v1887, %v1943
        %v1967 = vmul.f32 %v1892, %v1943
        %v1968 = vmul.f32 %v1897, %v1943
        %v1969 = vmul.f32 %v1902, %v1943
        %v1970 = vmul.f32 %v1907, %v1943
        %v1971 = vmul.f32 %v1912, %v1943
        %v1972 = vmul.f32 %v1917, %v1943
        %v1973 = vmul.f32 %v1922, %v1943
        %v1974 = vmul.f32 %v1927, %v1943
        %v1975 = vmul.f32 %v1932, %v1943
        %v1976 = vmul.f32 %v1937, %v1943
        %v1977 = vld [vmem:[%s623] sm:$0x1]
        %v1979 = vlaneseq
        %v1980 = vshrl.u32 %v1979, 7
        %v1981 = vsub.s32 0, %v1980
        %v1982 = vrot.slane %v1977, %v1981
        %v1984 = vadd.f32 %v1945, %v1982
        %v1985 = vadd.f32 %v1946, %v1982
        %v1986 = vadd.f32 %v1947, %v1982
        %v1987 = vadd.f32 %v1948, %v1982
        %v1988 = vadd.f32 %v1949, %v1982
        %v1989 = vadd.f32 %v1950, %v1982
        %v1990 = vadd.f32 %v1951, %v1982
        %v1991 = vadd.f32 %v1952, %v1982
        %v1992 = vadd.f32 %v1953, %v1982
        %v1993 = vadd.f32 %v1954, %v1982
        %v1994 = vadd.f32 %v1955, %v1982
        %v1995 = vadd.f32 %v1956, %v1982
        %v1996 = vadd.f32 %v1957, %v1982
        %v1997 = vadd.f32 %v1958, %v1982
        %v1998 = vadd.f32 %v1959, %v1982
        %v1999 = vadd.f32 %v1960, %v1982
        %v2000 = vadd.f32 %v1961, %v1982
        %v2001 = vadd.f32 %v1962, %v1982
        %v2002 = vadd.f32 %v1963, %v1982
        %v2003 = vadd.f32 %v1964, %v1982
        %v2004 = vadd.f32 %v1965, %v1982
        %v2005 = vadd.f32 %v1966, %v1982
        %v2006 = vadd.f32 %v1967, %v1982
        %v2007 = vadd.f32 %v1968, %v1982
        %v2008 = vadd.f32 %v1969, %v1982
        %v2009 = vadd.f32 %v1970, %v1982
        %v2010 = vadd.f32 %v1971, %v1982
        %v2011 = vadd.f32 %v1972, %v1982
        %v2012 = vadd.f32 %v1973, %v1982
        %v2013 = vadd.f32 %v1974, %v1982
        %v2014 = vadd.f32 %v1975, %v1982
        %v2015 = vadd.f32 %v1976, %v1982
        %v2016 = vld [vmem:[#allocation2] sm:$0xff]
        %v2017 = vld [vmem:[#allocation2 + $0x8] sm:$0xff]
        %v2018 = vld [vmem:[#allocation2 + $0x10] sm:$0xff]
        %v2019 = vld [vmem:[#allocation2 + $0x18] sm:$0xff]
        %v2020 = vld [vmem:[#allocation2 + $0x20] sm:$0xff]
        %v2021 = vld [vmem:[#allocation2 + $0x28] sm:$0xff]
        %v2022 = vld [vmem:[#allocation2 + $0x30] sm:$0xff]
        %v2023 = vld [vmem:[#allocation2 + $0x38] sm:$0xff]
        %v2024 = vld [vmem:[#allocation2 + $0x40] sm:$0xff]
        %v2025 = vld [vmem:[#allocation2 + $0x48] sm:$0xff]
        %v2026 = vld [vmem:[#allocation2 + $0x50] sm:$0xff]
        %v2027 = vld [vmem:[#allocation2 + $0x58] sm:$0xff]
        %v2028 = vld [vmem:[#allocation2 + $0x60] sm:$0xff]
        %v2029 = vld [vmem:[#allocation2 + $0x68] sm:$0xff]
        %v2030 = vld [vmem:[#allocation2 + $0x70] sm:$0xff]
        %v2031 = vld [vmem:[#allocation2 + $0x78] sm:$0xff]
        %v2032 = vld [vmem:[#allocation2 + $0x80] sm:$0xff]
        %v2033 = vld [vmem:[#allocation2 + $0x88] sm:$0xff]
        %v2034 = vld [vmem:[#allocation2 + $0x90] sm:$0xff]
        %v2035 = vld [vmem:[#allocation2 + $0x98] sm:$0xff]
        %v2036 = vld [vmem:[#allocation2 + $0xa0] sm:$0xff]
        %v2037 = vld [vmem:[#allocation2 + $0xa8] sm:$0xff]
        %v2038 = vld [vmem:[#allocation2 + $0xb0] sm:$0xff]
        %v2039 = vld [vmem:[#allocation2 + $0xb8] sm:$0xff]
        %v2040 = vld [vmem:[#allocation2 + $0xc0] sm:$0xff]
        %v2041 = vld [vmem:[#allocation2 + $0xc8] sm:$0xff]
        %v2042 = vld [vmem:[#allocation2 + $0xd0] sm:$0xff]
        %v2043 = vld [vmem:[#allocation2 + $0xd8] sm:$0xff]
        %v2044 = vld [vmem:[#allocation2 + $0xe0] sm:$0xff]
        %v2045 = vld [vmem:[#allocation2 + $0xe8] sm:$0xff]
        %v2046 = vld [vmem:[#allocation2 + $0xf0] sm:$0xff]
        %v2047 = vld [vmem:[#allocation2 + $0xf8] sm:$0xff]
        %v2048 = vpack.c.bf16 %v1715, %v1714
        %v2049 = vpack.c.bf16 %v1717, %v1716
        %v2050 = vpack.c.bf16 %v1719, %v1718
        %v2051 = vpack.c.bf16 %v1721, %v1720
        %v2052 = vpack.c.bf16 %v1723, %v1722
        %v2053 = vpack.c.bf16 %v1725, %v1724
        %v2054 = vpack.c.bf16 %v1727, %v1726
        %v2055 = vpack.c.bf16 %v1729, %v1728
        %v2056 = vpack.c.bf16 %v1731, %v1730
        %v2057 = vpack.c.bf16 %v1733, %v1732
        %v2058 = vpack.c.bf16 %v1735, %v1734
        %v2059 = vpack.c.bf16 %v1737, %v1736
        %v2060 = vpack.c.bf16 %v1739, %v1738
        %v2061 = vpack.c.bf16 %v1741, %v1740
        %v2062 = vpack.c.bf16 %v1743, %v1742
        %v2063 = vpack.c.bf16 %v1745, %v1744
        %2064 = vmatprep.subr.bf16.mxu0 0
        %2065 = vmatpush1.bf16.msra.mxu0 %v2048
        %2066 = vmatprep.subr.bf16.mxu0 0
        %2067 = vmatpush1.bf16.msra.mxu0 %v2049
        %2068 = vmatprep.subr.bf16.mxu0 0
        %2069 = vmatpush1.bf16.msra.mxu0 %v2050
        %2070 = vmatprep.subr.bf16.mxu0 0
        %2071 = vmatpush1.bf16.msra.mxu0 %v2051
        %2072 = vmatprep.subr.bf16.mxu0 0
        %2073 = vmatpush1.bf16.msra.mxu0 %v2052
        %2074 = vmatprep.subr.bf16.mxu0 0
        %2075 = vmatpush1.bf16.msra.mxu0 %v2053
        %2076 = vmatprep.subr.bf16.mxu0 0
        %2077 = vmatpush1.bf16.msra.mxu0 %v2054
        %2078 = vmatprep.subr.bf16.mxu0 0
        %2079 = vmatpush1.bf16.msra.mxu0 %v2055
        %2080 = vmatprep.subr.bf16.mxu0 0
        %2081 = vmatpush1.bf16.msra.mxu0 %v2056
        %2082 = vmatprep.subr.bf16.mxu0 0
        %2083 = vmatpush1.bf16.msra.mxu0 %v2057
        %2084 = vmatprep.subr.bf16.mxu0 0
        %2085 = vmatpush1.bf16.msra.mxu0 %v2058
        %2086 = vmatprep.subr.bf16.mxu0 0
        %2087 = vmatpush1.bf16.msra.mxu0 %v2059
        %2088 = vmatprep.subr.bf16.mxu0 0
        %2089 = vmatpush1.bf16.msra.mxu0 %v2060
        %2090 = vmatprep.subr.bf16.mxu0 0
        %2091 = vmatpush1.bf16.msra.mxu0 %v2061
        %2092 = vmatprep.subr.bf16.mxu0 0
        %2093 = vmatpush1.bf16.msra.mxu0 %v2062
        %2094 = vmatprep.subr.bf16.mxu0 0
        %2095 = vmatpush1.bf16.msra.mxu0 %v2063
        %2096 = vmatprep.mubr.bf16.mxu0 %v2017
        %2097 = vmatmul.mubr.bf16.gmra.mrb[0].mxu0 %v2016
        %v2098 = vpop.f32.mrb[0].mxu0
        %v2099 = vadd.f32 %v1984, %v2098
        %v2100 = vpop.f32.mrb[0].mxu0
        %v2101 = vpop.f32.mrb[0].mxu0
        %v2102 = vadd.f32 %v1985, %v2101
        %v2103 = vpop.f32.mrb[0].mxu0
        %2104 = vmatprep.mubr.bf16.mxu0 %v2019
        %2105 = vmatmul.mubr.bf16.gmra.mrb[0].mxu0 %v2018
        %v2106 = vpop.f32.mrb[0].mxu0
        %v2107 = vadd.f32 %v1986, %v2106
        %v2108 = vpop.f32.mrb[0].mxu0
        %v2109 = vpop.f32.mrb[0].mxu0
        %v2110 = vadd.f32 %v1987, %v2109
        %v2111 = vpop.f32.mrb[0].mxu0
        %2112 = vmatprep.mubr.bf16.mxu0 %v2021
        %2113 = vmatmul.mubr.bf16.gmra.mrb[0].mxu0 %v2020
        %v2114 = vpop.f32.mrb[0].mxu0
        %v2115 = vadd.f32 %v1988, %v2114
        %v2116 = vpop.f32.mrb[0].mxu0
        %v2117 = vpop.f32.mrb[0].mxu0
        %v2118 = vadd.f32 %v1989, %v2117
        %v2119 = vpop.f32.mrb[0].mxu0
        %2120 = vmatprep.mubr.bf16.mxu0 %v2023
        %2121 = vmatmul.mubr.bf16.gmra.mrb[0].mxu0 %v2022
        %v2122 = vpop.f32.mrb[0].mxu0
        %v2123 = vadd.f32 %v1990, %v2122
        %v2124 = vpop.f32.mrb[0].mxu0
        %v2125 = vpop.f32.mrb[0].mxu0
        %v2126 = vadd.f32 %v1991, %v2125
        %v2127 = vpop.f32.mrb[0].mxu0
        %2128 = vmatprep.mubr.bf16.mxu0 %v2025
        %2129 = vmatmul.mubr.bf16.gmra.mrb[0].mxu0 %v2024
        %v2130 = vpop.f32.mrb[0].mxu0
        %v2131 = vadd.f32 %v1992, %v2130
        %v2132 = vpop.f32.mrb[0].mxu0
        %v2133 = vpop.f32.mrb[0].mxu0
        %v2134 = vadd.f32 %v1993, %v2133
        %v2135 = vpop.f32.mrb[0].mxu0
        %2136 = vmatprep.mubr.bf16.mxu0 %v2027
        %2137 = vmatmul.mubr.bf16.gmra.mrb[0].mxu0 %v2026
        %v2138 = vpop.f32.mrb[0].mxu0
        %v2139 = vadd.f32 %v1994, %v2138
        %v2140 = vpop.f32.mrb[0].mxu0
        %v2141 = vpop.f32.mrb[0].mxu0
        %v2142 = vadd.f32 %v1995, %v2141
        %v2143 = vpop.f32.mrb[0].mxu0
        %2144 = vmatprep.mubr.bf16.mxu0 %v2029
        %2145 = vmatmul.mubr.bf16.gmra.mrb[0].mxu0 %v2028
        %v2146 = vpop.f32.mrb[0].mxu0
        %v2147 = vadd.f32 %v1996, %v2146
        %v2148 = vpop.f32.mrb[0].mxu0
        %v2149 = vpop.f32.mrb[0].mxu0
        %v2150 = vadd.f32 %v1997, %v2149
        %v2151 = vpop.f32.mrb[0].mxu0
        %2152 = vmatprep.mubr.bf16.mxu0 %v2031
        %2153 = vmatmul.mubr.bf16.gmra.mrb[0].mxu0 %v2030
        %v2154 = vpop.f32.mrb[0].mxu0
        %v2155 = vadd.f32 %v1998, %v2154
        %v2156 = vpop.f32.mrb[0].mxu0
        %v2157 = vpop.f32.mrb[0].mxu0
        %v2158 = vadd.f32 %v1999, %v2157
        %v2159 = vpop.f32.mrb[0].mxu0
        %2160 = vmatprep.mubr.bf16.mxu0 %v2033
        %2161 = vmatmul.mubr.bf16.gmra.mrb[0].mxu0 %v2032
        %v2162 = vpop.f32.mrb[0].mxu0
        %v2163 = vadd.f32 %v2000, %v2162
        %v2164 = vpop.f32.mrb[0].mxu0
        %v2165 = vpop.f32.mrb[0].mxu0
        %v2166 = vadd.f32 %v2001, %v2165
        %v2167 = vpop.f32.mrb[0].mxu0
        %2168 = vmatprep.mubr.bf16.mxu0 %v2035
        %2169 = vmatmul.mubr.bf16.gmra.mrb[0].mxu0 %v2034
        %v2170 = vpop.f32.mrb[0].mxu0
        %v2171 = vadd.f32 %v2002, %v2170
        %v2172 = vpop.f32.mrb[0].mxu0
        %v2173 = vpop.f32.mrb[0].mxu0
        %v2174 = vadd.f32 %v2003, %v2173
        %v2175 = vpop.f32.mrb[0].mxu0
        %2176 = vmatprep.mubr.bf16.mxu0 %v2037
        %2177 = vmatmul.mubr.bf16.gmra.mrb[0].mxu0 %v2036
        %v2178 = vpop.f32.mrb[0].mxu0
        %v2179 = vadd.f32 %v2004, %v2178
        %v2180 = vpop.f32.mrb[0].mxu0
        %v2181 = vpop.f32.mrb[0].mxu0
        %v2182 = vadd.f32 %v2005, %v2181
        %v2183 = vpop.f32.mrb[0].mxu0
        %2184 = vmatprep.mubr.bf16.mxu0 %v2039
        %2185 = vmatmul.mubr.bf16.gmra.mrb[0].mxu0 %v2038
        %v2186 = vpop.f32.mrb[0].mxu0
        %v2187 = vadd.f32 %v2006, %v2186
        %v2188 = vpop.f32.mrb[0].mxu0
        %v2189 = vpop.f32.mrb[0].mxu0
        %v2190 = vadd.f32 %v2007, %v2189
        %v2191 = vpop.f32.mrb[0].mxu0
        %2192 = vmatprep.mubr.bf16.mxu0 %v2041
        %2193 = vmatmul.mubr.bf16.gmra.mrb[0].mxu0 %v2040
        %v2194 = vpop.f32.mrb[0].mxu0
        %v2195 = vadd.f32 %v2008, %v2194
        %v2196 = vpop.f32.mrb[0].mxu0
        %v2197 = vpop.f32.mrb[0].mxu0
        %v2198 = vadd.f32 %v2009, %v2197
        %v2199 = vpop.f32.mrb[0].mxu0
        %2200 = vmatprep.mubr.bf16.mxu0 %v2043
        %2201 = vmatmul.mubr.bf16.gmra.mrb[0].mxu0 %v2042
        %v2202 = vpop.f32.mrb[0].mxu0
        %v2203 = vadd.f32 %v2010, %v2202
        %v2204 = vpop.f32.mrb[0].mxu0
        %v2205 = vpop.f32.mrb[0].mxu0
        %v2206 = vadd.f32 %v2011, %v2205
        %v2207 = vpop.f32.mrb[0].mxu0
        %2208 = vmatprep.mubr.bf16.mxu0 %v2045
        %2209 = vmatmul.mubr.bf16.gmra.mrb[0].mxu0 %v2044
        %v2210 = vpop.f32.mrb[0].mxu0
        %v2211 = vadd.f32 %v2012, %v2210
        %v2212 = vpop.f32.mrb[0].mxu0
        %v2213 = vpop.f32.mrb[0].mxu0
        %v2214 = vadd.f32 %v2013, %v2213
        %v2215 = vpop.f32.mrb[0].mxu0
        %2216 = vmatprep.mubr.bf16.mxu0 %v2047
        %2217 = vmatmul.mubr.bf16.gmra.mrb[0].mxu0 %v2046
        %v2218 = vpop.f32.mrb[0].mxu0
        %v2219 = vadd.f32 %v2014, %v2218
        %v2220 = vpop.f32.mrb[0].mxu0
        %v2221 = vpop.f32.mrb[0].mxu0
        %v2222 = vadd.f32 %v2015, %v2221
        %v2223 = vpop.f32.mrb[0].mxu0
        %2224 = vdwg.mxu0
        %v2225 = vmax.f32 %v2099, 0.0
        %v2226 = vmax.f32 %v2102, 0.0
        %v2227 = vmax.f32 %v2107, 0.0
        %v2228 = vmax.f32 %v2110, 0.0
        %v2229 = vmax.f32 %v2115, 0.0
        %v2230 = vmax.f32 %v2118, 0.0
        %v2231 = vmax.f32 %v2123, 0.0
        %v2232 = vmax.f32 %v2126, 0.0
        %v2233 = vmax.f32 %v2131, 0.0
        %v2234 = vmax.f32 %v2134, 0.0
        %v2235 = vmax.f32 %v2139, 0.0
        %v2236 = vmax.f32 %v2142, 0.0
        %v2237 = vmax.f32 %v2147, 0.0
        %v2238 = vmax.f32 %v2150, 0.0
        %v2239 = vmax.f32 %v2155, 0.0
        %v2240 = vmax.f32 %v2158, 0.0
        %v2241 = vmax.f32 %v2163, 0.0
        %v2242 = vmax.f32 %v2166, 0.0
        %v2243 = vmax.f32 %v2171, 0.0
        %v2244 = vmax.f32 %v2174, 0.0
        %v2245 = vmax.f32 %v2179, 0.0
        %v2246 = vmax.f32 %v2182, 0.0
        %v2247 = vmax.f32 %v2187, 0.0
        %v2248 = vmax.f32 %v2190, 0.0
        %v2249 = vmax.f32 %v2195, 0.0
        %v2250 = vmax.f32 %v2198, 0.0
        %v2251 = vmax.f32 %v2203, 0.0
        %v2252 = vmax.f32 %v2206, 0.0
        %v2253 = vmax.f32 %v2211, 0.0
        %v2254 = vmax.f32 %v2214, 0.0
        %v2255 = vmax.f32 %v2219, 0.0
        %v2256 = vmax.f32 %v2222, 0.0
        %v2257 = vld [vmem:[#allocation3] sm:$0xff]
        %v2258 = vld [vmem:[#allocation3 + $0x8] sm:$0xff]
        %v2259 = vld [vmem:[#allocation3 + $0x10] sm:$0xff]
        %v2260 = vld [vmem:[#allocation3 + $0x18] sm:$0xff]
        %v2261 = vld [vmem:[#allocation3 + $0x20] sm:$0xff]
        %v2262 = vld [vmem:[#allocation3 + $0x28] sm:$0xff]
        %v2263 = vld [vmem:[#allocation3 + $0x30] sm:$0xff]
        %v2264 = vld [vmem:[#allocation3 + $0x38] sm:$0xff]
        %v2265 = vld [vmem:[#allocation3 + $0x40] sm:$0xff]
        %v2266 = vld [vmem:[#allocation3 + $0x48] sm:$0xff]
        %v2267 = vld [vmem:[#allocation3 + $0x50] sm:$0xff]
        %v2268 = vld [vmem:[#allocation3 + $0x58] sm:$0xff]
        %v2269 = vld [vmem:[#allocation3 + $0x60] sm:$0xff]
        %v2270 = vld [vmem:[#allocation3 + $0x68] sm:$0xff]
        %v2271 = vld [vmem:[#allocation3 + $0x70] sm:$0xff]
        %v2272 = vld [vmem:[#allocation3 + $0x78] sm:$0xff]
        %v2273 = vld [vmem:[#allocation3 + $0x80] sm:$0xff]
        %v2274 = vld [vmem:[#allocation3 + $0x88] sm:$0xff]
        %v2275 = vld [vmem:[#allocation3 + $0x90] sm:$0xff]
        %v2276 = vld [vmem:[#allocation3 + $0x98] sm:$0xff]
        %v2277 = vld [vmem:[#allocation3 + $0xa0] sm:$0xff]
        %v2278 = vld [vmem:[#allocation3 + $0xa8] sm:$0xff]
        %v2279 = vld [vmem:[#allocation3 + $0xb0] sm:$0xff]
        %v2280 = vld [vmem:[#allocation3 + $0xb8] sm:$0xff]
        %v2281 = vld [vmem:[#allocation3 + $0xc0] sm:$0xff]
        %v2282 = vld [vmem:[#allocation3 + $0xc8] sm:$0xff]
        %v2283 = vld [vmem:[#allocation3 + $0xd0] sm:$0xff]
        %v2284 = vld [vmem:[#allocation3 + $0xd8] sm:$0xff]
        %v2285 = vld [vmem:[#allocation3 + $0xe0] sm:$0xff]
        %v2286 = vld [vmem:[#allocation3 + $0xe8] sm:$0xff]
        %v2287 = vld [vmem:[#allocation3 + $0xf0] sm:$0xff]
        %v2288 = vld [vmem:[#allocation3 + $0xf8] sm:$0xff]
        %v2289 = vpack.c.bf16 %v2226, %v2225
        %v2290 = vpack.c.bf16 %v2228, %v2227
        %v2291 = vpack.c.bf16 %v2230, %v2229
        %v2292 = vpack.c.bf16 %v2232, %v2231
        %v2293 = vpack.c.bf16 %v2234, %v2233
        %v2294 = vpack.c.bf16 %v2236, %v2235
        %v2295 = vpack.c.bf16 %v2238, %v2237
        %v2296 = vpack.c.bf16 %v2240, %v2239
        %v2297 = vpack.c.bf16 %v2242, %v2241
        %v2298 = vpack.c.bf16 %v2244, %v2243
        %v2299 = vpack.c.bf16 %v2246, %v2245
        %v2300 = vpack.c.bf16 %v2248, %v2247
        %v2301 = vpack.c.bf16 %v2250, %v2249
        %v2302 = vpack.c.bf16 %v2252, %v2251
        %v2303 = vpack.c.bf16 %v2254, %v2253
        %v2304 = vpack.c.bf16 %v2256, %v2255
        %2305 = vmatprep.subr.bf16.mxu0 0
        %2306 = vmatpush1.bf16.msra.mxu0 %v2289
        %2307 = vmatprep.subr.bf16.mxu0 0
        %2308 = vmatpush1.bf16.msra.mxu0 %v2290
        %2309 = vmatprep.subr.bf16.mxu0 0
        %2310 = vmatpush1.bf16.msra.mxu0 %v2291
        %2311 = vmatprep.subr.bf16.mxu0 0
        %2312 = vmatpush1.bf16.msra.mxu0 %v2292
        %2313 = vmatprep.subr.bf16.mxu0 0
        %2314 = vmatpush1.bf16.msra.mxu0 %v2293
        %2315 = vmatprep.subr.bf16.mxu0 0
        %2316 = vmatpush1.bf16.msra.mxu0 %v2294
        %2317 = vmatprep.subr.bf16.mxu0 0
        %2318 = vmatpush1.bf16.msra.mxu0 %v2295
        %2319 = vmatprep.subr.bf16.mxu0 0
        %2320 = vmatpush1.bf16.msra.mxu0 %v2296
        %2321 = vmatprep.subr.bf16.mxu0 0
        %2322 = vmatpush1.bf16.msra.mxu0 %v2297
        %2323 = vmatprep.subr.bf16.mxu0 0
        %2324 = vmatpush1.bf16.msra.mxu0 %v2298
        %2325 = vmatprep.subr.bf16.mxu0 0
        %2326 = vmatpush1.bf16.msra.mxu0 %v2299
        %2327 = vmatprep.subr.bf16.mxu0 0
        %2328 = vmatpush1.bf16.msra.mxu0 %v2300
        %2329 = vmatprep.subr.bf16.mxu0 0
        %2330 = vmatpush1.bf16.msra.mxu0 %v2301
        %2331 = vmatprep.subr.bf16.mxu0 0
        %2332 = vmatpush1.bf16.msra.mxu0 %v2302
        %2333 = vmatprep.subr.bf16.mxu0 0
        %2334 = vmatpush1.bf16.msra.mxu0 %v2303
        %2335 = vmatprep.subr.bf16.mxu0 0
        %2336 = vmatpush1.bf16.msra.mxu0 %v2304
        %2337 = vmatprep.mubr.bf16.mxu0 %v2258
        %2338 = vmatmul.mubr.bf16.gmra.mrb[0].mxu0 %v2257
        %v2339 = vpop.f32.mrb[0].mxu0
        %v2340 = vadd.f32 0.0, %v2339
        %v2341 = vpop.f32.mrb[0].mxu0
        %v2342 = vpop.f32.mrb[0].mxu0
        %v2343 = vadd.f32 0.0, %v2342
        %v2344 = vpop.f32.mrb[0].mxu0
        %2345 = vmatprep.mubr.bf16.mxu0 %v2260
        %2346 = vmatmul.mubr.bf16.gmra.mrb[0].mxu0 %v2259
        %v2347 = vpop.f32.mrb[0].mxu0
        %v2348 = vadd.f32 0.0, %v2347
        %v2349 = vpop.f32.mrb[0].mxu0
        %v2350 = vpop.f32.mrb[0].mxu0
        %v2351 = vadd.f32 0.0, %v2350
        %v2352 = vpop.f32.mrb[0].mxu0
        %2353 = vmatprep.mubr.bf16.mxu0 %v2262
        %2354 = vmatmul.mubr.bf16.gmra.mrb[0].mxu0 %v2261
        %v2355 = vpop.f32.mrb[0].mxu0
        %v2356 = vadd.f32 0.0, %v2355
        %v2357 = vpop.f32.mrb[0].mxu0
        %v2358 = vpop.f32.mrb[0].mxu0
        %v2359 = vadd.f32 0.0, %v2358
        %v2360 = vpop.f32.mrb[0].mxu0
        %2361 = vmatprep.mubr.bf16.mxu0 %v2264
        %2362 = vmatmul.mubr.bf16.gmra.mrb[0].mxu0 %v2263
        %v2363 = vpop.f32.mrb[0].mxu0
        %v2364 = vadd.f32 0.0, %v2363
        %v2365 = vpop.f32.mrb[0].mxu0
        %v2366 = vpop.f32.mrb[0].mxu0
        %v2367 = vadd.f32 0.0, %v2366
        %v2368 = vpop.f32.mrb[0].mxu0
        %2369 = vmatprep.mubr.bf16.mxu0 %v2266
        %2370 = vmatmul.mubr.bf16.gmra.mrb[0].mxu0 %v2265
        %v2371 = vpop.f32.mrb[0].mxu0
        %v2372 = vadd.f32 0.0, %v2371
        %v2373 = vpop.f32.mrb[0].mxu0
        %v2374 = vpop.f32.mrb[0].mxu0
        %v2375 = vadd.f32 0.0, %v2374
        %v2376 = vpop.f32.mrb[0].mxu0
        %2377 = vmatprep.mubr.bf16.mxu0 %v2268
        %2378 = vmatmul.mubr.bf16.gmra.mrb[0].mxu0 %v2267
        %v2379 = vpop.f32.mrb[0].mxu0
        %v2380 = vadd.f32 0.0, %v2379
        %v2381 = vpop.f32.mrb[0].mxu0
        %v2382 = vpop.f32.mrb[0].mxu0
        %v2383 = vadd.f32 0.0, %v2382
        %v2384 = vpop.f32.mrb[0].mxu0
        %2385 = vmatprep.mubr.bf16.mxu0 %v2270
        %2386 = vmatmul.mubr.bf16.gmra.mrb[0].mxu0 %v2269
        %v2387 = vpop.f32.mrb[0].mxu0
        %v2388 = vadd.f32 0.0, %v2387
        %v2389 = vpop.f32.mrb[0].mxu0
        %v2390 = vpop.f32.mrb[0].mxu0
        %v2391 = vadd.f32 0.0, %v2390
        %v2392 = vpop.f32.mrb[0].mxu0
        %2393 = vmatprep.mubr.bf16.mxu0 %v2272
        %2394 = vmatmul.mubr.bf16.gmra.mrb[0].mxu0 %v2271
        %v2395 = vpop.f32.mrb[0].mxu0
        %v2396 = vadd.f32 0.0, %v2395
        %v2397 = vpop.f32.mrb[0].mxu0
        %v2398 = vpop.f32.mrb[0].mxu0
        %v2399 = vadd.f32 0.0, %v2398
        %v2400 = vpop.f32.mrb[0].mxu0
        %2401 = vmatprep.mubr.bf16.mxu0 %v2274
        %2402 = vmatmul.mubr.bf16.gmra.mrb[0].mxu0 %v2273
        %v2403 = vpop.f32.mrb[0].mxu0
        %v2404 = vadd.f32 0.0, %v2403
        %v2405 = vpop.f32.mrb[0].mxu0
        %v2406 = vpop.f32.mrb[0].mxu0
        %v2407 = vadd.f32 0.0, %v2406
        %v2408 = vpop.f32.mrb[0].mxu0
        %2409 = vmatprep.mubr.bf16.mxu0 %v2276
        %2410 = vmatmul.mubr.bf16.gmra.mrb[0].mxu0 %v2275
        %v2411 = vpop.f32.mrb[0].mxu0
        %v2412 = vadd.f32 0.0, %v2411
        %v2413 = vpop.f32.mrb[0].mxu0
        %v2414 = vpop.f32.mrb[0].mxu0
        %v2415 = vadd.f32 0.0, %v2414
        %v2416 = vpop.f32.mrb[0].mxu0
        %2417 = vmatprep.mubr.bf16.mxu0 %v2278
        %2418 = vmatmul.mubr.bf16.gmra.mrb[0].mxu0 %v2277
        %v2419 = vpop.f32.mrb[0].mxu0
        %v2420 = vadd.f32 0.0, %v2419
        %v2421 = vpop.f32.mrb[0].mxu0
        %v2422 = vpop.f32.mrb[0].mxu0
        %v2423 = vadd.f32 0.0, %v2422
        %v2424 = vpop.f32.mrb[0].mxu0
        %2425 = vmatprep.mubr.bf16.mxu0 %v2280
        %2426 = vmatmul.mubr.bf16.gmra.mrb[0].mxu0 %v2279
        %v2427 = vpop.f32.mrb[0].mxu0
        %v2428 = vadd.f32 0.0, %v2427
        %v2429 = vpop.f32.mrb[0].mxu0
        %v2430 = vpop.f32.mrb[0].mxu0
        %v2431 = vadd.f32 0.0, %v2430
        %v2432 = vpop.f32.mrb[0].mxu0
        %2433 = vmatprep.mubr.bf16.mxu0 %v2282
        %2434 = vmatmul.mubr.bf16.gmra.mrb[0].mxu0 %v2281
        %v2435 = vpop.f32.mrb[0].mxu0
        %v2436 = vadd.f32 0.0, %v2435
        %v2437 = vpop.f32.mrb[0].mxu0
        %v2438 = vpop.f32.mrb[0].mxu0
        %v2439 = vadd.f32 0.0, %v2438
        %v2440 = vpop.f32.mrb[0].mxu0
        %2441 = vmatprep.mubr.bf16.mxu0 %v2284
        %2442 = vmatmul.mubr.bf16.gmra.mrb[0].mxu0 %v2283
        %v2443 = vpop.f32.mrb[0].mxu0
        %v2444 = vadd.f32 0.0, %v2443
        %v2445 = vpop.f32.mrb[0].mxu0
        %v2446 = vpop.f32.mrb[0].mxu0
        %v2447 = vadd.f32 0.0, %v2446
        %v2448 = vpop.f32.mrb[0].mxu0
        %2449 = vmatprep.mubr.bf16.mxu0 %v2286
        %2450 = vmatmul.mubr.bf16.gmra.mrb[0].mxu0 %v2285
        %v2451 = vpop.f32.mrb[0].mxu0
        %v2452 = vadd.f32 0.0, %v2451
        %v2453 = vpop.f32.mrb[0].mxu0
        %v2454 = vpop.f32.mrb[0].mxu0
        %v2455 = vadd.f32 0.0, %v2454
        %v2456 = vpop.f32.mrb[0].mxu0
        %2457 = vmatprep.mubr.bf16.mxu0 %v2288
        %2458 = vmatmul.mubr.bf16.gmra.mrb[0].mxu0 %v2287
        %v2459 = vpop.f32.mrb[0].mxu0
        %v2460 = vadd.f32 0.0, %v2459
        %v2461 = vpop.f32.mrb[0].mxu0
        %v2462 = vpop.f32.mrb[0].mxu0
        %v2463 = vadd.f32 0.0, %v2462
        %v2464 = vpop.f32.mrb[0].mxu0
        %2465 = vdwg.mxu0
        %v2466 = vld [vmem:[%s607] sm:$0x1]
        %s2467 = vtos %v2466
        %s2468 = sadd.f32 %s2467, 1.0
        %v2469 = vstv %s2468
        %v2470 = vmul.f32 %v2469, %v1714
        %v2471 = vmul.f32 %v2469, %v1715
        %v2472 = vmul.f32 %v2469, %v1716
        %v2473 = vmul.f32 %v2469, %v1717
        %v2474 = vmul.f32 %v2469, %v1718
        %v2475 = vmul.f32 %v2469, %v1719
        %v2476 = vmul.f32 %v2469, %v1720
        %v2477 = vmul.f32 %v2469, %v1721
        %v2478 = vmul.f32 %v2469, %v1722
        %v2479 = vmul.f32 %v2469, %v1723
        %v2480 = vmul.f32 %v2469, %v1724
        %v2481 = vmul.f32 %v2469, %v1725
        %v2482 = vmul.f32 %v2469, %v1726
        %v2483 = vmul.f32 %v2469, %v1727
        %v2484 = vmul.f32 %v2469, %v1728
        %v2485 = vmul.f32 %v2469, %v1729
        %v2486 = vmul.f32 %v2469, %v1730
        %v2487 = vmul.f32 %v2469, %v1731
        %v2488 = vmul.f32 %v2469, %v1732
        %v2489 = vmul.f32 %v2469, %v1733
        %v2490 = vmul.f32 %v2469, %v1734
        %v2491 = vmul.f32 %v2469, %v1735
        %v2492 = vmul.f32 %v2469, %v1736
        %v2493 = vmul.f32 %v2469, %v1737
        %v2494 = vmul.f32 %v2469, %v1738
        %v2495 = vmul.f32 %v2469, %v1739
        %v2496 = vmul.f32 %v2469, %v1740
        %v2497 = vmul.f32 %v2469, %v1741
        %v2498 = vmul.f32 %v2469, %v1742
        %v2499 = vmul.f32 %v2469, %v1743
        %v2500 = vmul.f32 %v2469, %v1744
        %v2501 = vmul.f32 %v2469, %v1745
        %v2502 = vadd.f32 %v2470, %v2340
        %v2503 = vadd.f32 %v2471, %v2343
        %v2504 = vadd.f32 %v2472, %v2348
        %v2505 = vadd.f32 %v2473, %v2351
        %v2506 = vadd.f32 %v2474, %v2356
        %v2507 = vadd.f32 %v2475, %v2359
        %v2508 = vadd.f32 %v2476, %v2364
        %v2509 = vadd.f32 %v2477, %v2367
        %v2510 = vadd.f32 %v2478, %v2372
        %v2511 = vadd.f32 %v2479, %v2375
        %v2512 = vadd.f32 %v2480, %v2380
        %v2513 = vadd.f32 %v2481, %v2383
        %v2514 = vadd.f32 %v2482, %v2388
        %v2515 = vadd.f32 %v2483, %v2391
        %v2516 = vadd.f32 %v2484, %v2396
        %v2517 = vadd.f32 %v2485, %v2399
        %v2518 = vadd.f32 %v2486, %v2404
        %v2519 = vadd.f32 %v2487, %v2407
        %v2520 = vadd.f32 %v2488, %v2412
        %v2521 = vadd.f32 %v2489, %v2415
        %v2522 = vadd.f32 %v2490, %v2420
        %v2523 = vadd.f32 %v2491, %v2423
        %v2524 = vadd.f32 %v2492, %v2428
        %v2525 = vadd.f32 %v2493, %v2431
        %v2526 = vadd.f32 %v2494, %v2436
        %v2527 = vadd.f32 %v2495, %v2439
        %v2528 = vadd.f32 %v2496, %v2444
        %v2529 = vadd.f32 %v2497, %v2447
        %v2530 = vadd.f32 %v2498, %v2452
        %v2531 = vadd.f32 %v2499, %v2455
        %v2532 = vadd.f32 %v2500, %v2460
        %v2533 = vadd.f32 %v2501, %v2463
        %v2534 = vpack.c.bf16 %v2503, %v2502
        %v2535 = vpack.c.bf16 %v2505, %v2504
        %v2536 = vpack.c.bf16 %v2507, %v2506
        %v2537 = vpack.c.bf16 %v2509, %v2508
        %v2538 = vpack.c.bf16 %v2511, %v2510
        %v2539 = vpack.c.bf16 %v2513, %v2512
        %v2540 = vpack.c.bf16 %v2515, %v2514
        %v2541 = vpack.c.bf16 %v2517, %v2516
        %v2542 = vpack.c.bf16 %v2519, %v2518
        %v2543 = vpack.c.bf16 %v2521, %v2520
        %v2544 = vpack.c.bf16 %v2523, %v2522
        %v2545 = vpack.c.bf16 %v2525, %v2524
        %v2546 = vpack.c.bf16 %v2527, %v2526
        %v2547 = vpack.c.bf16 %v2529, %v2528
        %v2548 = vpack.c.bf16 %v2531, %v2530
        %v2549 = vpack.c.bf16 %v2533, %v2532
        %v2550 = vld [vmem:[%s632] sm:$0xff]
        %v2551 = vld [vmem:[%s632 + $0x8] sm:$0xff]
        %v2552 = vld [vmem:[%s632 + $0x10] sm:$0xff]
        %v2553 = vld [vmem:[%s632 + $0x18] sm:$0xff]
        %v2554 = vld [vmem:[%s632 + $0x20] sm:$0xff]
        %v2555 = vld [vmem:[%s632 + $0x28] sm:$0xff]
        %v2556 = vld [vmem:[%s632 + $0x30] sm:$0xff]
        %v2557 = vld [vmem:[%s632 + $0x38] sm:$0xff]
        %v2558 = vld [vmem:[%s632 + $0x40] sm:$0xff]
        %v2559 = vld [vmem:[%s632 + $0x48] sm:$0xff]
        %v2560 = vld [vmem:[%s632 + $0x50] sm:$0xff]
        %v2561 = vld [vmem:[%s632 + $0x58] sm:$0xff]
        %v2562 = vld [vmem:[%s632 + $0x60] sm:$0xff]
        %v2563 = vld [vmem:[%s632 + $0x68] sm:$0xff]
        %v2564 = vld [vmem:[%s632 + $0x70] sm:$0xff]
        %v2565 = vld [vmem:[%s632 + $0x78] sm:$0xff]
        %v2566 = vld [vmem:[%s641] sm:$0x3]
        %v2568 = vlaneseq
        %v2569 = vshrl.u32 %v2568, 7
        %v2570 = vsub.s32 0, %v2569
        %v2571 = vrot.slane %v2566, %v2570
        %v2572 = vlaneseq
        %v2573 = vshrl.u32 %v2572, 7
        %v2574 = vsub.s32 1, %v2573
        %v2575 = vrot.slane %v2566, %v2574
        %v2594 = vunpack.c.l.b16 %v2550
        %v2595 = vunpack.c.h.b16 %v2550
        %v2596 = vunpack.c.l.b16 %v2551
        %v2597 = vunpack.c.h.b16 %v2551
        %v2598 = vunpack.c.l.b16 %v2552
        %v2599 = vunpack.c.h.b16 %v2552
        %v2600 = vunpack.c.l.b16 %v2553
        %v2601 = vunpack.c.h.b16 %v2553
        %v2602 = vunpack.c.l.b16 %v2554
        %v2603 = vunpack.c.h.b16 %v2554
        %v2604 = vunpack.c.l.b16 %v2555
        %v2605 = vunpack.c.h.b16 %v2555
        %v2606 = vunpack.c.l.b16 %v2556
        %v2607 = vunpack.c.h.b16 %v2556
        %v2608 = vunpack.c.l.b16 %v2557
        %v2609 = vunpack.c.h.b16 %v2557
        %v2610 = vunpack.c.l.b16 %v2558
        %v2611 = vunpack.c.h.b16 %v2558
        %v2612 = vunpack.c.l.b16 %v2559
        %v2613 = vunpack.c.h.b16 %v2559
        %v2614 = vunpack.c.l.b16 %v2560
        %v2615 = vunpack.c.h.b16 %v2560
        %v2616 = vunpack.c.l.b16 %v2561
        %v2617 = vunpack.c.h.b16 %v2561
        %v2618 = vunpack.c.l.b16 %v2562
        %v2619 = vunpack.c.h.b16 %v2562
        %v2620 = vunpack.c.l.b16 %v2563
        %v2621 = vunpack.c.h.b16 %v2563
        %v2622 = vunpack.c.l.b16 %v2564
        %v2623 = vunpack.c.h.b16 %v2564
        %v2624 = vunpack.c.l.b16 %v2565
        %v2625 = vunpack.c.h.b16 %v2565
        %v2626 = vpack.c.b16 %v2596, %v2594
        %v2627 = vpack.c.b16 %v2597, %v2595
        %v2628 = vpack.c.b16 %v2600, %v2598
        %v2629 = vpack.c.b16 %v2601, %v2599
        %v2630 = vpack.c.b16 %v2604, %v2602
        %v2631 = vpack.c.b16 %v2605, %v2603
        %v2632 = vpack.c.b16 %v2608, %v2606
        %v2633 = vpack.c.b16 %v2609, %v2607
        %v2634 = vpack.c.b16 %v2612, %v2610
        %v2635 = vpack.c.b16 %v2613, %v2611
        %v2636 = vpack.c.b16 %v2616, %v2614
        %v2637 = vpack.c.b16 %v2617, %v2615
        %v2638 = vpack.c.b16 %v2620, %v2618
        %v2639 = vpack.c.b16 %v2621, %v2619
        %v2640 = vpack.c.b16 %v2624, %v2622
        %v2641 = vpack.c.b16 %v2625, %v2623
        %2658 = vmatprep.subr.bf16.mxu0 %v2627
        %2659 = vmatpush1.bf16.msra.mxu0 %v2626
        %2660 = vmatprep.subr.bf16.mxu0 %v2629
        %2661 = vmatpush1.bf16.msra.mxu0 %v2628
        %2662 = vmatprep.subr.bf16.mxu0 %v2631
        %2663 = vmatpush1.bf16.msra.mxu0 %v2630
        %2664 = vmatprep.subr.bf16.mxu0 %v2633
        %2665 = vmatpush1.bf16.msra.mxu0 %v2632
        %2666 = vmatprep.subr.bf16.mxu0 %v2635
        %2667 = vmatpush1.bf16.msra.mxu0 %v2634
        %2668 = vmatprep.subr.bf16.mxu0 %v2637
        %2669 = vmatpush1.bf16.msra.mxu0 %v2636
        %2670 = vmatprep.subr.bf16.mxu0 %v2639
        %2671 = vmatpush1.bf16.msra.mxu0 %v2638
        %2672 = vmatprep.subr.bf16.mxu0 %v2641
        %2673 = vmatpush1.bf16.msra.mxu0 %v2640
        %2674 = vmatprep.subr.bf16.mxu0 0
        %2675 = vmatpush1.bf16.msra.mxu0 0
        %2676 = vmatprep.subr.bf16.mxu0 0
        %2677 = vmatpush1.bf16.msra.mxu0 0
        %2678 = vmatprep.subr.bf16.mxu0 0
        %2679 = vmatpush1.bf16.msra.mxu0 0
        %2680 = vmatprep.subr.bf16.mxu0 0
        %2681 = vmatpush1.bf16.msra.mxu0 0
        %2682 = vmatprep.subr.bf16.mxu0 0
        %2683 = vmatpush1.bf16.msra.mxu0 0
        %2684 = vmatprep.subr.bf16.mxu0 0
        %2685 = vmatpush1.bf16.msra.mxu0 0
        %2686 = vmatprep.subr.bf16.mxu0 0
        %2687 = vmatpush1.bf16.msra.mxu0 0
        %2688 = vmatprep.subr.bf16.mxu0 0
        %2689 = vmatpush1.bf16.msra.mxu0 0
        %2690 = vmatprep.mubr.bf16.mxu0 0
        %2691 = vmatmul.mubr.bf16.gmra.mrb[0].mxu0 %v2534
        %v2692 = vpop.f32.mrb[0].mxu0
        %v2693 = vadd.f32 %v2571, %v2692
        %v2694 = vpop.f32.mrb[0].mxu0
        %v2695 = vadd.f32 %v2575, %v2694
        %v2696 = vpop.f32.mrb[0].mxu0
        %v2697 = vadd.f32 %v2571, %v2696
        %v2698 = vpop.f32.mrb[0].mxu0
        %v2699 = vadd.f32 %v2575, %v2698
        %2700 = vmatprep.mubr.bf16.mxu0 0
        %2701 = vmatmul.mubr.bf16.gmra.mrb[0].mxu0 %v2535
        %v2702 = vpop.f32.mrb[0].mxu0
        %v2703 = vadd.f32 %v2571, %v2702
        %v2704 = vpop.f32.mrb[0].mxu0
        %v2705 = vadd.f32 %v2575, %v2704
        %v2706 = vpop.f32.mrb[0].mxu0
        %v2707 = vadd.f32 %v2571, %v2706
        %v2708 = vpop.f32.mrb[0].mxu0
        %v2709 = vadd.f32 %v2575, %v2708
        %2710 = vmatprep.mubr.bf16.mxu0 0
        %2711 = vmatmul.mubr.bf16.gmra.mrb[0].mxu0 %v2536
        %v2712 = vpop.f32.mrb[0].mxu0
        %v2713 = vadd.f32 %v2571, %v2712
        %v2714 = vpop.f32.mrb[0].mxu0
        %v2715 = vadd.f32 %v2575, %v2714
        %v2716 = vpop.f32.mrb[0].mxu0
        %v2717 = vadd.f32 %v2571, %v2716
        %v2718 = vpop.f32.mrb[0].mxu0
        %v2719 = vadd.f32 %v2575, %v2718
        %2720 = vmatprep.mubr.bf16.mxu0 0
        %2721 = vmatmul.mubr.bf16.gmra.mrb[0].mxu0 %v2537
        %v2722 = vpop.f32.mrb[0].mxu0
        %v2723 = vadd.f32 %v2571, %v2722
        %v2724 = vpop.f32.mrb[0].mxu0
        %v2725 = vadd.f32 %v2575, %v2724
        %v2726 = vpop.f32.mrb[0].mxu0
        %v2727 = vadd.f32 %v2571, %v2726
        %v2728 = vpop.f32.mrb[0].mxu0
        %v2729 = vadd.f32 %v2575, %v2728
        %2730 = vmatprep.mubr.bf16.mxu0 0
        %2731 = vmatmul.mubr.bf16.gmra.mrb[0].mxu0 %v2538
        %v2732 = vpop.f32.mrb[0].mxu0
        %v2733 = vadd.f32 %v2571, %v2732
        %v2734 = vpop.f32.mrb[0].mxu0
        %v2735 = vadd.f32 %v2575, %v2734
        %v2736 = vpop.f32.mrb[0].mxu0
        %v2737 = vadd.f32 %v2571, %v2736
        %v2738 = vpop.f32.mrb[0].mxu0
        %v2739 = vadd.f32 %v2575, %v2738
        %2740 = vmatprep.mubr.bf16.mxu0 0
        %2741 = vmatmul.mubr.bf16.gmra.mrb[0].mxu0 %v2539
        %v2742 = vpop.f32.mrb[0].mxu0
        %v2743 = vadd.f32 %v2571, %v2742
        %v2744 = vpop.f32.mrb[0].mxu0
        %v2745 = vadd.f32 %v2575, %v2744
        %v2746 = vpop.f32.mrb[0].mxu0
        %v2747 = vadd.f32 %v2571, %v2746
        %v2748 = vpop.f32.mrb[0].mxu0
        %v2749 = vadd.f32 %v2575, %v2748
        %2750 = vmatprep.mubr.bf16.mxu0 0
        %2751 = vmatmul.mubr.bf16.gmra.mrb[0].mxu0 %v2540
        %v2752 = vpop.f32.mrb[0].mxu0
        %v2753 = vadd.f32 %v2571, %v2752
        %v2754 = vpop.f32.mrb[0].mxu0
        %v2755 = vadd.f32 %v2575, %v2754
        %v2756 = vpop.f32.mrb[0].mxu0
        %v2757 = vadd.f32 %v2571, %v2756
        %v2758 = vpop.f32.mrb[0].mxu0
        %v2759 = vadd.f32 %v2575, %v2758
        %2760 = vmatprep.mubr.bf16.mxu0 0
        %2761 = vmatmul.mubr.bf16.gmra.mrb[0].mxu0 %v2541
        %v2762 = vpop.f32.mrb[0].mxu0
        %v2763 = vadd.f32 %v2571, %v2762
        %v2764 = vpop.f32.mrb[0].mxu0
        %v2765 = vadd.f32 %v2575, %v2764
        %v2766 = vpop.f32.mrb[0].mxu0
        %v2767 = vadd.f32 %v2571, %v2766
        %v2768 = vpop.f32.mrb[0].mxu0
        %v2769 = vadd.f32 %v2575, %v2768
        %2770 = vmatprep.mubr.bf16.mxu0 0
        %2771 = vmatmul.mubr.bf16.gmra.mrb[0].mxu0 %v2542
        %v2772 = vpop.f32.mrb[0].mxu0
        %v2773 = vadd.f32 %v2571, %v2772
        %v2774 = vpop.f32.mrb[0].mxu0
        %v2775 = vadd.f32 %v2575, %v2774
        %v2776 = vpop.f32.mrb[0].mxu0
        %v2777 = vadd.f32 %v2571, %v2776
        %v2778 = vpop.f32.mrb[0].mxu0
        %v2779 = vadd.f32 %v2575, %v2778
        %2780 = vmatprep.mubr.bf16.mxu0 0
        %2781 = vmatmul.mubr.bf16.gmra.mrb[0].mxu0 %v2543
        %v2782 = vpop.f32.mrb[0].mxu0
        %v2783 = vadd.f32 %v2571, %v2782
        %v2784 = vpop.f32.mrb[0].mxu0
        %v2785 = vadd.f32 %v2575, %v2784
        %v2786 = vpop.f32.mrb[0].mxu0
        %v2787 = vadd.f32 %v2571, %v2786
        %v2788 = vpop.f32.mrb[0].mxu0
        %v2789 = vadd.f32 %v2575, %v2788
        %2790 = vmatprep.mubr.bf16.mxu0 0
        %2791 = vmatmul.mubr.bf16.gmra.mrb[0].mxu0 %v2544
        %v2792 = vpop.f32.mrb[0].mxu0
        %v2793 = vadd.f32 %v2571, %v2792
        %v2794 = vpop.f32.mrb[0].mxu0
        %v2795 = vadd.f32 %v2575, %v2794
        %v2796 = vpop.f32.mrb[0].mxu0
        %v2797 = vadd.f32 %v2571, %v2796
        %v2798 = vpop.f32.mrb[0].mxu0
        %v2799 = vadd.f32 %v2575, %v2798
        %2800 = vmatprep.mubr.bf16.mxu0 0
        %2801 = vmatmul.mubr.bf16.gmra.mrb[0].mxu0 %v2545
        %v2802 = vpop.f32.mrb[0].mxu0
        %v2803 = vadd.f32 %v2571, %v2802
        %v2804 = vpop.f32.mrb[0].mxu0
        %v2805 = vadd.f32 %v2575, %v2804
        %v2806 = vpop.f32.mrb[0].mxu0
        %v2807 = vadd.f32 %v2571, %v2806
        %v2808 = vpop.f32.mrb[0].mxu0
        %v2809 = vadd.f32 %v2575, %v2808
        %2810 = vmatprep.mubr.bf16.mxu0 0
        %2811 = vmatmul.mubr.bf16.gmra.mrb[0].mxu0 %v2546
        %v2812 = vpop.f32.mrb[0].mxu0
        %v2813 = vadd.f32 %v2571, %v2812
        %v2814 = vpop.f32.mrb[0].mxu0
        %v2815 = vadd.f32 %v2575, %v2814
        %v2816 = vpop.f32.mrb[0].mxu0
        %v2817 = vadd.f32 %v2571, %v2816
        %v2818 = vpop.f32.mrb[0].mxu0
        %v2819 = vadd.f32 %v2575, %v2818
        %2820 = vmatprep.mubr.bf16.mxu0 0
        %2821 = vmatmul.mubr.bf16.gmra.mrb[0].mxu0 %v2547
        %v2822 = vpop.f32.mrb[0].mxu0
        %v2823 = vadd.f32 %v2571, %v2822
        %v2824 = vpop.f32.mrb[0].mxu0
        %v2825 = vadd.f32 %v2575, %v2824
        %v2826 = vpop.f32.mrb[0].mxu0
        %v2827 = vadd.f32 %v2571, %v2826
        %v2828 = vpop.f32.mrb[0].mxu0
        %v2829 = vadd.f32 %v2575, %v2828
        %2830 = vmatprep.mubr.bf16.mxu0 0
        %2831 = vmatmul.mubr.bf16.gmra.mrb[0].mxu0 %v2548
        %v2832 = vpop.f32.mrb[0].mxu0
        %v2833 = vadd.f32 %v2571, %v2832
        %v2834 = vpop.f32.mrb[0].mxu0
        %v2835 = vadd.f32 %v2575, %v2834
        %v2836 = vpop.f32.mrb[0].mxu0
        %v2837 = vadd.f32 %v2571, %v2836
        %v2838 = vpop.f32.mrb[0].mxu0
        %v2839 = vadd.f32 %v2575, %v2838
        %2840 = vmatprep.mubr.bf16.mxu0 0
        %2841 = vmatmul.mubr.bf16.gmra.mrb[0].mxu0 %v2549
        %v2842 = vpop.f32.mrb[0].mxu0
        %v2843 = vadd.f32 %v2571, %v2842
        %v2844 = vpop.f32.mrb[0].mxu0
        %v2845 = vadd.f32 %v2575, %v2844
        %v2846 = vpop.f32.mrb[0].mxu0
        %v2847 = vadd.f32 %v2571, %v2846
        %v2848 = vpop.f32.mrb[0].mxu0
        %v2849 = vadd.f32 %v2575, %v2848
        %2850 = vdwg.mxu0
        %v2851 = vmax.f32 %v2693, 0.0
        %v2852 = vmax.f32 %v2695, 0.0
        %v2853 = vmax.f32 %v2697, 0.0
        %v2854 = vmax.f32 %v2699, 0.0
        %v2855 = vmax.f32 %v2703, 0.0
        %v2856 = vmax.f32 %v2705, 0.0
        %v2857 = vmax.f32 %v2707, 0.0
        %v2858 = vmax.f32 %v2709, 0.0
        %v2859 = vmax.f32 %v2713, 0.0
        %v2860 = vmax.f32 %v2715, 0.0
        %v2861 = vmax.f32 %v2717, 0.0
        %v2862 = vmax.f32 %v2719, 0.0
        %v2863 = vmax.f32 %v2723, 0.0
        %v2864 = vmax.f32 %v2725, 0.0
        %v2865 = vmax.f32 %v2727, 0.0
        %v2866 = vmax.f32 %v2729, 0.0
        %v2867 = vmax.f32 %v2733, 0.0
        %v2868 = vmax.f32 %v2735, 0.0
        %v2869 = vmax.f32 %v2737, 0.0
        %v2870 = vmax.f32 %v2739, 0.0
        %v2871 = vmax.f32 %v2743, 0.0
        %v2872 = vmax.f32 %v2745, 0.0
        %v2873 = vmax.f32 %v2747, 0.0
        %v2874 = vmax.f32 %v2749, 0.0
        %v2875 = vmax.f32 %v2753, 0.0
        %v2876 = vmax.f32 %v2755, 0.0
        %v2877 = vmax.f32 %v2757, 0.0
        %v2878 = vmax.f32 %v2759, 0.0
        %v2879 = vmax.f32 %v2763, 0.0
        %v2880 = vmax.f32 %v2765, 0.0
        %v2881 = vmax.f32 %v2767, 0.0
        %v2882 = vmax.f32 %v2769, 0.0
        %v2883 = vmax.f32 %v2773, 0.0
        %v2884 = vmax.f32 %v2775, 0.0
        %v2885 = vmax.f32 %v2777, 0.0
        %v2886 = vmax.f32 %v2779, 0.0
        %v2887 = vmax.f32 %v2783, 0.0
        %v2888 = vmax.f32 %v2785, 0.0
        %v2889 = vmax.f32 %v2787, 0.0
        %v2890 = vmax.f32 %v2789, 0.0
        %v2891 = vmax.f32 %v2793, 0.0
        %v2892 = vmax.f32 %v2795, 0.0
        %v2893 = vmax.f32 %v2797, 0.0
        %v2894 = vmax.f32 %v2799, 0.0
        %v2895 = vmax.f32 %v2803, 0.0
        %v2896 = vmax.f32 %v2805, 0.0
        %v2897 = vmax.f32 %v2807, 0.0
        %v2898 = vmax.f32 %v2809, 0.0
        %v2899 = vmax.f32 %v2813, 0.0
        %v2900 = vmax.f32 %v2815, 0.0
        %v2901 = vmax.f32 %v2817, 0.0
        %v2902 = vmax.f32 %v2819, 0.0
        %v2903 = vmax.f32 %v2823, 0.0
        %v2904 = vmax.f32 %v2825, 0.0
        %v2905 = vmax.f32 %v2827, 0.0
        %v2906 = vmax.f32 %v2829, 0.0
        %v2907 = vmax.f32 %v2833, 0.0
        %v2908 = vmax.f32 %v2835, 0.0
        %v2909 = vmax.f32 %v2837, 0.0
        %v2910 = vmax.f32 %v2839, 0.0
        %v2911 = vmax.f32 %v2843, 0.0
        %v2912 = vmax.f32 %v2845, 0.0
        %v2913 = vmax.f32 %v2847, 0.0
        %v2914 = vmax.f32 %v2849, 0.0
        %v2915 = vpack.c.bf16 %v2853, %v2851
        %v2916 = vpack.c.bf16 %v2854, %v2852
        %v2917 = vpack.c.bf16 %v2857, %v2855
        %v2918 = vpack.c.bf16 %v2858, %v2856
        %v2919 = vpack.c.bf16 %v2861, %v2859
        %v2920 = vpack.c.bf16 %v2862, %v2860
        %v2921 = vpack.c.bf16 %v2865, %v2863
        %v2922 = vpack.c.bf16 %v2866, %v2864
        %v2923 = vpack.c.bf16 %v2869, %v2867
        %v2924 = vpack.c.bf16 %v2870, %v2868
        %v2925 = vpack.c.bf16 %v2873, %v2871
        %v2926 = vpack.c.bf16 %v2874, %v2872
        %v2927 = vpack.c.bf16 %v2877, %v2875
        %v2928 = vpack.c.bf16 %v2878, %v2876
        %v2929 = vpack.c.bf16 %v2881, %v2879
        %v2930 = vpack.c.bf16 %v2882, %v2880
        %v2931 = vpack.c.bf16 %v2885, %v2883
        %v2932 = vpack.c.bf16 %v2886, %v2884
        %v2933 = vpack.c.bf16 %v2889, %v2887
        %v2934 = vpack.c.bf16 %v2890, %v2888
        %v2935 = vpack.c.bf16 %v2893, %v2891
        %v2936 = vpack.c.bf16 %v2894, %v2892
        %v2937 = vpack.c.bf16 %v2897, %v2895
        %v2938 = vpack.c.bf16 %v2898, %v2896
        %v2939 = vpack.c.bf16 %v2901, %v2899
        %v2940 = vpack.c.bf16 %v2902, %v2900
        %v2941 = vpack.c.bf16 %v2905, %v2903
        %v2942 = vpack.c.bf16 %v2906, %v2904
        %v2943 = vpack.c.bf16 %v2909, %v2907
        %v2944 = vpack.c.bf16 %v2910, %v2908
        %v2945 = vpack.c.bf16 %v2913, %v2911
        %v2946 = vpack.c.bf16 %v2914, %v2912
        %v2947 = vld [vmem:[%s650] sm:$0xf]
        %v2948 = vld [vmem:[%s650 + $0x4] sm:$0xf]
        %v2949 = vld [vmem:[%s650 + $0x8] sm:$0xf]
        %v2950 = vld [vmem:[%s650 + $0xc] sm:$0xf]
        %v2951 = vld [vmem:[%s650 + $0x10] sm:$0xf]
        %v2952 = vld [vmem:[%s650 + $0x14] sm:$0xf]
        %v2953 = vld [vmem:[%s650 + $0x18] sm:$0xf]
        %v2954 = vld [vmem:[%s650 + $0x1c] sm:$0xf]
        %v2955 = vld [vmem:[%s650 + $0x20] sm:$0xf]
        %v2956 = vld [vmem:[%s650 + $0x24] sm:$0xf]
        %v2957 = vld [vmem:[%s650 + $0x28] sm:$0xf]
        %v2958 = vld [vmem:[%s650 + $0x2c] sm:$0xf]
        %v2959 = vld [vmem:[%s650 + $0x30] sm:$0xf]
        %v2960 = vld [vmem:[%s650 + $0x34] sm:$0xf]
        %v2961 = vld [vmem:[%s650 + $0x38] sm:$0xf]
        %v2962 = vld [vmem:[%s650 + $0x3c] sm:$0xf]
        %v2963 = vld [vmem:[%s650 + $0x40] sm:$0xf]
        %v2964 = vld [vmem:[%s650 + $0x44] sm:$0xf]
        %v2965 = vld [vmem:[%s650 + $0x48] sm:$0xf]
        %v2966 = vld [vmem:[%s650 + $0x4c] sm:$0xf]
        %v2967 = vld [vmem:[%s650 + $0x50] sm:$0xf]
        %v2968 = vld [vmem:[%s650 + $0x54] sm:$0xf]
        %v2969 = vld [vmem:[%s650 + $0x58] sm:$0xf]
        %v2970 = vld [vmem:[%s650 + $0x5c] sm:$0xf]
        %v2971 = vld [vmem:[%s650 + $0x60] sm:$0xf]
        %v2972 = vld [vmem:[%s650 + $0x64] sm:$0xf]
        %v2973 = vld [vmem:[%s650 + $0x68] sm:$0xf]
        %v2974 = vld [vmem:[%s650 + $0x6c] sm:$0xf]
        %v2975 = vld [vmem:[%s650 + $0x70] sm:$0xf]
        %v2976 = vld [vmem:[%s650 + $0x74] sm:$0xf]
        %v2977 = vld [vmem:[%s650 + $0x78] sm:$0xf]
        %v2978 = vld [vmem:[%s650 + $0x7c] sm:$0xf]
        %v2979 = vld [vmem:[%s658] sm:$0x1]
        %v2981 = vlaneseq
        %v2982 = vshrl.u32 %v2981, 7
        %v2983 = vsub.s32 0, %v2982
        %v2984 = vrot.slane %v2979, %v2983
        %v3018 = vunpack.c.l.b16 %v2947
        %v3019 = vunpack.c.l.b16 %v2948
        %v3020 = vunpack.c.l.b16 %v2949
        %v3021 = vunpack.c.l.b16 %v2950
        %v3022 = vunpack.c.l.b16 %v2951
        %v3023 = vunpack.c.l.b16 %v2952
        %v3024 = vunpack.c.l.b16 %v2953
        %v3025 = vunpack.c.l.b16 %v2954
        %v3026 = vunpack.c.l.b16 %v2955
        %v3027 = vunpack.c.l.b16 %v2956
        %v3028 = vunpack.c.l.b16 %v2957
        %v3029 = vunpack.c.l.b16 %v2958
        %v3030 = vunpack.c.l.b16 %v2959
        %v3031 = vunpack.c.l.b16 %v2960
        %v3032 = vunpack.c.l.b16 %v2961
        %v3033 = vunpack.c.l.b16 %v2962
        %v3034 = vunpack.c.l.b16 %v2963
        %v3035 = vunpack.c.l.b16 %v2964
        %v3036 = vunpack.c.l.b16 %v2965
        %v3037 = vunpack.c.l.b16 %v2966
        %v3038 = vunpack.c.l.b16 %v2967
        %v3039 = vunpack.c.l.b16 %v2968
        %v3040 = vunpack.c.l.b16 %v2969
        %v3041 = vunpack.c.l.b16 %v2970
        %v3042 = vunpack.c.l.b16 %v2971
        %v3043 = vunpack.c.l.b16 %v2972
        %v3044 = vunpack.c.l.b16 %v2973
        %v3045 = vunpack.c.l.b16 %v2974
        %v3046 = vunpack.c.l.b16 %v2975
        %v3047 = vunpack.c.l.b16 %v2976
        %v3048 = vunpack.c.l.b16 %v2977
        %v3049 = vunpack.c.l.b16 %v2978
        %v3050 = vpack.c.b16 %v3019, %v3018
        %v3051 = vpack.c.b16 %v3021, %v3020
        %v3052 = vpack.c.b16 %v3023, %v3022
        %v3053 = vpack.c.b16 %v3025, %v3024
        %v3054 = vpack.c.b16 %v3027, %v3026
        %v3055 = vpack.c.b16 %v3029, %v3028
        %v3056 = vpack.c.b16 %v3031, %v3030
        %v3057 = vpack.c.b16 %v3033, %v3032
        %v3058 = vpack.c.b16 %v3035, %v3034
        %v3059 = vpack.c.b16 %v3037, %v3036
        %v3060 = vpack.c.b16 %v3039, %v3038
        %v3061 = vpack.c.b16 %v3041, %v3040
        %v3062 = vpack.c.b16 %v3043, %v3042
        %v3063 = vpack.c.b16 %v3045, %v3044
        %v3064 = vpack.c.b16 %v3047, %v3046
        %v3065 = vpack.c.b16 %v3049, %v3048
        %3082 = vmatprep.subr.bf16.mxu0 0
        %3083 = vmatpush1.bf16.msra.mxu0 %v3050
        %3084 = vmatprep.subr.bf16.mxu0 0
        %3085 = vmatpush1.bf16.msra.mxu0 %v3051
        %3086 = vmatprep.subr.bf16.mxu0 0
        %3087 = vmatpush1.bf16.msra.mxu0 %v3052
        %3088 = vmatprep.subr.bf16.mxu0 0
        %3089 = vmatpush1.bf16.msra.mxu0 %v3053
        %3090 = vmatprep.subr.bf16.mxu0 0
        %3091 = vmatpush1.bf16.msra.mxu0 %v3054
        %3092 = vmatprep.subr.bf16.mxu0 0
        %3093 = vmatpush1.bf16.msra.mxu0 %v3055
        %3094 = vmatprep.subr.bf16.mxu0 0
        %3095 = vmatpush1.bf16.msra.mxu0 %v3056
        %3096 = vmatprep.subr.bf16.mxu0 0
        %3097 = vmatpush1.bf16.msra.mxu0 %v3057
        %3098 = vmatprep.subr.bf16.mxu0 0
        %3099 = vmatpush1.bf16.msra.mxu0 %v3058
        %3100 = vmatprep.subr.bf16.mxu0 0
        %3101 = vmatpush1.bf16.msra.mxu0 %v3059
        %3102 = vmatprep.subr.bf16.mxu0 0
        %3103 = vmatpush1.bf16.msra.mxu0 %v3060
        %3104 = vmatprep.subr.bf16.mxu0 0
        %3105 = vmatpush1.bf16.msra.mxu0 %v3061
        %3106 = vmatprep.subr.bf16.mxu0 0
        %3107 = vmatpush1.bf16.msra.mxu0 %v3062
        %3108 = vmatprep.subr.bf16.mxu0 0
        %3109 = vmatpush1.bf16.msra.mxu0 %v3063
        %3110 = vmatprep.subr.bf16.mxu0 0
        %3111 = vmatpush1.bf16.msra.mxu0 %v3064
        %3112 = vmatprep.subr.bf16.mxu0 0
        %3113 = vmatpush1.bf16.msra.mxu0 %v3065
        %3114 = vmatprep.mubr.bf16.mxu0 %v2916
        %3115 = vmatmul.mubr.bf16.gmra.mrb[0].mxu0 %v2915
        %v3116 = vpop.f32.mrb[0].mxu0
        %v3117 = vadd.f32 %v2984, %v3116
        %v3118 = vpop.f32.mrb[0].mxu0
        %v3119 = vpop.f32.mrb[0].mxu0
        %v3120 = vadd.f32 %v2984, %v3119
        %v3121 = vpop.f32.mrb[0].mxu0
        %3122 = vmatprep.mubr.bf16.mxu0 %v2918
        %3123 = vmatmul.mubr.bf16.gmra.mrb[0].mxu0 %v2917
        %v3124 = vpop.f32.mrb[0].mxu0
        %v3125 = vadd.f32 %v2984, %v3124
        %v3126 = vpop.f32.mrb[0].mxu0
        %v3127 = vpop.f32.mrb[0].mxu0
        %v3128 = vadd.f32 %v2984, %v3127
        %v3129 = vpop.f32.mrb[0].mxu0
        %3130 = vmatprep.mubr.bf16.mxu0 %v2920
        %3131 = vmatmul.mubr.bf16.gmra.mrb[0].mxu0 %v2919
        %v3132 = vpop.f32.mrb[0].mxu0
        %v3133 = vadd.f32 %v2984, %v3132
        %v3134 = vpop.f32.mrb[0].mxu0
        %v3135 = vpop.f32.mrb[0].mxu0
        %v3136 = vadd.f32 %v2984, %v3135
        %v3137 = vpop.f32.mrb[0].mxu0
        %3138 = vmatprep.mubr.bf16.mxu0 %v2922
        %3139 = vmatmul.mubr.bf16.gmra.mrb[0].mxu0 %v2921
        %v3140 = vpop.f32.mrb[0].mxu0
        %v3141 = vadd.f32 %v2984, %v3140
        %v3142 = vpop.f32.mrb[0].mxu0
        %v3143 = vpop.f32.mrb[0].mxu0
        %v3144 = vadd.f32 %v2984, %v3143
        %v3145 = vpop.f32.mrb[0].mxu0
        %3146 = vmatprep.mubr.bf16.mxu0 %v2924
        %3147 = vmatmul.mubr.bf16.gmra.mrb[0].mxu0 %v2923
        %v3148 = vpop.f32.mrb[0].mxu0
        %v3149 = vadd.f32 %v2984, %v3148
        %v3150 = vpop.f32.mrb[0].mxu0
        %v3151 = vpop.f32.mrb[0].mxu0
        %v3152 = vadd.f32 %v2984, %v3151
        %v3153 = vpop.f32.mrb[0].mxu0
        %3154 = vmatprep.mubr.bf16.mxu0 %v2926
        %3155 = vmatmul.mubr.bf16.gmra.mrb[0].mxu0 %v2925
        %v3156 = vpop.f32.mrb[0].mxu0
        %v3157 = vadd.f32 %v2984, %v3156
        %v3158 = vpop.f32.mrb[0].mxu0
        %v3159 = vpop.f32.mrb[0].mxu0
        %v3160 = vadd.f32 %v2984, %v3159
        %v3161 = vpop.f32.mrb[0].mxu0
        %3162 = vmatprep.mubr.bf16.mxu0 %v2928
        %3163 = vmatmul.mubr.bf16.gmra.mrb[0].mxu0 %v2927
        %v3164 = vpop.f32.mrb[0].mxu0
        %v3165 = vadd.f32 %v2984, %v3164
        %v3166 = vpop.f32.mrb[0].mxu0
        %v3167 = vpop.f32.mrb[0].mxu0
        %v3168 = vadd.f32 %v2984, %v3167
        %v3169 = vpop.f32.mrb[0].mxu0
        %3170 = vmatprep.mubr.bf16.mxu0 %v2930
        %3171 = vmatmul.mubr.bf16.gmra.mrb[0].mxu0 %v2929
        %v3172 = vpop.f32.mrb[0].mxu0
        %v3173 = vadd.f32 %v2984, %v3172
        %v3174 = vpop.f32.mrb[0].mxu0
        %v3175 = vpop.f32.mrb[0].mxu0
        %v3176 = vadd.f32 %v2984, %v3175
        %v3177 = vpop.f32.mrb[0].mxu0
        %3178 = vmatprep.mubr.bf16.mxu0 %v2932
        %3179 = vmatmul.mubr.bf16.gmra.mrb[0].mxu0 %v2931
        %v3180 = vpop.f32.mrb[0].mxu0
        %v3181 = vadd.f32 %v2984, %v3180
        %v3182 = vpop.f32.mrb[0].mxu0
        %v3183 = vpop.f32.mrb[0].mxu0
        %v3184 = vadd.f32 %v2984, %v3183
        %v3185 = vpop.f32.mrb[0].mxu0
        %3186 = vmatprep.mubr.bf16.mxu0 %v2934
        %3187 = vmatmul.mubr.bf16.gmra.mrb[0].mxu0 %v2933
        %v3188 = vpop.f32.mrb[0].mxu0
        %v3189 = vadd.f32 %v2984, %v3188
        %v3190 = vpop.f32.mrb[0].mxu0
        %v3191 = vpop.f32.mrb[0].mxu0
        %v3192 = vadd.f32 %v2984, %v3191
        %v3193 = vpop.f32.mrb[0].mxu0
        %3194 = vmatprep.mubr.bf16.mxu0 %v2936
        %3195 = vmatmul.mubr.bf16.gmra.mrb[0].mxu0 %v2935
        %v3196 = vpop.f32.mrb[0].mxu0
        %v3197 = vadd.f32 %v2984, %v3196
        %v3198 = vpop.f32.mrb[0].mxu0
        %v3199 = vpop.f32.mrb[0].mxu0
        %v3200 = vadd.f32 %v2984, %v3199
        %v3201 = vpop.f32.mrb[0].mxu0
        %3202 = vmatprep.mubr.bf16.mxu0 %v2938
        %3203 = vmatmul.mubr.bf16.gmra.mrb[0].mxu0 %v2937
        %v3204 = vpop.f32.mrb[0].mxu0
        %v3205 = vadd.f32 %v2984, %v3204
        %v3206 = vpop.f32.mrb[0].mxu0
        %v3207 = vpop.f32.mrb[0].mxu0
        %v3208 = vadd.f32 %v2984, %v3207
        %v3209 = vpop.f32.mrb[0].mxu0
        %3210 = vmatprep.mubr.bf16.mxu0 %v2940
        %3211 = vmatmul.mubr.bf16.gmra.mrb[0].mxu0 %v2939
        %v3212 = vpop.f32.mrb[0].mxu0
        %v3213 = vadd.f32 %v2984, %v3212
        %v3214 = vpop.f32.mrb[0].mxu0
        %v3215 = vpop.f32.mrb[0].mxu0
        %v3216 = vadd.f32 %v2984, %v3215
        %v3217 = vpop.f32.mrb[0].mxu0
        %3218 = vmatprep.mubr.bf16.mxu0 %v2942
        %3219 = vmatmul.mubr.bf16.gmra.mrb[0].mxu0 %v2941
        %v3220 = vpop.f32.mrb[0].mxu0
        %v3221 = vadd.f32 %v2984, %v3220
        %v3222 = vpop.f32.mrb[0].mxu0
        %v3223 = vpop.f32.mrb[0].mxu0
        %v3224 = vadd.f32 %v2984, %v3223
        %v3225 = vpop.f32.mrb[0].mxu0
        %3226 = vmatprep.mubr.bf16.mxu0 %v2944
        %3227 = vmatmul.mubr.bf16.gmra.mrb[0].mxu0 %v2943
        %v3228 = vpop.f32.mrb[0].mxu0
        %v3229 = vadd.f32 %v2984, %v3228
        %v3230 = vpop.f32.mrb[0].mxu0
        %v3231 = vpop.f32.mrb[0].mxu0
        %v3232 = vadd.f32 %v2984, %v3231
        %v3233 = vpop.f32.mrb[0].mxu0
        %3234 = vmatprep.mubr.bf16.mxu0 %v2946
        %3235 = vmatmul.mubr.bf16.gmra.mrb[0].mxu0 %v2945
        %v3236 = vpop.f32.mrb[0].mxu0
        %v3237 = vadd.f32 %v2984, %v3236
        %v3238 = vpop.f32.mrb[0].mxu0
        %v3239 = vpop.f32.mrb[0].mxu0
        %v3240 = vadd.f32 %v2984, %v3239
        %v3241 = vpop.f32.mrb[0].mxu0
        %3242 = vdwg.mxu0
        %p3243 = scmp.eq.s32.totalorder %s29, 2
        %v3244 = vmax.f32 %v3117, 0.0
        %v3245 = vmax.f32 %v3120, 0.0
        %v3246 = vmax.f32 %v3125, 0.0
        %v3247 = vmax.f32 %v3128, 0.0
        %v3248 = vmax.f32 %v3133, 0.0
        %v3249 = vmax.f32 %v3136, 0.0
        %v3250 = vmax.f32 %v3141, 0.0
        %v3251 = vmax.f32 %v3144, 0.0
        %v3252 = vmax.f32 %v3149, 0.0
        %v3253 = vmax.f32 %v3152, 0.0
        %v3254 = vmax.f32 %v3157, 0.0
        %v3255 = vmax.f32 %v3160, 0.0
        %v3256 = vmax.f32 %v3165, 0.0
        %v3257 = vmax.f32 %v3168, 0.0
        %v3258 = vmax.f32 %v3173, 0.0
        %v3259 = vmax.f32 %v3176, 0.0
        %v3260 = vmax.f32 %v3181, 0.0
        %v3261 = vmax.f32 %v3184, 0.0
        %v3262 = vmax.f32 %v3189, 0.0
        %v3263 = vmax.f32 %v3192, 0.0
        %v3264 = vmax.f32 %v3197, 0.0
        %v3265 = vmax.f32 %v3200, 0.0
        %v3266 = vmax.f32 %v3205, 0.0
        %v3267 = vmax.f32 %v3208, 0.0
        %v3268 = vmax.f32 %v3213, 0.0
        %v3269 = vmax.f32 %v3216, 0.0
        %v3270 = vmax.f32 %v3221, 0.0
        %v3271 = vmax.f32 %v3224, 0.0
        %v3272 = vmax.f32 %v3229, 0.0
        %v3273 = vmax.f32 %v3232, 0.0
        %v3274 = vmax.f32 %v3237, 0.0
        %v3275 = vmax.f32 %v3240, 0.0
        %s3276 = scalar_select %p3243, 1, 0
        %v3277 = vstv %s3276
        %vm3278 = vcmp.eq.s32.totalorder %v3277, 1
        %v3279 = vsel %vm3278, %v3117, %v3244
        %v3280 = vsel %vm3278, %v3120, %v3245
        %v3281 = vsel %vm3278, %v3125, %v3246
        %v3282 = vsel %vm3278, %v3128, %v3247
        %v3283 = vsel %vm3278, %v3133, %v3248
        %v3284 = vsel %vm3278, %v3136, %v3249
        %v3285 = vsel %vm3278, %v3141, %v3250
        %v3286 = vsel %vm3278, %v3144, %v3251
        %v3287 = vsel %vm3278, %v3149, %v3252
        %v3288 = vsel %vm3278, %v3152, %v3253
        %v3289 = vsel %vm3278, %v3157, %v3254
        %v3290 = vsel %vm3278, %v3160, %v3255
        %v3291 = vsel %vm3278, %v3165, %v3256
        %v3292 = vsel %vm3278, %v3168, %v3257
        %v3293 = vsel %vm3278, %v3173, %v3258
        %v3294 = vsel %vm3278, %v3176, %v3259
        %v3295 = vsel %vm3278, %v3181, %v3260
        %v3296 = vsel %vm3278, %v3184, %v3261
        %v3297 = vsel %vm3278, %v3189, %v3262
        %v3298 = vsel %vm3278, %v3192, %v3263
        %v3299 = vsel %vm3278, %v3197, %v3264
        %v3300 = vsel %vm3278, %v3200, %v3265
        %v3301 = vsel %vm3278, %v3205, %v3266
        %v3302 = vsel %vm3278, %v3208, %v3267
        %v3303 = vsel %vm3278, %v3213, %v3268
        %v3304 = vsel %vm3278, %v3216, %v3269
        %v3305 = vsel %vm3278, %v3221, %v3270
        %v3306 = vsel %vm3278, %v3224, %v3271
        %v3307 = vsel %vm3278, %v3229, %v3272
        %v3308 = vsel %vm3278, %v3232, %v3273
        %v3309 = vsel %vm3278, %v3237, %v3274
        %v3310 = vsel %vm3278, %v3240, %v3275
        %3311 = vst [vmem:[#allocation22] sm:$0xff] %v3279
        %3312 = vst [vmem:[#allocation22 + $0x8] sm:$0xff] %v3280
        %3313 = vst [vmem:[#allocation22 + $0x10] sm:$0xff] %v3281
        %3314 = vst [vmem:[#allocation22 + $0x18] sm:$0xff] %v3282
        %3315 = vst [vmem:[#allocation22 + $0x20] sm:$0xff] %v3283
        %3316 = vst [vmem:[#allocation22 + $0x28] sm:$0xff] %v3284
        %3317 = vst [vmem:[#allocation22 + $0x30] sm:$0xff] %v3285
        %3318 = vst [vmem:[#allocation22 + $0x38] sm:$0xff] %v3286
        %3319 = vst [vmem:[#allocation22 + $0x40] sm:$0xff] %v3287
        %3320 = vst [vmem:[#allocation22 + $0x48] sm:$0xff] %v3288
        %3321 = vst [vmem:[#allocation22 + $0x50] sm:$0xff] %v3289
        %3322 = vst [vmem:[#allocation22 + $0x58] sm:$0xff] %v3290
        %3323 = vst [vmem:[#allocation22 + $0x60] sm:$0xff] %v3291
        %3324 = vst [vmem:[#allocation22 + $0x68] sm:$0xff] %v3292
        %3325 = vst [vmem:[#allocation22 + $0x70] sm:$0xff] %v3293
        %3326 = vst [vmem:[#allocation22 + $0x78] sm:$0xff] %v3294
        %3327 = vst [vmem:[#allocation22 + $0x80] sm:$0xff] %v3295
        %3328 = vst [vmem:[#allocation22 + $0x88] sm:$0xff] %v3296
        %3329 = vst [vmem:[#allocation22 + $0x90] sm:$0xff] %v3297
        %3330 = vst [vmem:[#allocation22 + $0x98] sm:$0xff] %v3298
        %3331 = vst [vmem:[#allocation22 + $0xa0] sm:$0xff] %v3299
        %3332 = vst [vmem:[#allocation22 + $0xa8] sm:$0xff] %v3300
        %3333 = vst [vmem:[#allocation22 + $0xb0] sm:$0xff] %v3301
        %3334 = vst [vmem:[#allocation22 + $0xb8] sm:$0xff] %v3302
        %3335 = vst [vmem:[#allocation22 + $0xc0] sm:$0xff] %v3303
        %3336 = vst [vmem:[#allocation22 + $0xc8] sm:$0xff] %v3304
        %3337 = vst [vmem:[#allocation22 + $0xd0] sm:$0xff] %v3305
        %3338 = vst [vmem:[#allocation22 + $0xd8] sm:$0xff] %v3306
        %3339 = vst [vmem:[#allocation22 + $0xe0] sm:$0xff] %v3307
        %3340 = vst [vmem:[#allocation22 + $0xe8] sm:$0xff] %v3308
        %3341 = vst [vmem:[#allocation22 + $0xf0] sm:$0xff] %v3309
        %3342 = vst [vmem:[#allocation22 + $0xf8] sm:$0xff] %v3310
        // Predicated region
        $region129: #{tpu_custom_call.1} parent=71 // pred_check
          %p3343 = pneg %p350
        $region130: #{tpu_custom_call.1} parent=71 // pred_check_branch
          %3345 = sbr.rel (%p3343) target = $region132
        $region131: #{tpu_custom_call.1} parent=71 // pred_region
          %s3347 = ssub.s32 4096, 4096
          %3348 = vsyncadd [#allocation6], %s3347
          %s3349 = sshll.u32 [#allocation22], 4
          %s3350 = int_to_ptr.vmem [resolvable:$true] %s3349
          %3355 = dma.vmem_to_hbm [thread:$0]  %s3350, 4096, %s13, [#allocation6], 128, 128, 8
        $region132: #{tpu_custom_call.1} parent=71 // pred_fallthru
          _
        // Predicated region
        $region133: #{tpu_custom_call.1} parent=71 // pred_check
          %p3356 = pneg %p350
        $region134: #{tpu_custom_call.1} parent=71 // pred_check_branch
          %3358 = sbr.rel (%p3356) target = $region136
        $region135: #{tpu_custom_call.1} parent=71 // pred_region
          %3359 = dma.done [#allocation6], 4096
        $region136: #{tpu_custom_call.1} parent=71 // pred_fallthru
          _
      $region72: #{tpu_custom_call.1} parent=5 // pred_fallthru
        _
      %p3360 = scmp.le.s32.totalorder 2, %s24
      // Predicated region
      $region137: #{tpu_custom_call.1} parent=5 // pred_check
        %p3361 = pneg %p3360
      $region138: #{tpu_custom_call.1} parent=5 // pred_check_branch
        %3363 = sbr.rel (%p3361) target = $region140
      $region139: #{tpu_custom_call.1} parent=5 // pred_region
        %s3364 = ssub.s32 %s24, 2
      $region140: #{tpu_custom_call.1} parent=5 // pred_fallthru
        _
    $region6: #{tpu_custom_call.1} parent=1 // loop_footer
      %s28 = sadd.s32 1, %s24
    $region7: #{tpu_custom_call.1} parent=1 // loop_footer_branch
      %23 = sbr.rel target = $region3
    $region8: #{tpu_custom_call.1} parent=1 // loop_exit
      _
    %3365 = vsyncpa [#allocation5], 1
    %s3366 = scalar_lea.sflag [#allocation5], 1
    %3367 = vsyncpa %s3366, 1
    %3368 = vsyncpa [#allocation8], 1
    %3369 = vsyncpa [#allocation11], 1
    %3370 = vsyncpa [#allocation14], 1
    %3371 = vsyncpa [#allocation6], 1
    %s3372 = scalar_lea.sflag [#allocation6], 1
    %3373 = vsyncpa %s3372, 1

</llo_original>
